<compile_context>
chip_gen: v6e
topology: v6e:2x2x1
jax: 0.10.0
libtpu: 0.0.40
codegen_flags: <defaults>
</compile_context>

<pallas_src>
import jax
import jax.numpy as jnp
import numpy as np
from jax.experimental import pallas as pl
from jax.experimental.pallas import tpu as pltpu


def _make_kernel(H, W, C, G, MWP, LEFT, NPAD):
    GS = C // G                      # channels per group
    HW = H * W
    PW = W + 2                       # padded row width
    MW = (H - 1) * PW + W            # valid "wide" flattened spatial extent
    # tap (ky, kx) of a 3x3 conv reads the activation shifted by (ky-1)*PW+(kx-1)
    TAP_OFFS = [LEFT + (ky - 1) * PW + (kx - 1) for ky in range(3) for kx in range(3)]
    inv_cnt = 1.0 / float(HW * GS)   # 1 / (#valid elements per group)

    def kernel(x_ref, ss_ref, pp_ref, ws_ref, out_ref, pad_ref, col_ref):
        # Valid-column mask built in-kernel (one operand fewer); hoisted once.
        col_idx = jax.lax.broadcasted_iota(jnp.int32, (1, MWP), 1)
        mask = jnp.where((col_idx % PW < W) & (col_idx < MW), 1.0, 0.0)  # (1, MWP)

        x = x_ref[0]                 # (C, MWP) f32; gutters / padded tail are 0
        ss = ss_ref[0]               # (C, 2) per-sample scale/shift
        scale = ss[:, 0:1]
        shift = ss[:, 1:2]

        # Halo strips of pad_ref: read by the taps but never written by the
        # per-conv store -> zero once per grid step (lane-aligned full strips).
        pad_ref[:, :LEFT] = jnp.zeros((C, LEFT), pad_ref.dtype)
        pad_ref[:, LEFT + MWP:] = jnp.zeros((C, NPAD - LEFT - MWP), pad_ref.dtype)

        def conv3x3(act, widx, bias):
            # Mask gutters, cast to bf16, drop into the zero-padded buffer at a
            # lane-aligned offset, gather the 9 taps as contiguous lane-shifted
            # slabs into the (9C, MWP) im2col buffer, then ONE K=9C matmul.
            pad_ref[:, LEFT:LEFT + MWP] = (act * mask).astype(pad_ref.dtype)
            for t, off in enumerate(TAP_OFFS):
                col_ref[t * C:(t + 1) * C, :] = pad_ref[:, off:off + MWP]
            y = jnp.dot(ws_ref[widx], col_ref[...],
                        preferred_element_type=jnp.float32)      # (C, MWP) f32
            return y + bias                                      # bias (C, 1)

        def group_norm(h, gamma, beta):
            # Fused single-pass masked statistics (eps = 1e-5).
            hm = h * mask
            s = jnp.sum(hm, axis=1, keepdims=True)               # (C, 1)
            s2 = jnp.sum(hm * h, axis=1, keepdims=True)          # (C, 1) = sum(h^2*mask)
            if GS == 1:                  # GroupNorm(32, 32): per-channel stats
                mean = s * inv_cnt
                var = jnp.maximum(s2 * inv_cnt - mean * mean, 0.0)
            else:
                # General C//G > 1 fallback (not traced in this config): fold
                # per-channel stats across the group with a tiny (C,C) matmul.
                ci = jax.lax.broadcasted_iota(jnp.int32, (C, C), 0) // GS
                cj = jax.lax.broadcasted_iota(jnp.int32, (C, C), 1) // GS
                mm = (ci == cj).astype(jnp.float32)
                gsum = jnp.dot(mm, s, preferred_element_type=jnp.float32)
                gsum2 = jnp.dot(mm, s2, preferred_element_type=jnp.float32)
                mean = gsum * inv_cnt
                var = jnp.maximum(gsum2 * inv_cnt - mean * mean, 0.0)
            hn = (h - mean) * jax.lax.rsqrt(var + 1e-5)
            return hn * gamma + beta                             # gamma/beta (C, 1)

        # packed per-channel params: [b1, g1w, g1b, b2, g2w, g2b, g3w, g3b, b3]
        # h = relu(GN1(conv1(x)))
        h = conv3x3(x, 0, pp_ref[:, 0:1])
        h = jnp.maximum(group_norm(h, pp_ref[:, 1:2], pp_ref[:, 2:3]), 0.0)
        # h = GN2(conv2(h))
        h = conv3x3(h, 1, pp_ref[:, 3:4])
        h = group_norm(h, pp_ref[:, 4:5], pp_ref[:, 5:6])
        # out_layers with scale-shift norm: conv_out(SiLU(GN_out(h)))*(1+scale)+shift
        o = group_norm(h, pp_ref[:, 6:7], pp_ref[:, 7:8])
        o = o * jax.nn.sigmoid(o)
        o = conv3x3(o, 2, pp_ref[:, 8:9])
        o = o * (1.0 + scale) + shift
        # residual; mask the gutter/tail lanes so the wide buffer stays clean.
        out_ref[0] = x + o * mask

    return kernel


def resnet_block_attn_forward(x_nchw, emb, params, groups):
    B, C, H, W = x_nchw.shape
    PW = W + 2
    HPW = H * PW
    MWP = ((HPW + 127) // 128) * 128     # lane-padded wide extent (mult of 128)
    LEFT = 128                           # lane-aligned left halo (>= PW + 1)
    NPAD = LEFT + MWP + 128              # padded-buffer extent (>= LEFT+MWP+PW+1)
    assert C % groups == 0 and C % 8 == 0
    assert PW + 1 <= LEFT                # TODO(synk): only padding_mode='zeros' supported
    (w1, b1, g1w, g1b, w2, b2, g2w, g2b, g3w, g3b, w3, b3, we, be) = params

    # ---- wrapper-side prep (cheap XLA ops) ----
    # NCHW -> channel-major wide layout: pad 2 zero gutter columns per row,
    # flatten, pad to the 128-lane multiple (free pad+reshape, no transpose).
    x_wide = jnp.pad(x_nchw, ((0, 0), (0, 0), (0, 0), (0, 2))).reshape(B, C, HPW)
    x_wide = jnp.pad(x_wide, ((0, 0), (0, 0), (0, MWP - HPW)))

    # Conv weights OIHW -> (C_out, 9*C_in) with (ky, kx, c_in) tap order, bf16,
    # stacked into a single (3, C, 9C) operand.
    def eff(w):
        return jnp.transpose(w, (0, 2, 3, 1)).reshape(C, 9 * C).astype(jnp.bfloat16)

    ws = jnp.stack([eff(w1), eff(w2), eff(w3)], axis=0)

    # All per-channel vectors packed into one (C, 9) f32 operand.
    pp = jnp.stack([b1, g1w, g1b, b2, g2w, g2b, g3w, g3b, b3], axis=1).astype(jnp.float32)

    # Embedding branch hoisted out of the kernel: per-sample (C, 2) scale/shift.
    e = emb * jax.nn.sigmoid(emb)
    emb_out = jnp.dot(e, we, preferred_element_type=jnp.float32) + be.reshape(1, -1)
    ss = jnp.stack([emb_out[:, :C], emb_out[:, C:]], axis=-1).astype(jnp.float32)

    kernel = _make_kernel(H, W, C, groups, MWP, LEFT, NPAD)

    in_specs = [
        pl.BlockSpec((1, C, MWP), lambda b: (b, 0, 0)),      # x (wide, f32)
        pl.BlockSpec((1, C, 2), lambda b: (b, 0, 0)),        # scale/shift
        pl.BlockSpec((C, 9), lambda b: (0, 0)),              # packed per-channel params
        pl.BlockSpec((3, C, 9 * C), lambda b: (0, 0, 0)),    # stacked conv weights (bf16)
    ]

    out_wide = pl.pallas_call(
        kernel,
        out_shape=jax.ShapeDtypeStruct((B, C, MWP), jnp.float32),
        grid_spec=pltpu.PrefetchScalarGridSpec(
            num_scalar_prefetch=0,
            grid=(B,),
            in_specs=in_specs,
            out_specs=pl.BlockSpec((1, C, MWP), lambda b: (b, 0, 0)),
            scratch_shapes=[
                pltpu.VMEM((C, NPAD), jnp.bfloat16),          # zero-padded activation
                pltpu.VMEM((9 * C, MWP), jnp.bfloat16),       # im2col buffer
            ],
        ),
        compiler_params=pltpu.CompilerParams(
            dimension_semantics=("parallel",),                # batch split across TCs on v7x
        ),
    )(x_wide, ss, pp, ws)

    # Wide -> NCHW (free reshape+slice; gutter / pad columns are discarded).
    return out_wide[:, :, :HPW].reshape(B, C, H, PW)[:, :, :, :W]


def reference_forward(x, emb, params, groups):
    """Pure-JAX reference mirroring the PyTorch forward (conv operands in bf16
    with f32 accumulation, exactly like the kernel's MXU path)."""
    (w1, b1, g1w, g1b, w2, b2, g2w, g2b, g3w, g3b, w3, b3, we, be) = params
    C = x.shape[1]

    def conv(h, w, bias):
        y = jax.lax.conv_general_dilated(
            h.astype(jnp.bfloat16), w.astype(jnp.bfloat16), (1, 1),
            ((1, 1), (1, 1)), dimension_numbers=('NCHW', 'OIHW', 'NCHW'),
            preferred_element_type=jnp.float32)
        return y + bias.reshape(1, -1, 1, 1)

    def gn(h, gamma, beta):
        Bb, Cc, Hh, Ww = h.shape
        hg = h.reshape(Bb, groups, Cc // groups, Hh, Ww)
        mean = hg.mean(axis=(2, 3, 4), keepdims=True)
        var = ((hg - mean) ** 2).mean(axis=(2, 3, 4), keepdims=True)
        hn = ((hg - mean) * jax.lax.rsqrt(var + 1e-5)).reshape(Bb, Cc, Hh, Ww)
        return hn * gamma.reshape(1, -1, 1, 1) + beta.reshape(1, -1, 1, 1)

    h = jax.nn.relu(gn(conv(x, w1, b1), g1w, g1b))
    h = gn(conv(h, w2, b2), g2w, g2b)
    e = emb * jax.nn.sigmoid(emb)
    emb_out = e @ we + be.reshape(1, -1)
    scale = emb_out[:, :C][:, :, None, None]
    shift = emb_out[:, C:][:, :, None, None]
    o = gn(h, g3w, g3b)
    o = o * jax.nn.sigmoid(o)
    o = conv(o, w3, b3)
    o = o * (1.0 + scale) + shift
    return x + o


if __name__ == "__main__":
    key = jax.random.PRNGKey(0)
    # channel=32 so normalization(channel)=GroupNorm(32, channel) divides evenly.
    B, C, H, W, E = 2, 32, 16, 16, 16
    G = 32
    ks = jax.random.split(key, 16)

    def nrm(k, shape, s=0.1):
        return jax.random.normal(k, shape, jnp.float32) * s

    x = jax.random.normal(ks[0], (B, C, H, W), jnp.float32)
    emb = jax.random.normal(ks[1], (B, E), jnp.float32)
    params = (
        nrm(ks[2], (C, C, 3, 3)), nrm(ks[3], (C,)),        # conv1 weight (OIHW), bias
        1.0 + nrm(ks[4], (C,)), nrm(ks[5], (C,)),          # GN1 gamma, beta
        nrm(ks[6], (C, C, 3, 3)), nrm(ks[7], (C,)),        # conv2 weight, bias
        1.0 + nrm(ks[8], (C,)), nrm(ks[9], (C,)),          # GN2 gamma, beta
        1.0 + nrm(ks[10], (C,)), nrm(ks[11], (C,)),        # GN_out gamma, beta
        nrm(ks[12], (C, C, 3, 3)), nrm(ks[13], (C,)),      # conv_out weight, bias
        nrm(ks[14], (E, 2 * C)), nrm(ks[15], (2 * C,)),    # emb linear w (E,2C), b (2C,)
    )

    out = resnet_block_attn_forward(x, emb, params, G)
    out = jax.block_until_ready(out)

    ref = reference_forward(x, emb, params, G)
    # Tolerance sized for bf16 conv-operand intermediates (rounding-boundary
    # flips amplified through GN/SiLU/conv chain) + EUP transcendentals.
    np.testing.assert_allclose(np.asarray(out), np.asarray(ref), rtol=2e-2, atol=2e-2)
    print("KERNEL_OK")
</pallas_src>

<mosaic_0001>
module attributes {stable_mosaic.version = 11 : i64} {
  func.func @kernel(%arg0: i32, %arg1: memref<1x32x384xf32, #tpu.memory_space<vmem>>, %arg2: memref<1x32x2xf32, #tpu.memory_space<vmem>>, %arg3: memref<32x9xf32, #tpu.memory_space<vmem>>, %arg4: memref<3x32x288xbf16, #tpu.memory_space<vmem>>, %arg5: memref<1x32x384xf32, #tpu.memory_space<vmem>>, %arg6: memref<32x640xbf16, #tpu.memory_space<vmem>>, %arg7: memref<288x384xbf16, #tpu.memory_space<vmem>>) attributes {dimension_semantics = [#tpu.dimension_semantics<parallel>], iteration_bounds = array<i64: 2>, scalar_prefetch = 0 : i64, scratch_operands = 2 : i64, tpu.core_type = #tpu.core_type<tc>, window_params = [{transform_indices = @transform_0, window_bounds = array<i64: 1, 32, 384>}, {transform_indices = @transform_1, window_bounds = array<i64: 1, 32, 2>}, {pipeline_mode = #tpu.pipeline_mode<synchronous>, transform_indices = @transform_2, window_bounds = array<i64: 32, 9>}, {pipeline_mode = #tpu.pipeline_mode<synchronous>, transform_indices = @transform_3, window_bounds = array<i64: 3, 32, 288>}, {transform_indices = @transform_4, window_bounds = array<i64: 1, 32, 384>}]} {
    %0 = tpu.iota {dimensions = array<i32: 1>} : vector<1x384xi32>
    %c18_i32 = arith.constant 18 : i32
    %c0_i32 = arith.constant 0 : i32
    %1 = arith.cmpi eq, %c18_i32, %c0_i32 : i32
    %c1_i32 = arith.constant 1 : i32
    %2 = arith.select %1, %c1_i32, %c18_i32 : i32
    %3 = vector.broadcast %2 : i32 to vector<1x384xi32>
    %4 = arith.remsi %0, %3 : vector<1x384xi32>
    %c0_i32_0 = arith.constant 0 : i32
    %5 = vector.broadcast %c0_i32_0 : i32 to vector<1x384xi32>
    %6 = arith.cmpi ne, %4, %5 : vector<1x384xi32>
    %c0_i32_1 = arith.constant 0 : i32
    %7 = vector.broadcast %c0_i32_1 : i32 to vector<1x384xi32>
    %8 = arith.cmpi slt, %4, %7 : vector<1x384xi32>
    %c0_i32_2 = arith.constant 0 : i32
    %9 = arith.cmpi slt, %2, %c0_i32_2 : i32
    %10 = vector.broadcast %9 : i1 to vector<1x384xi1>
    %11 = vector.broadcast %10 : vector<1x384xi1> to vector<1x384xi1>
    %12 = arith.xori %8, %11 : vector<1x384xi1>
    %13 = arith.andi %12, %6 : vector<1x384xi1>
    %14 = vector.broadcast %2 : i32 to vector<1x384xi32>
    %15 = arith.addi %4, %14 : vector<1x384xi32>
    %16 = arith.select %13, %15, %4 : vector<1x384xi1>, vector<1x384xi32>
    %c16_i32 = arith.constant 16 : i32
    %17 = vector.broadcast %c16_i32 : i32 to vector<1x384xi32>
    %18 = arith.cmpi slt, %16, %17 : vector<1x384xi32>
    %c286_i32 = arith.constant 286 : i32
    %19 = vector.broadcast %c286_i32 : i32 to vector<1x384xi32>
    %20 = arith.cmpi slt, %0, %19 : vector<1x384xi32>
    %21 = arith.andi %18, %20 : vector<1x384xi1>
    %cst = arith.constant 1.000000e+00 : f32
    %cst_3 = arith.constant 0.000000e+00 : f32
    %22 = vector.broadcast %cst : f32 to vector<1x384xf32>
    %23 = vector.broadcast %cst_3 : f32 to vector<1x384xf32>
    %24 = arith.select %21, %22, %23 : vector<1x384xi1>, vector<1x384xf32>
    %c0 = arith.constant 0 : index
    %c0_4 = arith.constant 0 : index
    %c0_5 = arith.constant 0 : index
    %25 = vector.load %arg1[%c0, %c0_4, %c0_5] : memref<1x32x384xf32, #tpu.memory_space<vmem>>, vector<1x32x384xf32>
    %26 = vector.shape_cast %25 : vector<1x32x384xf32> to vector<32x384xf32>
    %c0_6 = arith.constant 0 : index
    %c0_7 = arith.constant 0 : index
    %c0_8 = arith.constant 0 : index
    %27 = vector.load %arg2[%c0_6, %c0_7, %c0_8] : memref<1x32x2xf32, #tpu.memory_space<vmem>>, vector<1x32x2xf32>
    %28 = vector.shape_cast %27 : vector<1x32x2xf32> to vector<32x2xf32>
    %29 = vector.extract_strided_slice %28 {offsets = [0, 0], sizes = [32, 1], strides = [1, 1]} : vector<32x2xf32> to vector<32x1xf32>
    %30 = vector.extract_strided_slice %28 {offsets = [0, 1], sizes = [32, 1], strides = [1, 1]} : vector<32x2xf32> to vector<32x1xf32>
    %cst_9 = arith.constant 0.000000e+00 : bf16
    %31 = vector.broadcast %cst_9 : bf16 to vector<32x128xbf16>
    %c0_10 = arith.constant 0 : index
    %c0_11 = arith.constant 0 : index
    %32 = vector.load %arg6[%c0_10, %c0_11] : memref<32x640xbf16, #tpu.memory_space<vmem>>, vector<32x128xbf16>
    tpu.vector_store %arg6[%c0_10, %c0_11], %31 {strides = array<i32>} : memref<32x640xbf16, #tpu.memory_space<vmem>>, vector<32x128xbf16>,
    %cst_12 = arith.constant 0.000000e+00 : bf16
    %33 = vector.broadcast %cst_12 : bf16 to vector<32x128xbf16>
    %c0_13 = arith.constant 0 : index
    %c512 = arith.constant 512 : index
    %34 = vector.load %arg6[%c0_13, %c512] : memref<32x640xbf16, #tpu.memory_space<vmem>>, vector<32x128xbf16>
    tpu.vector_store %arg6[%c0_13, %c512], %33 {strides = array<i32>} : memref<32x640xbf16, #tpu.memory_space<vmem>>, vector<32x128xbf16>,
    %c0_14 = arith.constant 0 : index
    %c0_15 = arith.constant 0 : index
    %35 = vector.load %arg3[%c0_14, %c0_15] : memref<32x9xf32, #tpu.memory_space<vmem>>, vector<32x1xf32>
    %36 = vector.broadcast %24 : vector<1x384xf32> to vector<32x384xf32>
    %37 = arith.mulf %26, %36 : vector<32x384xf32>
    %38 = arith.truncf %37 : vector<32x384xf32> to vector<32x384xbf16>
    %c0_16 = arith.constant 0 : index
    %c128 = arith.constant 128 : index
    %39 = vector.load %arg6[%c0_16, %c128] : memref<32x640xbf16, #tpu.memory_space<vmem>>, vector<32x384xbf16>
    tpu.vector_store %arg6[%c0_16, %c128], %38 {strides = array<i32>} : memref<32x640xbf16, #tpu.memory_space<vmem>>, vector<32x384xbf16>,
    %c0_17 = arith.constant 0 : index
    %c109 = arith.constant 109 : index
    %40 = vector.load %arg6[%c0_17, %c109] : memref<32x640xbf16, #tpu.memory_space<vmem>>, vector<32x384xbf16>
    %c0_18 = arith.constant 0 : index
    %c0_19 = arith.constant 0 : index
    %41 = vector.load %arg7[%c0_18, %c0_19] : memref<288x384xbf16, #tpu.memory_space<vmem>>, vector<32x384xbf16>
    tpu.vector_store %arg7[%c0_18, %c0_19], %40 {strides = array<i32>} : memref<288x384xbf16, #tpu.memory_space<vmem>>, vector<32x384xbf16>,
    %c0_20 = arith.constant 0 : index
    %c110 = arith.constant 110 : index
    %42 = vector.load %arg6[%c0_20, %c110] : memref<32x640xbf16, #tpu.memory_space<vmem>>, vector<32x384xbf16>
    %c32 = arith.constant 32 : index
    %c0_21 = arith.constant 0 : index
    %43 = vector.load %arg7[%c32, %c0_21] : memref<288x384xbf16, #tpu.memory_space<vmem>>, vector<32x384xbf16>
    tpu.vector_store %arg7[%c32, %c0_21], %42 {strides = array<i32>} : memref<288x384xbf16, #tpu.memory_space<vmem>>, vector<32x384xbf16>,
    %c0_22 = arith.constant 0 : index
    %c111 = arith.constant 111 : index
    %44 = vector.load %arg6[%c0_22, %c111] : memref<32x640xbf16, #tpu.memory_space<vmem>>, vector<32x384xbf16>
    %c64 = arith.constant 64 : index
    %c0_23 = arith.constant 0 : index
    %45 = vector.load %arg7[%c64, %c0_23] : memref<288x384xbf16, #tpu.memory_space<vmem>>, vector<32x384xbf16>
    tpu.vector_store %arg7[%c64, %c0_23], %44 {strides = array<i32>} : memref<288x384xbf16, #tpu.memory_space<vmem>>, vector<32x384xbf16>,
    %c0_24 = arith.constant 0 : index
    %c127 = arith.constant 127 : index
    %46 = vector.load %arg6[%c0_24, %c127] : memref<32x640xbf16, #tpu.memory_space<vmem>>, vector<32x384xbf16>
    %c96 = arith.constant 96 : index
    %c0_25 = arith.constant 0 : index
    %47 = vector.load %arg7[%c96, %c0_25] : memref<288x384xbf16, #tpu.memory_space<vmem>>, vector<32x384xbf16>
    tpu.vector_store %arg7[%c96, %c0_25], %46 {strides = array<i32>} : memref<288x384xbf16, #tpu.memory_space<vmem>>, vector<32x384xbf16>,
    %c0_26 = arith.constant 0 : index
    %c128_27 = arith.constant 128 : index
    %48 = vector.load %arg6[%c0_26, %c128_27] : memref<32x640xbf16, #tpu.memory_space<vmem>>, vector<32x384xbf16>
    %c128_28 = arith.constant 128 : index
    %c0_29 = arith.constant 0 : index
    %49 = vector.load %arg7[%c128_28, %c0_29] : memref<288x384xbf16, #tpu.memory_space<vmem>>, vector<32x384xbf16>
    tpu.vector_store %arg7[%c128_28, %c0_29], %48 {strides = array<i32>} : memref<288x384xbf16, #tpu.memory_space<vmem>>, vector<32x384xbf16>,
    %c0_30 = arith.constant 0 : index
    %c129 = arith.constant 129 : index
    %50 = vector.load %arg6[%c0_30, %c129] : memref<32x640xbf16, #tpu.memory_space<vmem>>, vector<32x384xbf16>
    %c160 = arith.constant 160 : index
    %c0_31 = arith.constant 0 : index
    %51 = vector.load %arg7[%c160, %c0_31] : memref<288x384xbf16, #tpu.memory_space<vmem>>, vector<32x384xbf16>
    tpu.vector_store %arg7[%c160, %c0_31], %50 {strides = array<i32>} : memref<288x384xbf16, #tpu.memory_space<vmem>>, vector<32x384xbf16>,
    %c0_32 = arith.constant 0 : index
    %c145 = arith.constant 145 : index
    %52 = vector.load %arg6[%c0_32, %c145] : memref<32x640xbf16, #tpu.memory_space<vmem>>, vector<32x384xbf16>
    %c192 = arith.constant 192 : index
    %c0_33 = arith.constant 0 : index
    %53 = vector.load %arg7[%c192, %c0_33] : memref<288x384xbf16, #tpu.memory_space<vmem>>, vector<32x384xbf16>
    tpu.vector_store %arg7[%c192, %c0_33], %52 {strides = array<i32>} : memref<288x384xbf16, #tpu.memory_space<vmem>>, vector<32x384xbf16>,
    %c0_34 = arith.constant 0 : index
    %c146 = arith.constant 146 : index
    %54 = vector.load %arg6[%c0_34, %c146] : memref<32x640xbf16, #tpu.memory_space<vmem>>, vector<32x384xbf16>
    %c224 = arith.constant 224 : index
    %c0_35 = arith.constant 0 : index
    %55 = vector.load %arg7[%c224, %c0_35] : memref<288x384xbf16, #tpu.memory_space<vmem>>, vector<32x384xbf16>
    tpu.vector_store %arg7[%c224, %c0_35], %54 {strides = array<i32>} : memref<288x384xbf16, #tpu.memory_space<vmem>>, vector<32x384xbf16>,
    %c0_36 = arith.constant 0 : index
    %c147 = arith.constant 147 : index
    %56 = vector.load %arg6[%c0_36, %c147] : memref<32x640xbf16, #tpu.memory_space<vmem>>, vector<32x384xbf16>
    %c256 = arith.constant 256 : index
    %c0_37 = arith.constant 0 : index
    %57 = vector.load %arg7[%c256, %c0_37] : memref<288x384xbf16, #tpu.memory_space<vmem>>, vector<32x384xbf16>
    tpu.vector_store %arg7[%c256, %c0_37], %56 {strides = array<i32>} : memref<288x384xbf16, #tpu.memory_space<vmem>>, vector<32x384xbf16>,
    %c0_38 = arith.constant 0 : index
    %c0_39 = arith.constant 0 : index
    %c0_40 = arith.constant 0 : index
    %58 = vector.load %arg4[%c0_38, %c0_39, %c0_40] : memref<3x32x288xbf16, #tpu.memory_space<vmem>>, vector<1x32x288xbf16>
    %59 = vector.shape_cast %58 : vector<1x32x288xbf16> to vector<32x288xbf16>
    %c0_41 = arith.constant 0 : index
    %c0_42 = arith.constant 0 : index
    %60 = vector.load %arg7[%c0_41, %c0_42] : memref<288x384xbf16, #tpu.memory_space<vmem>>, vector<288x384xbf16>
    %cst_43 = arith.constant dense<0.000000e+00> : vector<32x384xf32>
    %61 = tpu.matmul %59, %60, %cst_43 {dimension_numbers = #tpu.dot_dimension_numbers<[1], [0], [0], [1], [0, 0, 1, 1], [], []>} : vector<32x288xbf16>, vector<288x384xbf16>, vector<32x384xf32> -> vector<32x384xf32>
    %62 = vector.broadcast %35 : vector<32x1xf32> to vector<32x384xf32>
    %63 = arith.addf %61, %62 : vector<32x384xf32>
    %c0_44 = arith.constant 0 : index
    %c1 = arith.constant 1 : index
    %64 = vector.load %arg3[%c0_44, %c1] : memref<32x9xf32, #tpu.memory_space<vmem>>, vector<32x1xf32>
    %c0_45 = arith.constant 0 : index
    %c2 = arith.constant 2 : index
    %65 = vector.load %arg3[%c0_45, %c2] : memref<32x9xf32, #tpu.memory_space<vmem>>, vector<32x1xf32>
    %66 = vector.broadcast %24 : vector<1x384xf32> to vector<32x384xf32>
    %67 = arith.mulf %63, %66 : vector<32x384xf32>
    %cst_46 = arith.constant dense<0.000000e+00> : vector<32xf32>
    %68 = vector.multi_reduction <add>, %67, %cst_46 [1] : vector<32x384xf32> to vector<32xf32>
    %69 = vector.shape_cast %68 : vector<32xf32> to vector<32x1xf32>
    %70 = arith.mulf %67, %63 : vector<32x384xf32>
    %cst_47 = arith.constant dense<0.000000e+00> : vector<32xf32>
    %71 = vector.multi_reduction <add>, %70, %cst_47 [1] : vector<32x384xf32> to vector<32xf32>
    %72 = vector.shape_cast %71 : vector<32xf32> to vector<32x1xf32>
    %cst_48 = arith.constant 3.906250e-03 : f32
    %73 = vector.broadcast %cst_48 : f32 to vector<32x1xf32>
    %74 = arith.mulf %69, %73 : vector<32x1xf32>
    %cst_49 = arith.constant 3.906250e-03 : f32
    %75 = vector.broadcast %cst_49 : f32 to vector<32x1xf32>
    %76 = arith.mulf %72, %75 : vector<32x1xf32>
    %77 = arith.mulf %74, %74 : vector<32x1xf32>
    %78 = arith.subf %76, %77 : vector<32x1xf32>
    %cst_50 = arith.constant 0.000000e+00 : f32
    %79 = vector.broadcast %cst_50 : f32 to vector<32x1xf32>
    %80 = arith.maximumf %78, %79 : vector<32x1xf32>
    %81 = vector.broadcast %74 : vector<32x1xf32> to vector<32x384xf32>
    %82 = arith.subf %63, %81 : vector<32x384xf32>
    %cst_51 = arith.constant 9.99999974E-6 : f32
    %83 = vector.broadcast %cst_51 : f32 to vector<32x1xf32>
    %84 = arith.addf %80, %83 : vector<32x1xf32>
    %85 = math.rsqrt %84 : vector<32x1xf32>
    %86 = vector.broadcast %85 : vector<32x1xf32> to vector<32x384xf32>
    %87 = arith.mulf %82, %86 : vector<32x384xf32>
    %88 = vector.broadcast %64 : vector<32x1xf32> to vector<32x384xf32>
    %89 = arith.mulf %87, %88 : vector<32x384xf32>
    %90 = vector.broadcast %65 : vector<32x1xf32> to vector<32x384xf32>
    %91 = arith.addf %89, %90 : vector<32x384xf32>
    %cst_52 = arith.constant 0.000000e+00 : f32
    %92 = vector.broadcast %cst_52 : f32 to vector<32x384xf32>
    %93 = arith.maximumf %91, %92 : vector<32x384xf32>
    %c0_53 = arith.constant 0 : index
    %c3 = arith.constant 3 : index
    %94 = vector.load %arg3[%c0_53, %c3] : memref<32x9xf32, #tpu.memory_space<vmem>>, vector<32x1xf32>
    %95 = vector.broadcast %24 : vector<1x384xf32> to vector<32x384xf32>
    %96 = arith.mulf %93, %95 : vector<32x384xf32>
    %97 = arith.truncf %96 : vector<32x384xf32> to vector<32x384xbf16>
    %c0_54 = arith.constant 0 : index
    %c128_55 = arith.constant 128 : index
    %98 = vector.load %arg6[%c0_54, %c128_55] : memref<32x640xbf16, #tpu.memory_space<vmem>>, vector<32x384xbf16>
    tpu.vector_store %arg6[%c0_54, %c128_55], %97 {strides = array<i32>} : memref<32x640xbf16, #tpu.memory_space<vmem>>, vector<32x384xbf16>,
    %c0_56 = arith.constant 0 : index
    %c109_57 = arith.constant 109 : index
    %99 = vector.load %arg6[%c0_56, %c109_57] : memref<32x640xbf16, #tpu.memory_space<vmem>>, vector<32x384xbf16>
    %c0_58 = arith.constant 0 : index
    %c0_59 = arith.constant 0 : index
    %100 = vector.load %arg7[%c0_58, %c0_59] : memref<288x384xbf16, #tpu.memory_space<vmem>>, vector<32x384xbf16>
    tpu.vector_store %arg7[%c0_58, %c0_59], %99 {strides = array<i32>} : memref<288x384xbf16, #tpu.memory_space<vmem>>, vector<32x384xbf16>,
    %c0_60 = arith.constant 0 : index
    %c110_61 = arith.constant 110 : index
    %101 = vector.load %arg6[%c0_60, %c110_61] : memref<32x640xbf16, #tpu.memory_space<vmem>>, vector<32x384xbf16>
    %c32_62 = arith.constant 32 : index
    %c0_63 = arith.constant 0 : index
    %102 = vector.load %arg7[%c32_62, %c0_63] : memref<288x384xbf16, #tpu.memory_space<vmem>>, vector<32x384xbf16>
    tpu.vector_store %arg7[%c32_62, %c0_63], %101 {strides = array<i32>} : memref<288x384xbf16, #tpu.memory_space<vmem>>, vector<32x384xbf16>,
    %c0_64 = arith.constant 0 : index
    %c111_65 = arith.constant 111 : index
    %103 = vector.load %arg6[%c0_64, %c111_65] : memref<32x640xbf16, #tpu.memory_space<vmem>>, vector<32x384xbf16>
    %c64_66 = arith.constant 64 : index
    %c0_67 = arith.constant 0 : index
    %104 = vector.load %arg7[%c64_66, %c0_67] : memref<288x384xbf16, #tpu.memory_space<vmem>>, vector<32x384xbf16>
    tpu.vector_store %arg7[%c64_66, %c0_67], %103 {strides = array<i32>} : memref<288x384xbf16, #tpu.memory_space<vmem>>, vector<32x384xbf16>,
    %c0_68 = arith.constant 0 : index
    %c127_69 = arith.constant 127 : index
    %105 = vector.load %arg6[%c0_68, %c127_69] : memref<32x640xbf16, #tpu.memory_space<vmem>>, vector<32x384xbf16>
    %c96_70 = arith.constant 96 : index
    %c0_71 = arith.constant 0 : index
    %106 = vector.load %arg7[%c96_70, %c0_71] : memref<288x384xbf16, #tpu.memory_space<vmem>>, vector<32x384xbf16>
    tpu.vector_store %arg7[%c96_70, %c0_71], %105 {strides = array<i32>} : memref<288x384xbf16, #tpu.memory_space<vmem>>, vector<32x384xbf16>,
    %c0_72 = arith.constant 0 : index
    %c128_73 = arith.constant 128 : index
    %107 = vector.load %arg6[%c0_72, %c128_73] : memref<32x640xbf16, #tpu.memory_space<vmem>>, vector<32x384xbf16>
    %c128_74 = arith.constant 128 : index
    %c0_75 = arith.constant 0 : index
    %108 = vector.load %arg7[%c128_74, %c0_75] : memref<288x384xbf16, #tpu.memory_space<vmem>>, vector<32x384xbf16>
    tpu.vector_store %arg7[%c128_74, %c0_75], %107 {strides = array<i32>} : memref<288x384xbf16, #tpu.memory_space<vmem>>, vector<32x384xbf16>,
    %c0_76 = arith.constant 0 : index
    %c129_77 = arith.constant 129 : index
    %109 = vector.load %arg6[%c0_76, %c129_77] : memref<32x640xbf16, #tpu.memory_space<vmem>>, vector<32x384xbf16>
    %c160_78 = arith.constant 160 : index
    %c0_79 = arith.constant 0 : index
    %110 = vector.load %arg7[%c160_78, %c0_79] : memref<288x384xbf16, #tpu.memory_space<vmem>>, vector<32x384xbf16>
    tpu.vector_store %arg7[%c160_78, %c0_79], %109 {strides = array<i32>} : memref<288x384xbf16, #tpu.memory_space<vmem>>, vector<32x384xbf16>,
    %c0_80 = arith.constant 0 : index
    %c145_81 = arith.constant 145 : index
    %111 = vector.load %arg6[%c0_80, %c145_81] : memref<32x640xbf16, #tpu.memory_space<vmem>>, vector<32x384xbf16>
    %c192_82 = arith.constant 192 : index
    %c0_83 = arith.constant 0 : index
    %112 = vector.load %arg7[%c192_82, %c0_83] : memref<288x384xbf16, #tpu.memory_space<vmem>>, vector<32x384xbf16>
    tpu.vector_store %arg7[%c192_82, %c0_83], %111 {strides = array<i32>} : memref<288x384xbf16, #tpu.memory_space<vmem>>, vector<32x384xbf16>,
    %c0_84 = arith.constant 0 : index
    %c146_85 = arith.constant 146 : index
    %113 = vector.load %arg6[%c0_84, %c146_85] : memref<32x640xbf16, #tpu.memory_space<vmem>>, vector<32x384xbf16>
    %c224_86 = arith.constant 224 : index
    %c0_87 = arith.constant 0 : index
    %114 = vector.load %arg7[%c224_86, %c0_87] : memref<288x384xbf16, #tpu.memory_space<vmem>>, vector<32x384xbf16>
    tpu.vector_store %arg7[%c224_86, %c0_87], %113 {strides = array<i32>} : memref<288x384xbf16, #tpu.memory_space<vmem>>, vector<32x384xbf16>,
    %c0_88 = arith.constant 0 : index
    %c147_89 = arith.constant 147 : index
    %115 = vector.load %arg6[%c0_88, %c147_89] : memref<32x640xbf16, #tpu.memory_space<vmem>>, vector<32x384xbf16>
    %c256_90 = arith.constant 256 : index
    %c0_91 = arith.constant 0 : index
    %116 = vector.load %arg7[%c256_90, %c0_91] : memref<288x384xbf16, #tpu.memory_space<vmem>>, vector<32x384xbf16>
    tpu.vector_store %arg7[%c256_90, %c0_91], %115 {strides = array<i32>} : memref<288x384xbf16, #tpu.memory_space<vmem>>, vector<32x384xbf16>,
    %c1_92 = arith.constant 1 : index
    %c0_93 = arith.constant 0 : index
    %c0_94 = arith.constant 0 : index
    %117 = vector.load %arg4[%c1_92, %c0_93, %c0_94] : memref<3x32x288xbf16, #tpu.memory_space<vmem>>, vector<1x32x288xbf16>
    %118 = vector.shape_cast %117 : vector<1x32x288xbf16> to vector<32x288xbf16>
    %c0_95 = arith.constant 0 : index
    %c0_96 = arith.constant 0 : index
    %119 = vector.load %arg7[%c0_95, %c0_96] : memref<288x384xbf16, #tpu.memory_space<vmem>>, vector<288x384xbf16>
    %cst_97 = arith.constant dense<0.000000e+00> : vector<32x384xf32>
    %120 = tpu.matmul %118, %119, %cst_97 {dimension_numbers = #tpu.dot_dimension_numbers<[1], [0], [0], [1], [0, 0, 1, 1], [], []>} : vector<32x288xbf16>, vector<288x384xbf16>, vector<32x384xf32> -> vector<32x384xf32>
    %121 = vector.broadcast %94 : vector<32x1xf32> to vector<32x384xf32>
    %122 = arith.addf %120, %121 : vector<32x384xf32>
    %c0_98 = arith.constant 0 : index
    %c4 = arith.constant 4 : index
    %123 = vector.load %arg3[%c0_98, %c4] : memref<32x9xf32, #tpu.memory_space<vmem>>, vector<32x1xf32>
    %c0_99 = arith.constant 0 : index
    %c5 = arith.constant 5 : index
    %124 = vector.load %arg3[%c0_99, %c5] : memref<32x9xf32, #tpu.memory_space<vmem>>, vector<32x1xf32>
    %125 = vector.broadcast %24 : vector<1x384xf32> to vector<32x384xf32>
    %126 = arith.mulf %122, %125 : vector<32x384xf32>
    %cst_100 = arith.constant dense<0.000000e+00> : vector<32xf32>
    %127 = vector.multi_reduction <add>, %126, %cst_100 [1] : vector<32x384xf32> to vector<32xf32>
    %128 = vector.shape_cast %127 : vector<32xf32> to vector<32x1xf32>
    %129 = arith.mulf %126, %122 : vector<32x384xf32>
    %cst_101 = arith.constant dense<0.000000e+00> : vector<32xf32>
    %130 = vector.multi_reduction <add>, %129, %cst_101 [1] : vector<32x384xf32> to vector<32xf32>
    %131 = vector.shape_cast %130 : vector<32xf32> to vector<32x1xf32>
    %cst_102 = arith.constant 3.906250e-03 : f32
    %132 = vector.broadcast %cst_102 : f32 to vector<32x1xf32>
    %133 = arith.mulf %128, %132 : vector<32x1xf32>
    %cst_103 = arith.constant 3.906250e-03 : f32
    %134 = vector.broadcast %cst_103 : f32 to vector<32x1xf32>
    %135 = arith.mulf %131, %134 : vector<32x1xf32>
    %136 = arith.mulf %133, %133 : vector<32x1xf32>
    %137 = arith.subf %135, %136 : vector<32x1xf32>
    %cst_104 = arith.constant 0.000000e+00 : f32
    %138 = vector.broadcast %cst_104 : f32 to vector<32x1xf32>
    %139 = arith.maximumf %137, %138 : vector<32x1xf32>
    %140 = vector.broadcast %133 : vector<32x1xf32> to vector<32x384xf32>
    %141 = arith.subf %122, %140 : vector<32x384xf32>
    %cst_105 = arith.constant 9.99999974E-6 : f32
    %142 = vector.broadcast %cst_105 : f32 to vector<32x1xf32>
    %143 = arith.addf %139, %142 : vector<32x1xf32>
    %144 = math.rsqrt %143 : vector<32x1xf32>
    %145 = vector.broadcast %144 : vector<32x1xf32> to vector<32x384xf32>
    %146 = arith.mulf %141, %145 : vector<32x384xf32>
    %147 = vector.broadcast %123 : vector<32x1xf32> to vector<32x384xf32>
    %148 = arith.mulf %146, %147 : vector<32x384xf32>
    %149 = vector.broadcast %124 : vector<32x1xf32> to vector<32x384xf32>
    %150 = arith.addf %148, %149 : vector<32x384xf32>
    %c0_106 = arith.constant 0 : index
    %c6 = arith.constant 6 : index
    %151 = vector.load %arg3[%c0_106, %c6] : memref<32x9xf32, #tpu.memory_space<vmem>>, vector<32x1xf32>
    %c0_107 = arith.constant 0 : index
    %c7 = arith.constant 7 : index
    %152 = vector.load %arg3[%c0_107, %c7] : memref<32x9xf32, #tpu.memory_space<vmem>>, vector<32x1xf32>
    %153 = vector.broadcast %24 : vector<1x384xf32> to vector<32x384xf32>
    %154 = arith.mulf %150, %153 : vector<32x384xf32>
    %cst_108 = arith.constant dense<0.000000e+00> : vector<32xf32>
    %155 = vector.multi_reduction <add>, %154, %cst_108 [1] : vector<32x384xf32> to vector<32xf32>
    %156 = vector.shape_cast %155 : vector<32xf32> to vector<32x1xf32>
    %157 = arith.mulf %154, %150 : vector<32x384xf32>
    %cst_109 = arith.constant dense<0.000000e+00> : vector<32xf32>
    %158 = vector.multi_reduction <add>, %157, %cst_109 [1] : vector<32x384xf32> to vector<32xf32>
    %159 = vector.shape_cast %158 : vector<32xf32> to vector<32x1xf32>
    %cst_110 = arith.constant 3.906250e-03 : f32
    %160 = vector.broadcast %cst_110 : f32 to vector<32x1xf32>
    %161 = arith.mulf %156, %160 : vector<32x1xf32>
    %cst_111 = arith.constant 3.906250e-03 : f32
    %162 = vector.broadcast %cst_111 : f32 to vector<32x1xf32>
    %163 = arith.mulf %159, %162 : vector<32x1xf32>
    %164 = arith.mulf %161, %161 : vector<32x1xf32>
    %165 = arith.subf %163, %164 : vector<32x1xf32>
    %cst_112 = arith.constant 0.000000e+00 : f32
    %166 = vector.broadcast %cst_112 : f32 to vector<32x1xf32>
    %167 = arith.maximumf %165, %166 : vector<32x1xf32>
    %168 = vector.broadcast %161 : vector<32x1xf32> to vector<32x384xf32>
    %169 = arith.subf %150, %168 : vector<32x384xf32>
    %cst_113 = arith.constant 9.99999974E-6 : f32
    %170 = vector.broadcast %cst_113 : f32 to vector<32x1xf32>
    %171 = arith.addf %167, %170 : vector<32x1xf32>
    %172 = math.rsqrt %171 : vector<32x1xf32>
    %173 = vector.broadcast %172 : vector<32x1xf32> to vector<32x384xf32>
    %174 = arith.mulf %169, %173 : vector<32x384xf32>
    %175 = vector.broadcast %151 : vector<32x1xf32> to vector<32x384xf32>
    %176 = arith.mulf %174, %175 : vector<32x384xf32>
    %177 = vector.broadcast %152 : vector<32x1xf32> to vector<32x384xf32>
    %178 = arith.addf %176, %177 : vector<32x384xf32>
    %179 = arith.negf %178 : vector<32x384xf32>
    %180 = math.exp %179 : vector<32x384xf32>
    %cst_114 = arith.constant 1.000000e+00 : f32
    %181 = vector.broadcast %cst_114 : f32 to vector<32x384xf32>
    %182 = arith.addf %181, %180 : vector<32x384xf32>
    %183 = arith.divf %181, %182 : vector<32x384xf32>
    %184 = arith.mulf %178, %183 : vector<32x384xf32>
    %c0_115 = arith.constant 0 : index
    %c8 = arith.constant 8 : index
    %185 = vector.load %arg3[%c0_115, %c8] : memref<32x9xf32, #tpu.memory_space<vmem>>, vector<32x1xf32>
    %186 = vector.broadcast %24 : vector<1x384xf32> to vector<32x384xf32>
    %187 = arith.mulf %184, %186 : vector<32x384xf32>
    %188 = arith.truncf %187 : vector<32x384xf32> to vector<32x384xbf16>
    %c0_116 = arith.constant 0 : index
    %c128_117 = arith.constant 128 : index
    %189 = vector.load %arg6[%c0_116, %c128_117] : memref<32x640xbf16, #tpu.memory_space<vmem>>, vector<32x384xbf16>
    tpu.vector_store %arg6[%c0_116, %c128_117], %188 {strides = array<i32>} : memref<32x640xbf16, #tpu.memory_space<vmem>>, vector<32x384xbf16>,
    %c0_118 = arith.constant 0 : index
    %c109_119 = arith.constant 109 : index
    %190 = vector.load %arg6[%c0_118, %c109_119] : memref<32x640xbf16, #tpu.memory_space<vmem>>, vector<32x384xbf16>
    %c0_120 = arith.constant 0 : index
    %c0_121 = arith.constant 0 : index
    %191 = vector.load %arg7[%c0_120, %c0_121] : memref<288x384xbf16, #tpu.memory_space<vmem>>, vector<32x384xbf16>
    tpu.vector_store %arg7[%c0_120, %c0_121], %190 {strides = array<i32>} : memref<288x384xbf16, #tpu.memory_space<vmem>>, vector<32x384xbf16>,
    %c0_122 = arith.constant 0 : index
    %c110_123 = arith.constant 110 : index
    %192 = vector.load %arg6[%c0_122, %c110_123] : memref<32x640xbf16, #tpu.memory_space<vmem>>, vector<32x384xbf16>
    %c32_124 = arith.constant 32 : index
    %c0_125 = arith.constant 0 : index
    %193 = vector.load %arg7[%c32_124, %c0_125] : memref<288x384xbf16, #tpu.memory_space<vmem>>, vector<32x384xbf16>
    tpu.vector_store %arg7[%c32_124, %c0_125], %192 {strides = array<i32>} : memref<288x384xbf16, #tpu.memory_space<vmem>>, vector<32x384xbf16>,
    %c0_126 = arith.constant 0 : index
    %c111_127 = arith.constant 111 : index
    %194 = vector.load %arg6[%c0_126, %c111_127] : memref<32x640xbf16, #tpu.memory_space<vmem>>, vector<32x384xbf16>
    %c64_128 = arith.constant 64 : index
    %c0_129 = arith.constant 0 : index
    %195 = vector.load %arg7[%c64_128, %c0_129] : memref<288x384xbf16, #tpu.memory_space<vmem>>, vector<32x384xbf16>
    tpu.vector_store %arg7[%c64_128, %c0_129], %194 {strides = array<i32>} : memref<288x384xbf16, #tpu.memory_space<vmem>>, vector<32x384xbf16>,
    %c0_130 = arith.constant 0 : index
    %c127_131 = arith.constant 127 : index
    %196 = vector.load %arg6[%c0_130, %c127_131] : memref<32x640xbf16, #tpu.memory_space<vmem>>, vector<32x384xbf16>
    %c96_132 = arith.constant 96 : index
    %c0_133 = arith.constant 0 : index
    %197 = vector.load %arg7[%c96_132, %c0_133] : memref<288x384xbf16, #tpu.memory_space<vmem>>, vector<32x384xbf16>
    tpu.vector_store %arg7[%c96_132, %c0_133], %196 {strides = array<i32>} : memref<288x384xbf16, #tpu.memory_space<vmem>>, vector<32x384xbf16>,
    %c0_134 = arith.constant 0 : index
    %c128_135 = arith.constant 128 : index
    %198 = vector.load %arg6[%c0_134, %c128_135] : memref<32x640xbf16, #tpu.memory_space<vmem>>, vector<32x384xbf16>
    %c128_136 = arith.constant 128 : index
    %c0_137 = arith.constant 0 : index
    %199 = vector.load %arg7[%c128_136, %c0_137] : memref<288x384xbf16, #tpu.memory_space<vmem>>, vector<32x384xbf16>
    tpu.vector_store %arg7[%c128_136, %c0_137], %198 {strides = array<i32>} : memref<288x384xbf16, #tpu.memory_space<vmem>>, vector<32x384xbf16>,
    %c0_138 = arith.constant 0 : index
    %c129_139 = arith.constant 129 : index
    %200 = vector.load %arg6[%c0_138, %c129_139] : memref<32x640xbf16, #tpu.memory_space<vmem>>, vector<32x384xbf16>
    %c160_140 = arith.constant 160 : index
    %c0_141 = arith.constant 0 : index
    %201 = vector.load %arg7[%c160_140, %c0_141] : memref<288x384xbf16, #tpu.memory_space<vmem>>, vector<32x384xbf16>
    tpu.vector_store %arg7[%c160_140, %c0_141], %200 {strides = array<i32>} : memref<288x384xbf16, #tpu.memory_space<vmem>>, vector<32x384xbf16>,
    %c0_142 = arith.constant 0 : index
    %c145_143 = arith.constant 145 : index
    %202 = vector.load %arg6[%c0_142, %c145_143] : memref<32x640xbf16, #tpu.memory_space<vmem>>, vector<32x384xbf16>
    %c192_144 = arith.constant 192 : index
    %c0_145 = arith.constant 0 : index
    %203 = vector.load %arg7[%c192_144, %c0_145] : memref<288x384xbf16, #tpu.memory_space<vmem>>, vector<32x384xbf16>
    tpu.vector_store %arg7[%c192_144, %c0_145], %202 {strides = array<i32>} : memref<288x384xbf16, #tpu.memory_space<vmem>>, vector<32x384xbf16>,
    %c0_146 = arith.constant 0 : index
    %c146_147 = arith.constant 146 : index
    %204 = vector.load %arg6[%c0_146, %c146_147] : memref<32x640xbf16, #tpu.memory_space<vmem>>, vector<32x384xbf16>
    %c224_148 = arith.constant 224 : index
    %c0_149 = arith.constant 0 : index
    %205 = vector.load %arg7[%c224_148, %c0_149] : memref<288x384xbf16, #tpu.memory_space<vmem>>, vector<32x384xbf16>
    tpu.vector_store %arg7[%c224_148, %c0_149], %204 {strides = array<i32>} : memref<288x384xbf16, #tpu.memory_space<vmem>>, vector<32x384xbf16>,
    %c0_150 = arith.constant 0 : index
    %c147_151 = arith.constant 147 : index
    %206 = vector.load %arg6[%c0_150, %c147_151] : memref<32x640xbf16, #tpu.memory_space<vmem>>, vector<32x384xbf16>
    %c256_152 = arith.constant 256 : index
    %c0_153 = arith.constant 0 : index
    %207 = vector.load %arg7[%c256_152, %c0_153] : memref<288x384xbf16, #tpu.memory_space<vmem>>, vector<32x384xbf16>
    tpu.vector_store %arg7[%c256_152, %c0_153], %206 {strides = array<i32>} : memref<288x384xbf16, #tpu.memory_space<vmem>>, vector<32x384xbf16>,
    %c2_154 = arith.constant 2 : index
    %c0_155 = arith.constant 0 : index
    %c0_156 = arith.constant 0 : index
    %208 = vector.load %arg4[%c2_154, %c0_155, %c0_156] : memref<3x32x288xbf16, #tpu.memory_space<vmem>>, vector<1x32x288xbf16>
    %209 = vector.shape_cast %208 : vector<1x32x288xbf16> to vector<32x288xbf16>
    %c0_157 = arith.constant 0 : index
    %c0_158 = arith.constant 0 : index
    %210 = vector.load %arg7[%c0_157, %c0_158] : memref<288x384xbf16, #tpu.memory_space<vmem>>, vector<288x384xbf16>
    %cst_159 = arith.constant dense<0.000000e+00> : vector<32x384xf32>
    %211 = tpu.matmul %209, %210, %cst_159 {dimension_numbers = #tpu.dot_dimension_numbers<[1], [0], [0], [1], [0, 0, 1, 1], [], []>} : vector<32x288xbf16>, vector<288x384xbf16>, vector<32x384xf32> -> vector<32x384xf32>
    %212 = vector.broadcast %185 : vector<32x1xf32> to vector<32x384xf32>
    %213 = arith.addf %211, %212 : vector<32x384xf32>
    %cst_160 = arith.constant 1.000000e+00 : f32
    %214 = vector.broadcast %cst_160 : f32 to vector<32x1xf32>
    %215 = arith.addf %214, %29 : vector<32x1xf32>
    %216 = vector.broadcast %215 : vector<32x1xf32> to vector<32x384xf32>
    %217 = arith.mulf %213, %216 : vector<32x384xf32>
    %218 = vector.broadcast %30 : vector<32x1xf32> to vector<32x384xf32>
    %219 = arith.addf %217, %218 : vector<32x384xf32>
    %220 = vector.broadcast %24 : vector<1x384xf32> to vector<32x384xf32>
    %221 = arith.mulf %219, %220 : vector<32x384xf32>
    %222 = arith.addf %26, %221 : vector<32x384xf32>
    %c0_161 = arith.constant 0 : index
    %c0_162 = arith.constant 0 : index
    %c0_163 = arith.constant 0 : index
    %223 = vector.load %arg5[%c0_161, %c0_162, %c0_163] : memref<1x32x384xf32, #tpu.memory_space<vmem>>, vector<1x32x384xf32>
    %224 = vector.shape_cast %223 : vector<1x32x384xf32> to vector<32x384xf32>
    %225 = vector.shape_cast %222 : vector<32x384xf32> to vector<1x32x384xf32>
    tpu.vector_store %arg5[%c0_161, %c0_162, %c0_163], %225 {strides = array<i32>} : memref<1x32x384xf32, #tpu.memory_space<vmem>>, vector<1x32x384xf32>,
    return
  }
  func.func @transform_0(%arg0: i32) -> (i32, i32, i32) {
    %c0_i32 = arith.constant 0 : i32
    %c0_i32_0 = arith.constant 0 : i32
    %c0_i32_1 = arith.constant 0 : i32
    return %arg0, %c0_i32, %c0_i32_0 : i32, i32, i32
  }
  func.func @transform_1(%arg0: i32) -> (i32, i32, i32) {
    %c0_i32 = arith.constant 0 : i32
    %c0_i32_0 = arith.constant 0 : i32
    %c0_i32_1 = arith.constant 0 : i32
    return %arg0, %c0_i32, %c0_i32_0 : i32, i32, i32
  }
  func.func @transform_2(%arg0: i32) -> (i32, i32) {
    %c0_i32 = arith.constant 0 : i32
    %c0_i32_0 = arith.constant 0 : i32
    %c0_i32_1 = arith.constant 0 : i32
    return %c0_i32, %c0_i32_0 : i32, i32
  }
  func.func @transform_3(%arg0: i32) -> (i32, i32, i32) {
    %c0_i32 = arith.constant 0 : i32
    %c0_i32_0 = arith.constant 0 : i32
    %c0_i32_1 = arith.constant 0 : i32
    %c0_i32_2 = arith.constant 0 : i32
    return %c0_i32, %c0_i32_0, %c0_i32_1 : i32, i32, i32
  }
  func.func @transform_4(%arg0: i32) -> (i32, i32, i32) {
    %c0_i32 = arith.constant 0 : i32
    %c0_i32_0 = arith.constant 0 : i32
    %c0_i32_1 = arith.constant 0 : i32
    return %arg0, %c0_i32, %c0_i32_0 : i32, i32, i32
  }
}

</mosaic_0001>

<llo_original>
// kernel: tpu_custom_call.1
$region0: #{tpu_custom_call.1}
  #allocation0 [shape = 'u32[]', space=smem, size = 0x4, offset = 0x4, fixed_abs, tag = 'smem constant byte address 0x4 - core index']
  #allocation1 [shape = 'u32[144,128]{1,0:T(1,128)}', space=vmem, size = 0x12000, scoped, tag = 'internal scratch']
  #allocation2 [shape = 'bf16[32,640]{1,0:T(8,128)(2,1)}', space=vmem, size = 0xa000, scoped, tag = 'scratch operand']
  #allocation3 [shape = 'bf16[288,384]{1,0:T(8,128)(2,1)}', space=vmem, size = 0x36000, scoped, tag = 'scratch operand']
  %s0 = inlined_call_operand.hbm [shape: f32[2,32,384], index: 0, kind: input, shape index: {}]
  %s1 = inlined_call_operand.vmem [shape: f32[2,32,2], index: 1, kind: input, shape index: {}]
  %s2 = inlined_call_operand.vmem [shape: f32[32,9], index: 2, kind: input, shape index: {}]
  %s3 = inlined_call_operand.hbm [shape: bf16[3,32,288], index: 3, kind: input, shape index: {}]
  %s4 = inlined_call_operand.hbm [shape: f32[2,32,384], index: 4, kind: output, shape index: {}]
  %s5 = sld [smem:[#allocation0]]
  $region57: #{tpu_custom_call.1} parent=0
    _
  %s7 = ssub.s32 1, %s5
  %s8 = scalar_select 0, %s7, %s5
  $region1: #{tpu_custom_call.1} parent=0
    #allocation4 [shape = 'u8[98304]{0}', space=vmem, size = 0x18000, scoped, tag = 'input window, operand 0']
    #allocation5 [shape = 's32[2]{0}', space=sflag, size = 0x8, scoped, tag = 'scoped memory for tpu_custom_call.1']
    #allocation6 [shape = 's32[2]{0}', space=sflag, size = 0x8, scoped, tag = 'scoped memory for tpu_custom_call.1']
    #allocation7 [shape = 'u8[73728]{0}', space=vmem, size = 0x12000, scoped, tag = 'input window, operand 3, single buffered']
    #allocation8 [shape = 's32[1]{0}', space=sflag, size = 0x4, scoped, tag = 'scoped memory for tpu_custom_call.1']
    #allocation9 [shape = 'u8[98304]{0}', space=vmem, size = 0x18000, scoped, tag = 'output window, operand 0']
    %9 = vsyncpa [#allocation5], 0
    %s10 = scalar_lea.sflag [#allocation5], 1
    %11 = vsyncpa %s10, 0
    %12 = vsyncpa [#allocation8], 0
    %13 = vsyncpa [#allocation6], 0
    %s14 = scalar_lea.sflag [#allocation6], 1
    %15 = vsyncpa %s14, 0
    loop: start=0, step=1, limit=4
    $region2: #{tpu_custom_call.1} parent=1 // loop_pre_header
      _
    $region3: #{tpu_custom_call.1} parent=1 // loop_header
      %s17 = sphi 0, %s21
      %p18 = scmp.ge.s32.totalorder %s17, 4
      %s27 = sphi 0, %s29
      %s30 = sphi 0, %s27
      %s31 = sphi 0, %s30
      %s47 = sphi 0, %s31
      %s53 = sphi 0, %s55
      %s56 = sphi 0, %s53
      %s57 = sphi 0, %s56
      %s73 = sphi 0, %s57
      %s77 = sphi 0, %s77
      %s79 = sphi 0, %s77
      %s80 = sphi 0, %s79
      %s94 = sphi 0, %s80
      %s98 = sphi 0, %s98
      %s100 = sphi 0, %s98
      %s101 = sphi 0, %s100
      %s115 = sphi 0, %s101
      %s121 = sphi 0, %s123
      %s124 = sphi 0, %s121
      %s125 = sphi 0, %s124
      %s141 = sphi 0, %s125
    $region4: #{tpu_custom_call.1} parent=1 // loop_header_branch
      %20 = sbr.rel (%p18) target = $region8
    $region5: #{tpu_custom_call.1} parent=1 // loop_body
      %s22 = ssub.s32 %s17, 1
      %s23 = ssub.s32 %s17, 2
      %s24 = sadd.s32 %s17, 1
      %s25 = ssub.s32 %s17, %s24
      %p26 = scmp.eq.s32.totalorder %s25, 0
      %s28 = sadd.s32 %s27, 1
      %s29 = scalar_select %p26, %s27, %s28
      %p32 = pneg %p26
      %p33 = scmp.eq.s32.totalorder %s17, 1
      %p34 = por %p32, %p33
      %p35 = scmp.ne.s32.totalorder %s27, %s30
      %p36 = scmp.eq.s32.totalorder %s17, 0
      %p37 = por %p35, %p36
      %p38 = scmp.ne.s32.totalorder %s27, %s30
      %p39 = scmp.eq.s32.totalorder %s22, 1
      %p40 = por %p38, %p39
      %p41 = scmp.ne.s32.totalorder %s30, %s31
      %p42 = scmp.eq.s32.totalorder %s22, 0
      %p43 = por %p41, %p42
      %p44 = scmp.ne.s32.totalorder %s30, %s31
      %p45 = scmp.eq.s32.totalorder %s23, 1
      %p46 = por %p44, %p45
      %p48 = scmp.ne.s32.totalorder %s31, %s47
      %p49 = scmp.eq.s32.totalorder %s23, 0
      %p50 = por %p48, %p49
      %s51 = ssub.s32 %s17, %s24
      %p52 = scmp.eq.s32.totalorder %s51, 0
      %s54 = sadd.s32 %s53, 1
      %s55 = scalar_select %p52, %s53, %s54
      %p58 = pneg %p52
      %p59 = scmp.eq.s32.totalorder %s17, 1
      %p60 = por %p58, %p59
      %p61 = scmp.ne.s32.totalorder %s53, %s56
      %p62 = scmp.eq.s32.totalorder %s17, 0
      %p63 = por %p61, %p62
      %p64 = scmp.ne.s32.totalorder %s53, %s56
      %p65 = scmp.eq.s32.totalorder %s22, 1
      %p66 = por %p64, %p65
      %p67 = scmp.ne.s32.totalorder %s56, %s57
      %p68 = scmp.eq.s32.totalorder %s22, 0
      %p69 = por %p67, %p68
      %p70 = scmp.ne.s32.totalorder %s56, %s57
      %p71 = scmp.eq.s32.totalorder %s23, 1
      %p72 = por %p70, %p71
      %p74 = scmp.ne.s32.totalorder %s57, %s73
      %p75 = scmp.eq.s32.totalorder %s23, 0
      %p76 = por %p74, %p75
      %s78 = sadd.s32 %s77, 1
      %p81 = scmp.eq.s32.totalorder %s17, 1
      %p82 = scmp.ne.s32.totalorder %s77, %s79
      %p83 = scmp.eq.s32.totalorder %s17, 0
      %p84 = por %p82, %p83
      %p85 = scmp.ne.s32.totalorder %s77, %s79
      %p86 = scmp.eq.s32.totalorder %s22, 1
      %p87 = por %p85, %p86
      %p88 = scmp.ne.s32.totalorder %s79, %s80
      %p89 = scmp.eq.s32.totalorder %s22, 0
      %p90 = por %p88, %p89
      %p91 = scmp.ne.s32.totalorder %s79, %s80
      %p92 = scmp.eq.s32.totalorder %s23, 1
      %p93 = por %p91, %p92
      %p95 = scmp.ne.s32.totalorder %s80, %s94
      %p96 = scmp.eq.s32.totalorder %s23, 0
      %p97 = por %p95, %p96
      %s99 = sadd.s32 %s98, 1
      %p102 = scmp.eq.s32.totalorder %s17, 1
      %p103 = scmp.ne.s32.totalorder %s98, %s100
      %p104 = scmp.eq.s32.totalorder %s17, 0
      %p105 = por %p103, %p104
      %p106 = scmp.ne.s32.totalorder %s98, %s100
      %p107 = scmp.eq.s32.totalorder %s22, 1
      %p108 = por %p106, %p107
      %p109 = scmp.ne.s32.totalorder %s100, %s101
      %p110 = scmp.eq.s32.totalorder %s22, 0
      %p111 = por %p109, %p110
      %p112 = scmp.ne.s32.totalorder %s100, %s101
      %p113 = scmp.eq.s32.totalorder %s23, 1
      %p114 = por %p112, %p113
      %p116 = scmp.ne.s32.totalorder %s101, %s115
      %p117 = scmp.eq.s32.totalorder %s23, 0
      %p118 = por %p116, %p117
      %s119 = ssub.s32 %s17, %s24
      %p120 = scmp.eq.s32.totalorder %s119, 0
      %s122 = sadd.s32 %s121, 1
      %s123 = scalar_select %p120, %s121, %s122
      %p126 = pneg %p120
      %p127 = scmp.eq.s32.totalorder %s17, 1
      %p128 = por %p126, %p127
      %p129 = scmp.ne.s32.totalorder %s121, %s124
      %p130 = scmp.eq.s32.totalorder %s17, 0
      %p131 = por %p129, %p130
      %p132 = scmp.ne.s32.totalorder %s121, %s124
      %p133 = scmp.eq.s32.totalorder %s22, 1
      %p134 = por %p132, %p133
      %p135 = scmp.ne.s32.totalorder %s124, %s125
      %p136 = scmp.eq.s32.totalorder %s22, 0
      %p137 = por %p135, %p136
      %p138 = scmp.ne.s32.totalorder %s124, %s125
      %p139 = scmp.eq.s32.totalorder %s23, 1
      %p140 = por %p138, %p139
      %p142 = scmp.ne.s32.totalorder %s125, %s141
      %p143 = scmp.eq.s32.totalorder %s23, 0
      %p144 = por %p142, %p143
      %p145 = scmp.le.s32.totalorder 1, %s17
      %p146 = scmp.lt.s32.totalorder %s17, 3
      %p147 = pnand %p145, %p146
      %p148 = pneg %p147
      // Predicated region
      $region9: #{tpu_custom_call.1} parent=5 // pred_check
        _
      $region10: #{tpu_custom_call.1} parent=5 // pred_check_branch
        %150 = sbr.rel (%p147) target = $region12
      $region11: #{tpu_custom_call.1} parent=5 // pred_region
        %s151 = ssub.s32 %s17, 1
        // Predicated region
        $region13: #{tpu_custom_call.1} parent=11 // pred_check
          %p152 = pneg %p90
        $region14: #{tpu_custom_call.1} parent=11 // pred_check_branch
          %154 = sbr.rel (%p152) target = $region16
        $region15: #{tpu_custom_call.1} parent=11 // pred_region
          _
        $region16: #{tpu_custom_call.1} parent=11 // pred_fallthru
          _
        // Predicated region
        $region17: #{tpu_custom_call.1} parent=11 // pred_check
          %p155 = pneg %p111
        $region18: #{tpu_custom_call.1} parent=11 // pred_check_branch
          %157 = sbr.rel (%p155) target = $region20
        $region19: #{tpu_custom_call.1} parent=11 // pred_region
          %s159 = ssub.s32 2304, 2304
          %160 = vsyncadd [#allocation8], %s159
          %s161 = sshll.u32 [#allocation7], 4
          %s162 = int_to_ptr.vmem [resolvable:$true] %s161
          %167 = dma.hbm_to_vmem [thread:$0]  %s3, 2304, %s162, [#allocation8], 192, 192, 12
        $region20: #{tpu_custom_call.1} parent=11 // pred_fallthru
          _
      $region12: #{tpu_custom_call.1} parent=5 // pred_fallthru
        _
      %p168 = scmp.lt.s32.totalorder %s17, 2
      // Predicated region
      $region21: #{tpu_custom_call.1} parent=5 // pred_check
        %p169 = pneg %p168
      $region22: #{tpu_custom_call.1} parent=5 // pred_check_branch
        %171 = sbr.rel (%p169) target = $region24
      $region23: #{tpu_custom_call.1} parent=5 // pred_region
        // Predicated region
        $region25: #{tpu_custom_call.1} parent=23 // pred_check
          %p172 = pneg %p37
        $region26: #{tpu_custom_call.1} parent=23 // pred_check_branch
          %174 = sbr.rel (%p172) target = $region28
        $region27: #{tpu_custom_call.1} parent=23 // pred_region
          %s175 = sand.u32 %s27, 1
          %s176 = scalar_lea.sflag [#allocation5], %s175
          %s177 = sand.u32 %s27, 1
          %s178 = smul.addr %s177, 96
          %s179 = scalar_lea.vmem [#allocation4], %s178
          %s181 = ssub.s32 1536, 1536
          %182 = vsyncadd %s176, %s181
          %s183 = smul.addr %s17, 12
          %s184 = smul.addr %s183, 128
          %s185 = scalar_lea.hbm %s0, %s184
          %s186 = sshll.u32 %s179, 4
          %s187 = int_to_ptr.vmem [resolvable:$true] %s186
          %192 = dma.hbm_to_vmem [thread:$0]  %s185, 1536, %s187, %s176, 384, 384, 24
        $region28: #{tpu_custom_call.1} parent=23 // pred_fallthru
          _
        // Predicated region
        $region29: #{tpu_custom_call.1} parent=23 // pred_check
          %p193 = pneg %p63
        $region30: #{tpu_custom_call.1} parent=23 // pred_check_branch
          %195 = sbr.rel (%p193) target = $region32
        $region31: #{tpu_custom_call.1} parent=23 // pred_region
          %p196 = scmp.lt.s32.totalorder %s17, 1
          %s197 = scalar_select %p196, %s17, 1
          %s198 = smul.addr %s197, 4
          %s199 = smul.addr %s198, 8
          %s200 = scalar_lea.vmem %s1, %s199
        $region32: #{tpu_custom_call.1} parent=23 // pred_fallthru
          _
      $region24: #{tpu_custom_call.1} parent=5 // pred_fallthru
        _
      %p201 = scmp.le.s32.totalorder 1, %s17
      %p202 = scmp.lt.s32.totalorder %s17, 3
      %p203 = pnand %p201, %p202
      %p204 = pneg %p203
      // Predicated region
      $region33: #{tpu_custom_call.1} parent=5 // pred_check
        _
      $region34: #{tpu_custom_call.1} parent=5 // pred_check_branch
        %206 = sbr.rel (%p203) target = $region36
      $region35: #{tpu_custom_call.1} parent=5 // pred_region
        %s207 = ssub.s32 %s17, 1
        %s208 = sand.u32 %s30, 1
        %s209 = scalar_lea.sflag [#allocation5], %s208
        %s210 = sand.u32 %s30, 1
        %s211 = smul.addr %s210, 96
        %s212 = scalar_lea.vmem [#allocation4], %s211
        // Predicated region
        $region37: #{tpu_custom_call.1} parent=35 // pred_check
          %p213 = pneg %p43
        $region38: #{tpu_custom_call.1} parent=35 // pred_check_branch
          %215 = sbr.rel (%p213) target = $region40
        $region39: #{tpu_custom_call.1} parent=35 // pred_region
          %216 = dma.done %s209, 1536
        $region40: #{tpu_custom_call.1} parent=35 // pred_fallthru
          _
        // Predicated region
        $region41: #{tpu_custom_call.1} parent=35 // pred_check
          %p217 = pneg %p111
        $region42: #{tpu_custom_call.1} parent=35 // pred_check_branch
          %219 = sbr.rel (%p217) target = $region44
        $region43: #{tpu_custom_call.1} parent=35 // pred_region
          %220 = dma.done [#allocation8], 2304
        $region44: #{tpu_custom_call.1} parent=35 // pred_fallthru
          _
        %s221 = sand.u32 %s30, 1
        %s222 = scalar_lea.sflag [#allocation5], %s221
        %s223 = sand.u32 %s30, 1
        %s224 = smul.addr %s223, 96
        %s225 = scalar_lea.vmem [#allocation4], %s224
        %p226 = pneg %p43
        %p227 = pneg %p40
        %p228 = scmp.lt.s32.totalorder %s22, 1
        %s229 = scalar_select %p228, %s22, 1
        %s230 = smul.addr %s229, 4
        %s231 = smul.addr %s230, 8
        %s232 = scalar_lea.vmem %s1, %s231
        %p233 = pneg %p69
        %p234 = pneg %p66
        %p235 = pneg %p90
        %p236 = pneg %p87
        %p237 = pneg %p111
        %p238 = pneg %p108
        %p239 = pneg %p137
        %p240 = pneg %p134
        %s241 = sand.u32 %s124, 1
        %s242 = scalar_lea.sflag [#allocation6], %s241
        %s243 = sand.u32 %s124, 1
        %s244 = smul.addr %s243, 96
        %s245 = scalar_lea.vmem [#allocation9], %s244
        %p246 = scmp.lt.s32.totalorder %s22, 1
        %s247 = scalar_select %p246, %s22, 1
        %s248 = smul.addr %s247, 4
        %s249 = smul.addr %s248, 8
        %s250 = scalar_lea.vmem %s1, %s249
        %v252 = vlaneseq
        %v253 = vand.u32 %v252, 127
        %v254 = vadd.s32 %v253, 128
        %v255 = vadd.s32 %v253, 256
        %vm256 = vcmp.lt.s32.totalorder %v253, 0
        %v257 = vsub.s32 0, %v253
        %v258 = vsel %vm256, %v257, %v253
        %v259 = vmul.u32.u64.compose %v258, 3817748708
        %v260 = vextract.low.u32 %v259
        %v261 = vextract.high.u32 %v259
        %v262 = vshrl.u32 %v261, 4
        %v263 = vmul.u32 %v262, 18
        %v264 = vsub.s32 %v258, %v263
        %v265 = vsub.s32 0, %v264
        %v266 = vsel %vm256, %v265, %v264
        %vm267 = vcmp.lt.s32.totalorder %v254, 0
        %v268 = vsub.s32 0, %v254
        %v269 = vsel %vm267, %v268, %v254
        %v270 = vmul.u32.u64.compose %v269, 3817748708
        %v271 = vextract.low.u32 %v270
        %v272 = vextract.high.u32 %v270
        %v273 = vshrl.u32 %v272, 4
        %v274 = vmul.u32 %v273, 18
        %v275 = vsub.s32 %v269, %v274
        %v276 = vsub.s32 0, %v275
        %v277 = vsel %vm267, %v276, %v275
        %vm278 = vcmp.lt.s32.totalorder %v255, 0
        %v279 = vsub.s32 0, %v255
        %v280 = vsel %vm278, %v279, %v255
        %v281 = vmul.u32.u64.compose %v280, 3817748708
        %v282 = vextract.low.u32 %v281
        %v283 = vextract.high.u32 %v281
        %v284 = vshrl.u32 %v283, 4
        %v285 = vmul.u32 %v284, 18
        %v286 = vsub.s32 %v280, %v285
        %v287 = vsub.s32 0, %v286
        %v288 = vsel %vm278, %v287, %v286
        %vm289 = vcmp.ne.s32.totalorder %v266, 0
        %vm290 = vcmp.ne.s32.totalorder %v277, 0
        %vm291 = vcmp.ne.s32.totalorder %v288, 0
        %vm292 = vcmp.lt.s32.totalorder %v266, 0
        %vm293 = vcmp.lt.s32.totalorder %v277, 0
        %vm294 = vcmp.lt.s32.totalorder %v288, 0
        %vm295 = vmand %vm292, %vm289
        %vm296 = vmand %vm293, %vm290
        %vm297 = vmand %vm294, %vm291
        %v298 = vadd.s32 %v266, 18
        %v299 = vadd.s32 %v277, 18
        %v300 = vadd.s32 %v288, 18
        %v301 = vsel %vm295, %v298, %v266
        %v302 = vsel %vm296, %v299, %v277
        %v303 = vsel %vm297, %v300, %v288
        %vm304 = vcmp.lt.s32.totalorder %v301, 16
        %vm305 = vcmp.lt.s32.totalorder %v302, 16
        %vm306 = vcmp.lt.s32.totalorder %v303, 16
        %vm307 = vcmp.lt.s32.totalorder %v253, 286
        %vm308 = vcmp.lt.s32.totalorder %v254, 286
        %vm309 = vcmp.lt.s32.totalorder %v255, 286
        %vm310 = vmand %vm304, %vm307
        %vm311 = vmand %vm305, %vm308
        %vm312 = vmand %vm306, %vm309
        %v313 = vsel %vm310, 1.0, 0.0
        %v314 = vsel %vm311, 1.0, 0.0
        %v315 = vsel %vm312, 1.0, 0.0
        %v316 = vld [vmem:[%s212] sm:$0xff]
        %v317 = vld [vmem:[%s212 + $0x8] sm:$0xff]
        %v318 = vld [vmem:[%s212 + $0x10] sm:$0xff]
        %v319 = vld [vmem:[%s212 + $0x18] sm:$0xff]
        %v320 = vld [vmem:[%s212 + $0x20] sm:$0xff]
        %v321 = vld [vmem:[%s212 + $0x28] sm:$0xff]
        %v322 = vld [vmem:[%s212 + $0x30] sm:$0xff]
        %v323 = vld [vmem:[%s212 + $0x38] sm:$0xff]
        %v324 = vld [vmem:[%s212 + $0x40] sm:$0xff]
        %v325 = vld [vmem:[%s212 + $0x48] sm:$0xff]
        %v326 = vld [vmem:[%s212 + $0x50] sm:$0xff]
        %v327 = vld [vmem:[%s212 + $0x58] sm:$0xff]
        %v328 = vld [vmem:[%s250] sm:$0xff]
        %v329 = vld [vmem:[%s250 + $0x8] sm:$0xff]
        %v330 = vld [vmem:[%s250 + $0x10] sm:$0xff]
        %v331 = vld [vmem:[%s250 + $0x18] sm:$0xff]
        %332 = vst [vmem:[#allocation2] sm:$0xf] 0
        %333 = vst [vmem:[#allocation2 + $0x14] sm:$0xf] 0
        %334 = vst [vmem:[#allocation2 + $0x28] sm:$0xf] 0
        %335 = vst [vmem:[#allocation2 + $0x3c] sm:$0xf] 0
        %336 = vst [vmem:[#allocation2 + $0x10] sm:$0xf] 0
        %337 = vst [vmem:[#allocation2 + $0x24] sm:$0xf] 0
        %338 = vst [vmem:[#allocation2 + $0x38] sm:$0xf] 0
        %339 = vst [vmem:[#allocation2 + $0x4c] sm:$0xf] 0
        %v340 = vld [vmem:[%s2] sm:$0xff]
        %v341 = vld [vmem:[%s2 + $0x8] sm:$0xff]
        %v342 = vld [vmem:[%s2 + $0x10] sm:$0xff]
        %v343 = vld [vmem:[%s2 + $0x18] sm:$0xff]
        %v344 = vmul.f32 %v316, %v313
        %v345 = vmul.f32 %v317, %v314
        %v346 = vmul.f32 %v318, %v315
        %v347 = vmul.f32 %v319, %v313
        %v348 = vmul.f32 %v320, %v314
        %v349 = vmul.f32 %v321, %v315
        %v350 = vmul.f32 %v322, %v313
        %v351 = vmul.f32 %v323, %v314
        %v352 = vmul.f32 %v324, %v315
        %v353 = vmul.f32 %v325, %v313
        %v354 = vmul.f32 %v326, %v314
        %v355 = vmul.f32 %v327, %v315
        %v356 = vpack.c.bf16 %v347, %v344
        %v357 = vpack.c.bf16 %v348, %v345
        %v358 = vpack.c.bf16 %v349, %v346
        %v359 = vpack.c.bf16 %v353, %v350
        %v360 = vpack.c.bf16 %v354, %v351
        %v361 = vpack.c.bf16 %v355, %v352
        %v368 = vunpack.c.l.b16 %v356
        %v369 = vunpack.c.l.b16 %v357
        %v370 = vunpack.c.l.b16 %v358
        %v371 = vunpack.c.h.b16 %v356
        %v372 = vunpack.c.h.b16 %v357
        %v373 = vunpack.c.h.b16 %v358
        %v374 = vunpack.c.l.b16 %v359
        %v375 = vunpack.c.l.b16 %v360
        %v376 = vunpack.c.l.b16 %v361
        %v377 = vunpack.c.h.b16 %v359
        %v378 = vunpack.c.h.b16 %v360
        %v379 = vunpack.c.h.b16 %v361
        %v380 = vpack.c.b16 %v369, %v368
        %v381 = vpack.c.b16 %v370, %v370
        %v382 = vpack.c.b16 %v372, %v371
        %v383 = vpack.c.b16 %v373, %v373
        %v384 = vpack.c.b16 %v375, %v374
        %v385 = vpack.c.b16 %v376, %v376
        %v386 = vpack.c.b16 %v378, %v377
        %v387 = vpack.c.b16 %v379, %v379
        %396 = vst [vmem:[#allocation2 + $0x4] sm:$0xff] %v380
        %397 = vst [vmem:[#allocation2 + $0xc] sm:$0xf] %v381
        %398 = vst [vmem:[#allocation2 + $0x18] sm:$0xff] %v382
        %399 = vst [vmem:[#allocation2 + $0x20] sm:$0xf] %v383
        %400 = vst [vmem:[#allocation2 + $0x2c] sm:$0xff] %v384
        %401 = vst [vmem:[#allocation2 + $0x34] sm:$0xf] %v385
        %402 = vst [vmem:[#allocation2 + $0x40] sm:$0xff] %v386
        %403 = vst [vmem:[#allocation2 + $0x48] sm:$0xf] %v387
        %v404 = vld [vmem:[#allocation2] sm:$0xff]
        %v405 = vld [vmem:[#allocation2 + $0x8] sm:$0xff]
        %v406 = vld [vmem:[#allocation2 + $0x14] sm:$0xff]
        %v407 = vld [vmem:[#allocation2 + $0x1c] sm:$0xff]
        %v408 = vld [vmem:[#allocation2 + $0x28] sm:$0xff]
        %v409 = vld [vmem:[#allocation2 + $0x30] sm:$0xff]
        %v410 = vld [vmem:[#allocation2 + $0x3c] sm:$0xff]
        %v411 = vld [vmem:[#allocation2 + $0x44] sm:$0xff]
        %420 = vrot.lane.b32.xlu0 %v404, 19
        %v421 = vpop.permute.xlu0 %420
        %422 = vrot.lane.b32.xlu0 %v405, 19
        %v423 = vpop.permute.xlu0 %422
        %424 = vrot.lane.b32.xlu0 %v406, 19
        %v425 = vpop.permute.xlu0 %424
        %426 = vrot.lane.b32.xlu0 %v407, 19
        %v427 = vpop.permute.xlu0 %426
        %428 = vrot.lane.b32.xlu0 %v408, 19
        %v429 = vpop.permute.xlu0 %428
        %430 = vrot.lane.b32.xlu0 %v409, 19
        %v431 = vpop.permute.xlu0 %430
        %432 = vrot.lane.b32.xlu0 %v410, 19
        %v433 = vpop.permute.xlu0 %432
        %434 = vrot.lane.b32.xlu0 %v411, 19
        %v435 = vpop.permute.xlu0 %434
        %v436 = vrot.slane %v421, 4
        %v437 = vrot.slane %v423, 4
        %v438 = vrot.slane %v425, 4
        %v439 = vrot.slane %v427, 4
        %v440 = vrot.slane %v429, 4
        %v441 = vrot.slane %v431, 4
        %v442 = vrot.slane %v433, 4
        %v443 = vrot.slane %v435, 4
        %vm444 = vcmask 1043456
        %v445 = vsel %vm444, %v436, %v437
        %vm446 = vcmask 154624
        %v447 = vsel %vm446, %v421, %v445
        %v448 = vsel %vm446, %v423, %v437
        %v449 = vsel %vm444, %v438, %v439
        %v450 = vsel %vm446, %v425, %v449
        %v451 = vsel %vm446, %v427, %v439
        %v452 = vsel %vm444, %v440, %v441
        %v453 = vsel %vm446, %v429, %v452
        %v454 = vsel %vm446, %v431, %v441
        %v455 = vsel %vm444, %v442, %v443
        %v456 = vsel %vm446, %v433, %v455
        %v457 = vsel %vm446, %v435, %v443
        %466 = vst [vmem:[#allocation3] sm:$0xff] %v447
        %467 = vst [vmem:[#allocation3 + $0x8] sm:$0xf] %v448
        %468 = vst [vmem:[#allocation3 + $0xc] sm:$0xff] %v450
        %469 = vst [vmem:[#allocation3 + $0x14] sm:$0xf] %v451
        %470 = vst [vmem:[#allocation3 + $0x18] sm:$0xff] %v453
        %471 = vst [vmem:[#allocation3 + $0x20] sm:$0xf] %v454
        %472 = vst [vmem:[#allocation3 + $0x24] sm:$0xff] %v456
        %473 = vst [vmem:[#allocation3 + $0x2c] sm:$0xf] %v457
        %v474 = vld [vmem:[#allocation2] sm:$0xff]
        %v475 = vld [vmem:[#allocation2 + $0x8] sm:$0xff]
        %v476 = vld [vmem:[#allocation2 + $0x14] sm:$0xff]
        %v477 = vld [vmem:[#allocation2 + $0x1c] sm:$0xff]
        %v478 = vld [vmem:[#allocation2 + $0x28] sm:$0xff]
        %v479 = vld [vmem:[#allocation2 + $0x30] sm:$0xff]
        %v480 = vld [vmem:[#allocation2 + $0x3c] sm:$0xff]
        %v481 = vld [vmem:[#allocation2 + $0x44] sm:$0xff]
        %490 = vrot.lane.b32.xlu0 %v474, 18
        %v491 = vpop.permute.xlu0 %490
        %492 = vrot.lane.b32.xlu0 %v475, 18
        %v493 = vpop.permute.xlu0 %492
        %494 = vrot.lane.b32.xlu0 %v476, 18
        %v495 = vpop.permute.xlu0 %494
        %496 = vrot.lane.b32.xlu0 %v477, 18
        %v497 = vpop.permute.xlu0 %496
        %498 = vrot.lane.b32.xlu0 %v478, 18
        %v499 = vpop.permute.xlu0 %498
        %500 = vrot.lane.b32.xlu0 %v479, 18
        %v501 = vpop.permute.xlu0 %500
        %502 = vrot.lane.b32.xlu0 %v480, 18
        %v503 = vpop.permute.xlu0 %502
        %504 = vrot.lane.b32.xlu0 %v481, 18
        %v505 = vpop.permute.xlu0 %504
        %v506 = vrot.slane %v491, 4
        %v507 = vrot.slane %v493, 4
        %v508 = vrot.slane %v495, 4
        %v509 = vrot.slane %v497, 4
        %v510 = vrot.slane %v499, 4
        %v511 = vrot.slane %v501, 4
        %v512 = vrot.slane %v503, 4
        %v513 = vrot.slane %v505, 4
        %v514 = vsel %vm444, %v506, %v507
        %vm515 = vcmask 146432
        %v516 = vsel %vm515, %v491, %v514
        %v517 = vsel %vm515, %v493, %v507
        %v518 = vsel %vm444, %v508, %v509
        %v519 = vsel %vm515, %v495, %v518
        %v520 = vsel %vm515, %v497, %v509
        %v521 = vsel %vm444, %v510, %v511
        %v522 = vsel %vm515, %v499, %v521
        %v523 = vsel %vm515, %v501, %v511
        %v524 = vsel %vm444, %v512, %v513
        %v525 = vsel %vm515, %v503, %v524
        %v526 = vsel %vm515, %v505, %v513
        %535 = vst [vmem:[#allocation3 + $0x30] sm:$0xff] %v516
        %536 = vst [vmem:[#allocation3 + $0x38] sm:$0xf] %v517
        %537 = vst [vmem:[#allocation3 + $0x3c] sm:$0xff] %v519
        %538 = vst [vmem:[#allocation3 + $0x44] sm:$0xf] %v520
        %539 = vst [vmem:[#allocation3 + $0x48] sm:$0xff] %v522
        %540 = vst [vmem:[#allocation3 + $0x50] sm:$0xf] %v523
        %541 = vst [vmem:[#allocation3 + $0x54] sm:$0xff] %v525
        %542 = vst [vmem:[#allocation3 + $0x5c] sm:$0xf] %v526
        %v543 = vld [vmem:[#allocation2] sm:$0xff]
        %v544 = vld [vmem:[#allocation2 + $0x8] sm:$0xff]
        %v545 = vld [vmem:[#allocation2 + $0x14] sm:$0xff]
        %v546 = vld [vmem:[#allocation2 + $0x1c] sm:$0xff]
        %v547 = vld [vmem:[#allocation2 + $0x28] sm:$0xff]
        %v548 = vld [vmem:[#allocation2 + $0x30] sm:$0xff]
        %v549 = vld [vmem:[#allocation2 + $0x3c] sm:$0xff]
        %v550 = vld [vmem:[#allocation2 + $0x44] sm:$0xff]
        %559 = vrot.lane.b32.xlu0 %v543, 17
        %v560 = vpop.permute.xlu0 %559
        %561 = vrot.lane.b32.xlu0 %v544, 17
        %v562 = vpop.permute.xlu0 %561
        %563 = vrot.lane.b32.xlu0 %v545, 17
        %v564 = vpop.permute.xlu0 %563
        %565 = vrot.lane.b32.xlu0 %v546, 17
        %v566 = vpop.permute.xlu0 %565
        %567 = vrot.lane.b32.xlu0 %v547, 17
        %v568 = vpop.permute.xlu0 %567
        %569 = vrot.lane.b32.xlu0 %v548, 17
        %v570 = vpop.permute.xlu0 %569
        %571 = vrot.lane.b32.xlu0 %v549, 17
        %v572 = vpop.permute.xlu0 %571
        %573 = vrot.lane.b32.xlu0 %v550, 17
        %v574 = vpop.permute.xlu0 %573
        %v575 = vrot.slane %v560, 4
        %v576 = vrot.slane %v562, 4
        %v577 = vrot.slane %v564, 4
        %v578 = vrot.slane %v566, 4
        %v579 = vrot.slane %v568, 4
        %v580 = vrot.slane %v570, 4
        %v581 = vrot.slane %v572, 4
        %v582 = vrot.slane %v574, 4
        %v583 = vsel %vm444, %v575, %v576
        %vm584 = vcmask 138240
        %v585 = vsel %vm584, %v560, %v583
        %v586 = vsel %vm584, %v562, %v576
        %v587 = vsel %vm444, %v577, %v578
        %v588 = vsel %vm584, %v564, %v587
        %v589 = vsel %vm584, %v566, %v578
        %v590 = vsel %vm444, %v579, %v580
        %v591 = vsel %vm584, %v568, %v590
        %v592 = vsel %vm584, %v570, %v580
        %v593 = vsel %vm444, %v581, %v582
        %v594 = vsel %vm584, %v572, %v593
        %v595 = vsel %vm584, %v574, %v582
        %604 = vst [vmem:[#allocation3 + $0x60] sm:$0xff] %v585
        %605 = vst [vmem:[#allocation3 + $0x68] sm:$0xf] %v586
        %606 = vst [vmem:[#allocation3 + $0x6c] sm:$0xff] %v588
        %607 = vst [vmem:[#allocation3 + $0x74] sm:$0xf] %v589
        %608 = vst [vmem:[#allocation3 + $0x78] sm:$0xff] %v591
        %609 = vst [vmem:[#allocation3 + $0x80] sm:$0xf] %v592
        %610 = vst [vmem:[#allocation3 + $0x84] sm:$0xff] %v594
        %611 = vst [vmem:[#allocation3 + $0x8c] sm:$0xf] %v595
        %v612 = vld [vmem:[#allocation2] sm:$0xff]
        %v613 = vld [vmem:[#allocation2 + $0x8] sm:$0xff]
        %v614 = vld [vmem:[#allocation2 + $0x14] sm:$0xff]
        %v615 = vld [vmem:[#allocation2 + $0x1c] sm:$0xff]
        %v616 = vld [vmem:[#allocation2 + $0x28] sm:$0xff]
        %v617 = vld [vmem:[#allocation2 + $0x30] sm:$0xff]
        %v618 = vld [vmem:[#allocation2 + $0x3c] sm:$0xff]
        %v619 = vld [vmem:[#allocation2 + $0x44] sm:$0xff]
        %628 = vrot.lane.b32.xlu0 %v612, 1
        %v629 = vpop.permute.xlu0 %628
        %630 = vrot.lane.b32.xlu0 %v613, 1
        %v631 = vpop.permute.xlu0 %630
        %632 = vrot.lane.b32.xlu0 %v614, 1
        %v633 = vpop.permute.xlu0 %632
        %634 = vrot.lane.b32.xlu0 %v615, 1
        %v635 = vpop.permute.xlu0 %634
        %636 = vrot.lane.b32.xlu0 %v616, 1
        %v637 = vpop.permute.xlu0 %636
        %638 = vrot.lane.b32.xlu0 %v617, 1
        %v639 = vpop.permute.xlu0 %638
        %640 = vrot.lane.b32.xlu0 %v618, 1
        %v641 = vpop.permute.xlu0 %640
        %642 = vrot.lane.b32.xlu0 %v619, 1
        %v643 = vpop.permute.xlu0 %642
        %v644 = vrot.slane %v629, 4
        %v645 = vrot.slane %v631, 4
        %v646 = vrot.slane %v633, 4
        %v647 = vrot.slane %v635, 4
        %v648 = vrot.slane %v637, 4
        %v649 = vrot.slane %v639, 4
        %v650 = vrot.slane %v641, 4
        %v651 = vrot.slane %v643, 4
        %v652 = vsel %vm444, %v644, %v645
        %vm653 = vcmask 7168
        %v654 = vsel %vm653, %v629, %v652
        %v655 = vsel %vm653, %v631, %v645
        %v656 = vsel %vm444, %v646, %v647
        %v657 = vsel %vm653, %v633, %v656
        %v658 = vsel %vm653, %v635, %v647
        %v659 = vsel %vm444, %v648, %v649
        %v660 = vsel %vm653, %v637, %v659
        %v661 = vsel %vm653, %v639, %v649
        %v662 = vsel %vm444, %v650, %v651
        %v663 = vsel %vm653, %v641, %v662
        %v664 = vsel %vm653, %v643, %v651
        %673 = vst [vmem:[#allocation3 + $0x90] sm:$0xff] %v654
        %674 = vst [vmem:[#allocation3 + $0x98] sm:$0xf] %v655
        %675 = vst [vmem:[#allocation3 + $0x9c] sm:$0xff] %v657
        %676 = vst [vmem:[#allocation3 + $0xa4] sm:$0xf] %v658
        %677 = vst [vmem:[#allocation3 + $0xa8] sm:$0xff] %v660
        %678 = vst [vmem:[#allocation3 + $0xb0] sm:$0xf] %v661
        %679 = vst [vmem:[#allocation3 + $0xb4] sm:$0xff] %v663
        %680 = vst [vmem:[#allocation3 + $0xbc] sm:$0xf] %v664
        %v681 = vld [vmem:[#allocation2 + $0x4] sm:$0xff]
        %v682 = vld [vmem:[#allocation2 + $0xc] sm:$0xf]
        %v683 = vld [vmem:[#allocation2 + $0x18] sm:$0xff]
        %v684 = vld [vmem:[#allocation2 + $0x20] sm:$0xf]
        %v685 = vld [vmem:[#allocation2 + $0x2c] sm:$0xff]
        %v686 = vld [vmem:[#allocation2 + $0x34] sm:$0xf]
        %v687 = vld [vmem:[#allocation2 + $0x40] sm:$0xff]
        %v688 = vld [vmem:[#allocation2 + $0x48] sm:$0xf]
        %689 = vst [vmem:[#allocation3 + $0xc0] sm:$0xff] %v681
        %690 = vst [vmem:[#allocation3 + $0xc8] sm:$0xf] %v682
        %691 = vst [vmem:[#allocation3 + $0xcc] sm:$0xff] %v683
        %692 = vst [vmem:[#allocation3 + $0xd4] sm:$0xf] %v684
        %693 = vst [vmem:[#allocation3 + $0xd8] sm:$0xff] %v685
        %694 = vst [vmem:[#allocation3 + $0xe0] sm:$0xf] %v686
        %695 = vst [vmem:[#allocation3 + $0xe4] sm:$0xff] %v687
        %696 = vst [vmem:[#allocation3 + $0xec] sm:$0xf] %v688
        %v697 = vld [vmem:[#allocation2 + $0x4] sm:$0xff]
        %v698 = vld [vmem:[#allocation2 + $0xc] sm:$0xff]
        %v699 = vld [vmem:[#allocation2 + $0x18] sm:$0xff]
        %v700 = vld [vmem:[#allocation2 + $0x20] sm:$0xff]
        %v701 = vld [vmem:[#allocation2 + $0x2c] sm:$0xff]
        %v702 = vld [vmem:[#allocation2 + $0x34] sm:$0xff]
        %v703 = vld [vmem:[#allocation2 + $0x40] sm:$0xff]
        %v704 = vld [vmem:[#allocation2 + $0x48] sm:$0xff]
        %713 = vrot.lane.b32.xlu0 %v697, 127
        %v714 = vpop.permute.xlu0 %713
        %715 = vrot.lane.b32.xlu0 %v698, 127
        %v716 = vpop.permute.xlu0 %715
        %717 = vrot.lane.b32.xlu0 %v699, 127
        %v718 = vpop.permute.xlu0 %717
        %719 = vrot.lane.b32.xlu0 %v700, 127
        %v720 = vpop.permute.xlu0 %719
        %721 = vrot.lane.b32.xlu0 %v701, 127
        %v722 = vpop.permute.xlu0 %721
        %723 = vrot.lane.b32.xlu0 %v702, 127
        %v724 = vpop.permute.xlu0 %723
        %725 = vrot.lane.b32.xlu0 %v703, 127
        %v726 = vpop.permute.xlu0 %725
        %727 = vrot.lane.b32.xlu0 %v704, 127
        %v728 = vpop.permute.xlu0 %727
        %v729 = vrot.slane %v714, 4
        %v730 = vrot.slane %v716, 4
        %v731 = vrot.slane %v718, 4
        %v732 = vrot.slane %v720, 4
        %v733 = vrot.slane %v722, 4
        %v734 = vrot.slane %v724, 4
        %v735 = vrot.slane %v726, 4
        %v736 = vrot.slane %v728, 4
        %v737 = vsel %vm444, %v729, %v730
        %vm738 = vcmask 1039360
        %v739 = vsel %vm738, %v714, %v737
        %v740 = vsel %vm738, %v716, %v730
        %v741 = vsel %vm444, %v731, %v732
        %v742 = vsel %vm738, %v718, %v741
        %v743 = vsel %vm738, %v720, %v732
        %v744 = vsel %vm444, %v733, %v734
        %v745 = vsel %vm738, %v722, %v744
        %v746 = vsel %vm738, %v724, %v734
        %v747 = vsel %vm444, %v735, %v736
        %v748 = vsel %vm738, %v726, %v747
        %v749 = vsel %vm738, %v728, %v736
        %758 = vst [vmem:[#allocation3 + $0xf0] sm:$0xff] %v739
        %759 = vst [vmem:[#allocation3 + $0xf8] sm:$0xf] %v740
        %760 = vst [vmem:[#allocation3 + $0xfc] sm:$0xff] %v742
        %761 = vst [vmem:[#allocation3 + $0x104] sm:$0xf] %v743
        %762 = vst [vmem:[#allocation3 + $0x108] sm:$0xff] %v745
        %763 = vst [vmem:[#allocation3 + $0x110] sm:$0xf] %v746
        %764 = vst [vmem:[#allocation3 + $0x114] sm:$0xff] %v748
        %765 = vst [vmem:[#allocation3 + $0x11c] sm:$0xf] %v749
        %v766 = vld [vmem:[#allocation2 + $0x4] sm:$0xff]
        %v767 = vld [vmem:[#allocation2 + $0xc] sm:$0xff]
        %v768 = vld [vmem:[#allocation2 + $0x18] sm:$0xff]
        %v769 = vld [vmem:[#allocation2 + $0x20] sm:$0xff]
        %v770 = vld [vmem:[#allocation2 + $0x2c] sm:$0xff]
        %v771 = vld [vmem:[#allocation2 + $0x34] sm:$0xff]
        %v772 = vld [vmem:[#allocation2 + $0x40] sm:$0xff]
        %v773 = vld [vmem:[#allocation2 + $0x48] sm:$0xff]
        %782 = vrot.lane.b32.xlu0 %v766, 111
        %v783 = vpop.permute.xlu0 %782
        %784 = vrot.lane.b32.xlu0 %v767, 111
        %v785 = vpop.permute.xlu0 %784
        %786 = vrot.lane.b32.xlu0 %v768, 111
        %v787 = vpop.permute.xlu0 %786
        %788 = vrot.lane.b32.xlu0 %v769, 111
        %v789 = vpop.permute.xlu0 %788
        %790 = vrot.lane.b32.xlu0 %v770, 111
        %v791 = vpop.permute.xlu0 %790
        %792 = vrot.lane.b32.xlu0 %v771, 111
        %v793 = vpop.permute.xlu0 %792
        %794 = vrot.lane.b32.xlu0 %v772, 111
        %v795 = vpop.permute.xlu0 %794
        %796 = vrot.lane.b32.xlu0 %v773, 111
        %v797 = vpop.permute.xlu0 %796
        %v798 = vrot.slane %v783, 4
        %v799 = vrot.slane %v785, 4
        %v800 = vrot.slane %v787, 4
        %v801 = vrot.slane %v789, 4
        %v802 = vrot.slane %v791, 4
        %v803 = vrot.slane %v793, 4
        %v804 = vrot.slane %v795, 4
        %v805 = vrot.slane %v797, 4
        %v806 = vsel %vm444, %v798, %v799
        %vm807 = vcmask 908288
        %v808 = vsel %vm807, %v783, %v806
        %v809 = vsel %vm807, %v785, %v799
        %v810 = vsel %vm444, %v800, %v801
        %v811 = vsel %vm807, %v787, %v810
        %v812 = vsel %vm807, %v789, %v801
        %v813 = vsel %vm444, %v802, %v803
        %v814 = vsel %vm807, %v791, %v813
        %v815 = vsel %vm807, %v793, %v803
        %v816 = vsel %vm444, %v804, %v805
        %v817 = vsel %vm807, %v795, %v816
        %v818 = vsel %vm807, %v797, %v805
        %827 = vst [vmem:[#allocation3 + $0x120] sm:$0xff] %v808
        %828 = vst [vmem:[#allocation3 + $0x128] sm:$0xf] %v809
        %829 = vst [vmem:[#allocation3 + $0x12c] sm:$0xff] %v811
        %830 = vst [vmem:[#allocation3 + $0x134] sm:$0xf] %v812
        %831 = vst [vmem:[#allocation3 + $0x138] sm:$0xff] %v814
        %832 = vst [vmem:[#allocation3 + $0x140] sm:$0xf] %v815
        %833 = vst [vmem:[#allocation3 + $0x144] sm:$0xff] %v817
        %834 = vst [vmem:[#allocation3 + $0x14c] sm:$0xf] %v818
        %v835 = vld [vmem:[#allocation2 + $0x4] sm:$0xff]
        %v836 = vld [vmem:[#allocation2 + $0xc] sm:$0xff]
        %v837 = vld [vmem:[#allocation2 + $0x18] sm:$0xff]
        %v838 = vld [vmem:[#allocation2 + $0x20] sm:$0xff]
        %v839 = vld [vmem:[#allocation2 + $0x2c] sm:$0xff]
        %v840 = vld [vmem:[#allocation2 + $0x34] sm:$0xff]
        %v841 = vld [vmem:[#allocation2 + $0x40] sm:$0xff]
        %v842 = vld [vmem:[#allocation2 + $0x48] sm:$0xff]
        %851 = vrot.lane.b32.xlu0 %v835, 110
        %v852 = vpop.permute.xlu0 %851
        %853 = vrot.lane.b32.xlu0 %v836, 110
        %v854 = vpop.permute.xlu0 %853
        %855 = vrot.lane.b32.xlu0 %v837, 110
        %v856 = vpop.permute.xlu0 %855
        %857 = vrot.lane.b32.xlu0 %v838, 110
        %v858 = vpop.permute.xlu0 %857
        %859 = vrot.lane.b32.xlu0 %v839, 110
        %v860 = vpop.permute.xlu0 %859
        %861 = vrot.lane.b32.xlu0 %v840, 110
        %v862 = vpop.permute.xlu0 %861
        %863 = vrot.lane.b32.xlu0 %v841, 110
        %v864 = vpop.permute.xlu0 %863
        %865 = vrot.lane.b32.xlu0 %v842, 110
        %v866 = vpop.permute.xlu0 %865
        %v867 = vrot.slane %v852, 4
        %v868 = vrot.slane %v854, 4
        %v869 = vrot.slane %v856, 4
        %v870 = vrot.slane %v858, 4
        %v871 = vrot.slane %v860, 4
        %v872 = vrot.slane %v862, 4
        %v873 = vrot.slane %v864, 4
        %v874 = vrot.slane %v866, 4
        %v875 = vsel %vm444, %v867, %v868
        %vm876 = vcmask 900096
        %v877 = vsel %vm876, %v852, %v875
        %v878 = vsel %vm876, %v854, %v868
        %v879 = vsel %vm444, %v869, %v870
        %v880 = vsel %vm876, %v856, %v879
        %v881 = vsel %vm876, %v858, %v870
        %v882 = vsel %vm444, %v871, %v872
        %v883 = vsel %vm876, %v860, %v882
        %v884 = vsel %vm876, %v862, %v872
        %v885 = vsel %vm444, %v873, %v874
        %v886 = vsel %vm876, %v864, %v885
        %v887 = vsel %vm876, %v866, %v874
        %896 = vst [vmem:[#allocation3 + $0x150] sm:$0xff] %v877
        %897 = vst [vmem:[#allocation3 + $0x158] sm:$0xf] %v878
        %898 = vst [vmem:[#allocation3 + $0x15c] sm:$0xff] %v880
        %899 = vst [vmem:[#allocation3 + $0x164] sm:$0xf] %v881
        %900 = vst [vmem:[#allocation3 + $0x168] sm:$0xff] %v883
        %901 = vst [vmem:[#allocation3 + $0x170] sm:$0xf] %v884
        %902 = vst [vmem:[#allocation3 + $0x174] sm:$0xff] %v886
        %903 = vst [vmem:[#allocation3 + $0x17c] sm:$0xf] %v887
        %v904 = vld [vmem:[#allocation2 + $0x4] sm:$0xff]
        %v905 = vld [vmem:[#allocation2 + $0xc] sm:$0xff]
        %v906 = vld [vmem:[#allocation2 + $0x18] sm:$0xff]
        %v907 = vld [vmem:[#allocation2 + $0x20] sm:$0xff]
        %v908 = vld [vmem:[#allocation2 + $0x2c] sm:$0xff]
        %v909 = vld [vmem:[#allocation2 + $0x34] sm:$0xff]
        %v910 = vld [vmem:[#allocation2 + $0x40] sm:$0xff]
        %v911 = vld [vmem:[#allocation2 + $0x48] sm:$0xff]
        %920 = vrot.lane.b32.xlu0 %v904, 109
        %v921 = vpop.permute.xlu0 %920
        %922 = vrot.lane.b32.xlu0 %v905, 109
        %v923 = vpop.permute.xlu0 %922
        %924 = vrot.lane.b32.xlu0 %v906, 109
        %v925 = vpop.permute.xlu0 %924
        %926 = vrot.lane.b32.xlu0 %v907, 109
        %v927 = vpop.permute.xlu0 %926
        %928 = vrot.lane.b32.xlu0 %v908, 109
        %v929 = vpop.permute.xlu0 %928
        %930 = vrot.lane.b32.xlu0 %v909, 109
        %v931 = vpop.permute.xlu0 %930
        %932 = vrot.lane.b32.xlu0 %v910, 109
        %v933 = vpop.permute.xlu0 %932
        %934 = vrot.lane.b32.xlu0 %v911, 109
        %v935 = vpop.permute.xlu0 %934
        %v936 = vrot.slane %v921, 4
        %v937 = vrot.slane %v923, 4
        %v938 = vrot.slane %v925, 4
        %v939 = vrot.slane %v927, 4
        %v940 = vrot.slane %v929, 4
        %v941 = vrot.slane %v931, 4
        %v942 = vrot.slane %v933, 4
        %v943 = vrot.slane %v935, 4
        %v944 = vsel %vm444, %v936, %v937
        %vm945 = vcmask 891904
        %v946 = vsel %vm945, %v921, %v944
        %v947 = vsel %vm945, %v923, %v937
        %v948 = vsel %vm444, %v938, %v939
        %v949 = vsel %vm945, %v925, %v948
        %v950 = vsel %vm945, %v927, %v939
        %v951 = vsel %vm444, %v940, %v941
        %v952 = vsel %vm945, %v929, %v951
        %v953 = vsel %vm945, %v931, %v941
        %v954 = vsel %vm444, %v942, %v943
        %v955 = vsel %vm945, %v933, %v954
        %v956 = vsel %vm945, %v935, %v943
        %965 = vst [vmem:[#allocation3 + $0x180] sm:$0xff] %v946
        %966 = vst [vmem:[#allocation3 + $0x188] sm:$0xf] %v947
        %967 = vst [vmem:[#allocation3 + $0x18c] sm:$0xff] %v949
        %968 = vst [vmem:[#allocation3 + $0x194] sm:$0xf] %v950
        %969 = vst [vmem:[#allocation3 + $0x198] sm:$0xff] %v952
        %970 = vst [vmem:[#allocation3 + $0x1a0] sm:$0xf] %v953
        %971 = vst [vmem:[#allocation3 + $0x1a4] sm:$0xff] %v955
        %972 = vst [vmem:[#allocation3 + $0x1ac] sm:$0xf] %v956
        %v973 = vld [vmem:[#allocation7] sm:$0xff]
        %v974 = vld [vmem:[#allocation7 + $0x8] sm:$0xf]
        %v975 = vld [vmem:[#allocation7 + $0xc] sm:$0xff]
        %v976 = vld [vmem:[#allocation7 + $0x14] sm:$0xf]
        %v977 = vld [vmem:[#allocation7 + $0x18] sm:$0xff]
        %v978 = vld [vmem:[#allocation7 + $0x20] sm:$0xf]
        %v979 = vld [vmem:[#allocation7 + $0x24] sm:$0xff]
        %v980 = vld [vmem:[#allocation7 + $0x2c] sm:$0xf]
        %v981 = vld [vmem:[#allocation3] sm:$0xff]
        %v982 = vld [vmem:[#allocation3 + $0x8] sm:$0xf]
        %v983 = vld [vmem:[#allocation3 + $0xc] sm:$0xff]
        %v984 = vld [vmem:[#allocation3 + $0x14] sm:$0xf]
        %v985 = vld [vmem:[#allocation3 + $0x18] sm:$0xff]
        %v986 = vld [vmem:[#allocation3 + $0x20] sm:$0xf]
        %v987 = vld [vmem:[#allocation3 + $0x24] sm:$0xff]
        %v988 = vld [vmem:[#allocation3 + $0x2c] sm:$0xf]
        %v989 = vld [vmem:[#allocation3 + $0x30] sm:$0xff]
        %v990 = vld [vmem:[#allocation3 + $0x38] sm:$0xf]
        %v991 = vld [vmem:[#allocation3 + $0x3c] sm:$0xff]
        %v992 = vld [vmem:[#allocation3 + $0x44] sm:$0xf]
        %v993 = vld [vmem:[#allocation3 + $0x48] sm:$0xff]
        %v994 = vld [vmem:[#allocation3 + $0x50] sm:$0xf]
        %v995 = vld [vmem:[#allocation3 + $0x54] sm:$0xff]
        %v996 = vld [vmem:[#allocation3 + $0x5c] sm:$0xf]
        %v997 = vld [vmem:[#allocation3 + $0x60] sm:$0xff]
        %v998 = vld [vmem:[#allocation3 + $0x68] sm:$0xf]
        %v999 = vld [vmem:[#allocation3 + $0x6c] sm:$0xff]
        %v1000 = vld [vmem:[#allocation3 + $0x74] sm:$0xf]
        %v1001 = vld [vmem:[#allocation3 + $0x78] sm:$0xff]
        %v1002 = vld [vmem:[#allocation3 + $0x80] sm:$0xf]
        %v1003 = vld [vmem:[#allocation3 + $0x84] sm:$0xff]
        %v1004 = vld [vmem:[#allocation3 + $0x8c] sm:$0xf]
        %v1005 = vld [vmem:[#allocation3 + $0x90] sm:$0xff]
        %v1006 = vld [vmem:[#allocation3 + $0x98] sm:$0xf]
        %v1007 = vld [vmem:[#allocation3 + $0x9c] sm:$0xff]
        %v1008 = vld [vmem:[#allocation3 + $0xa4] sm:$0xf]
        %v1009 = vld [vmem:[#allocation3 + $0xa8] sm:$0xff]
        %v1010 = vld [vmem:[#allocation3 + $0xb0] sm:$0xf]
        %v1011 = vld [vmem:[#allocation3 + $0xb4] sm:$0xff]
        %v1012 = vld [vmem:[#allocation3 + $0xbc] sm:$0xf]
        %v1013 = vld [vmem:[#allocation3 + $0xc0] sm:$0xff]
        %v1014 = vld [vmem:[#allocation3 + $0xc8] sm:$0xf]
        %v1015 = vld [vmem:[#allocation3 + $0xcc] sm:$0xff]
        %v1016 = vld [vmem:[#allocation3 + $0xd4] sm:$0xf]
        %v1017 = vld [vmem:[#allocation3 + $0xd8] sm:$0xff]
        %v1018 = vld [vmem:[#allocation3 + $0xe0] sm:$0xf]
        %v1019 = vld [vmem:[#allocation3 + $0xe4] sm:$0xff]
        %v1020 = vld [vmem:[#allocation3 + $0xec] sm:$0xf]
        %v1021 = vld [vmem:[#allocation3 + $0xf0] sm:$0xff]
        %v1022 = vld [vmem:[#allocation3 + $0xf8] sm:$0xf]
        %v1023 = vld [vmem:[#allocation3 + $0xfc] sm:$0xff]
        %v1024 = vld [vmem:[#allocation3 + $0x104] sm:$0xf]
        %v1025 = vld [vmem:[#allocation3 + $0x108] sm:$0xff]
        %v1026 = vld [vmem:[#allocation3 + $0x110] sm:$0xf]
        %v1027 = vld [vmem:[#allocation3 + $0x114] sm:$0xff]
        %v1028 = vld [vmem:[#allocation3 + $0x11c] sm:$0xf]
        %v1029 = vld [vmem:[#allocation3 + $0x120] sm:$0xff]
        %v1030 = vld [vmem:[#allocation3 + $0x128] sm:$0xf]
        %v1031 = vld [vmem:[#allocation3 + $0x12c] sm:$0xff]
        %v1032 = vld [vmem:[#allocation3 + $0x134] sm:$0xf]
        %v1033 = vld [vmem:[#allocation3 + $0x138] sm:$0xff]
        %v1034 = vld [vmem:[#allocation3 + $0x140] sm:$0xf]
        %v1035 = vld [vmem:[#allocation3 + $0x144] sm:$0xff]
        %v1036 = vld [vmem:[#allocation3 + $0x14c] sm:$0xf]
        %v1037 = vld [vmem:[#allocation3 + $0x150] sm:$0xff]
        %v1038 = vld [vmem:[#allocation3 + $0x158] sm:$0xf]
        %v1039 = vld [vmem:[#allocation3 + $0x15c] sm:$0xff]
        %v1040 = vld [vmem:[#allocation3 + $0x164] sm:$0xf]
        %v1041 = vld [vmem:[#allocation3 + $0x168] sm:$0xff]
        %v1042 = vld [vmem:[#allocation3 + $0x170] sm:$0xf]
        %v1043 = vld [vmem:[#allocation3 + $0x174] sm:$0xff]
        %v1044 = vld [vmem:[#allocation3 + $0x17c] sm:$0xf]
        %v1045 = vld [vmem:[#allocation3 + $0x180] sm:$0xff]
        %v1046 = vld [vmem:[#allocation3 + $0x188] sm:$0xf]
        %v1047 = vld [vmem:[#allocation3 + $0x18c] sm:$0xff]
        %v1048 = vld [vmem:[#allocation3 + $0x194] sm:$0xf]
        %v1049 = vld [vmem:[#allocation3 + $0x198] sm:$0xff]
        %v1050 = vld [vmem:[#allocation3 + $0x1a0] sm:$0xf]
        %v1051 = vld [vmem:[#allocation3 + $0x1a4] sm:$0xff]
        %v1052 = vld [vmem:[#allocation3 + $0x1ac] sm:$0xf]
        %1054 = vset.pattern.permute.xlu0 0
        %1055 = vperm.xlu0 %1054, %v340
        %v1056 = vpop.permute.xlu0 %1055
        %1059 = vset.pattern.permute.xlu0 0
        %1060 = vperm.xlu0 %1059, %v341
        %v1061 = vpop.permute.xlu0 %1060
        %1064 = vset.pattern.permute.xlu0 0
        %1065 = vperm.xlu0 %1064, %v342
        %v1066 = vpop.permute.xlu0 %1065
        %1069 = vset.pattern.permute.xlu0 0
        %1070 = vperm.xlu0 %1069, %v343
        %v1071 = vpop.permute.xlu0 %1070
        %v1081 = vunpack.c.l.b16 %v973
        %v1082 = vunpack.c.h.b16 %v973
        %v1083 = vunpack.c.l.b16 %v974
        %v1084 = vunpack.c.l.b16 %v975
        %v1085 = vunpack.c.h.b16 %v975
        %v1086 = vunpack.c.l.b16 %v976
        %v1087 = vunpack.c.l.b16 %v977
        %v1088 = vunpack.c.h.b16 %v977
        %v1089 = vunpack.c.l.b16 %v978
        %v1090 = vunpack.c.l.b16 %v979
        %v1091 = vunpack.c.h.b16 %v979
        %v1092 = vunpack.c.l.b16 %v980
        %v1093 = vpack.c.b16 %v1084, %v1081
        %v1094 = vpack.c.b16 %v1085, %v1082
        %v1095 = vpack.c.b16 %v1086, %v1083
        %v1096 = vpack.c.b16 %v1090, %v1087
        %v1097 = vpack.c.b16 %v1091, %v1088
        %v1098 = vpack.c.b16 %v1092, %v1089
        %v1175 = vunpack.c.l.b16 %v981
        %v1176 = vunpack.c.h.b16 %v981
        %v1177 = vunpack.c.l.b16 %v982
        %v1178 = vunpack.c.l.b16 %v983
        %v1179 = vunpack.c.h.b16 %v983
        %v1180 = vunpack.c.l.b16 %v984
        %v1181 = vunpack.c.l.b16 %v985
        %v1182 = vunpack.c.h.b16 %v985
        %v1183 = vunpack.c.l.b16 %v986
        %v1184 = vunpack.c.l.b16 %v987
        %v1185 = vunpack.c.h.b16 %v987
        %v1186 = vunpack.c.l.b16 %v988
        %v1187 = vunpack.c.l.b16 %v989
        %v1188 = vunpack.c.h.b16 %v989
        %v1189 = vunpack.c.l.b16 %v990
        %v1190 = vunpack.c.l.b16 %v991
        %v1191 = vunpack.c.h.b16 %v991
        %v1192 = vunpack.c.l.b16 %v992
        %v1193 = vunpack.c.l.b16 %v993
        %v1194 = vunpack.c.h.b16 %v993
        %v1195 = vunpack.c.l.b16 %v994
        %v1196 = vunpack.c.l.b16 %v995
        %v1197 = vunpack.c.h.b16 %v995
        %v1198 = vunpack.c.l.b16 %v996
        %v1199 = vunpack.c.l.b16 %v997
        %v1200 = vunpack.c.h.b16 %v997
        %v1201 = vunpack.c.l.b16 %v998
        %v1202 = vunpack.c.l.b16 %v999
        %v1203 = vunpack.c.h.b16 %v999
        %v1204 = vunpack.c.l.b16 %v1000
        %v1205 = vunpack.c.l.b16 %v1001
        %v1206 = vunpack.c.h.b16 %v1001
        %v1207 = vunpack.c.l.b16 %v1002
        %v1208 = vunpack.c.l.b16 %v1003
        %v1209 = vunpack.c.h.b16 %v1003
        %v1210 = vunpack.c.l.b16 %v1004
        %v1211 = vunpack.c.l.b16 %v1005
        %v1212 = vunpack.c.h.b16 %v1005
        %v1213 = vunpack.c.l.b16 %v1006
        %v1214 = vunpack.c.l.b16 %v1007
        %v1215 = vunpack.c.h.b16 %v1007
        %v1216 = vunpack.c.l.b16 %v1008
        %v1217 = vunpack.c.l.b16 %v1009
        %v1218 = vunpack.c.h.b16 %v1009
        %v1219 = vunpack.c.l.b16 %v1010
        %v1220 = vunpack.c.l.b16 %v1011
        %v1221 = vunpack.c.h.b16 %v1011
        %v1222 = vunpack.c.l.b16 %v1012
        %v1223 = vunpack.c.l.b16 %v1013
        %v1224 = vunpack.c.h.b16 %v1013
        %v1225 = vunpack.c.l.b16 %v1014
        %v1226 = vunpack.c.l.b16 %v1015
        %v1227 = vunpack.c.h.b16 %v1015
        %v1228 = vunpack.c.l.b16 %v1016
        %v1229 = vunpack.c.l.b16 %v1017
        %v1230 = vunpack.c.h.b16 %v1017
        %v1231 = vunpack.c.l.b16 %v1018
        %v1232 = vunpack.c.l.b16 %v1019
        %v1233 = vunpack.c.h.b16 %v1019
        %v1234 = vunpack.c.l.b16 %v1020
        %v1235 = vunpack.c.l.b16 %v1021
        %v1236 = vunpack.c.h.b16 %v1021
        %v1237 = vunpack.c.l.b16 %v1022
        %v1238 = vunpack.c.l.b16 %v1023
        %v1239 = vunpack.c.h.b16 %v1023
        %v1240 = vunpack.c.l.b16 %v1024
        %v1241 = vunpack.c.l.b16 %v1025
        %v1242 = vunpack.c.h.b16 %v1025
        %v1243 = vunpack.c.l.b16 %v1026
        %v1244 = vunpack.c.l.b16 %v1027
        %v1245 = vunpack.c.h.b16 %v1027
        %v1246 = vunpack.c.l.b16 %v1028
        %v1247 = vunpack.c.l.b16 %v1029
        %v1248 = vunpack.c.h.b16 %v1029
        %v1249 = vunpack.c.l.b16 %v1030
        %v1250 = vunpack.c.l.b16 %v1031
        %v1251 = vunpack.c.h.b16 %v1031
        %v1252 = vunpack.c.l.b16 %v1032
        %v1253 = vunpack.c.l.b16 %v1033
        %v1254 = vunpack.c.h.b16 %v1033
        %v1255 = vunpack.c.l.b16 %v1034
        %v1256 = vunpack.c.l.b16 %v1035
        %v1257 = vunpack.c.h.b16 %v1035
        %v1258 = vunpack.c.l.b16 %v1036
        %v1259 = vunpack.c.l.b16 %v1037
        %v1260 = vunpack.c.h.b16 %v1037
        %v1261 = vunpack.c.l.b16 %v1038
        %v1262 = vunpack.c.l.b16 %v1039
        %v1263 = vunpack.c.h.b16 %v1039
        %v1264 = vunpack.c.l.b16 %v1040
        %v1265 = vunpack.c.l.b16 %v1041
        %v1266 = vunpack.c.h.b16 %v1041
        %v1267 = vunpack.c.l.b16 %v1042
        %v1268 = vunpack.c.l.b16 %v1043
        %v1269 = vunpack.c.h.b16 %v1043
        %v1270 = vunpack.c.l.b16 %v1044
        %v1271 = vunpack.c.l.b16 %v1045
        %v1272 = vunpack.c.h.b16 %v1045
        %v1273 = vunpack.c.l.b16 %v1046
        %v1274 = vunpack.c.l.b16 %v1047
        %v1275 = vunpack.c.h.b16 %v1047
        %v1276 = vunpack.c.l.b16 %v1048
        %v1277 = vunpack.c.l.b16 %v1049
        %v1278 = vunpack.c.h.b16 %v1049
        %v1279 = vunpack.c.l.b16 %v1050
        %v1280 = vunpack.c.l.b16 %v1051
        %v1281 = vunpack.c.h.b16 %v1051
        %v1282 = vunpack.c.l.b16 %v1052
        %v1283 = vpack.c.b16 %v1178, %v1175
        %v1284 = vpack.c.b16 %v1179, %v1176
        %v1285 = vpack.c.b16 %v1180, %v1177
        %v1286 = vpack.c.b16 %v1184, %v1181
        %v1287 = vpack.c.b16 %v1185, %v1182
        %v1288 = vpack.c.b16 %v1186, %v1183
        %v1289 = vpack.c.b16 %v1190, %v1187
        %v1290 = vpack.c.b16 %v1191, %v1188
        %v1291 = vpack.c.b16 %v1192, %v1189
        %v1292 = vpack.c.b16 %v1196, %v1193
        %v1293 = vpack.c.b16 %v1197, %v1194
        %v1294 = vpack.c.b16 %v1198, %v1195
        %v1295 = vpack.c.b16 %v1202, %v1199
        %v1296 = vpack.c.b16 %v1203, %v1200
        %v1297 = vpack.c.b16 %v1204, %v1201
        %v1298 = vpack.c.b16 %v1208, %v1205
        %v1299 = vpack.c.b16 %v1209, %v1206
        %v1300 = vpack.c.b16 %v1210, %v1207
        %v1301 = vpack.c.b16 %v1214, %v1211
        %v1302 = vpack.c.b16 %v1215, %v1212
        %v1303 = vpack.c.b16 %v1216, %v1213
        %v1304 = vpack.c.b16 %v1220, %v1217
        %v1305 = vpack.c.b16 %v1221, %v1218
        %v1306 = vpack.c.b16 %v1222, %v1219
        %v1307 = vpack.c.b16 %v1226, %v1223
        %v1308 = vpack.c.b16 %v1227, %v1224
        %v1309 = vpack.c.b16 %v1228, %v1225
        %v1310 = vpack.c.b16 %v1232, %v1229
        %v1311 = vpack.c.b16 %v1233, %v1230
        %v1312 = vpack.c.b16 %v1234, %v1231
        %v1313 = vpack.c.b16 %v1238, %v1235
        %v1314 = vpack.c.b16 %v1239, %v1236
        %v1315 = vpack.c.b16 %v1240, %v1237
        %v1316 = vpack.c.b16 %v1244, %v1241
        %v1317 = vpack.c.b16 %v1245, %v1242
        %v1318 = vpack.c.b16 %v1246, %v1243
        %v1319 = vpack.c.b16 %v1250, %v1247
        %v1320 = vpack.c.b16 %v1251, %v1248
        %v1321 = vpack.c.b16 %v1252, %v1249
        %v1322 = vpack.c.b16 %v1256, %v1253
        %v1323 = vpack.c.b16 %v1257, %v1254
        %v1324 = vpack.c.b16 %v1258, %v1255
        %v1325 = vpack.c.b16 %v1262, %v1259
        %v1326 = vpack.c.b16 %v1263, %v1260
        %v1327 = vpack.c.b16 %v1264, %v1261
        %v1328 = vpack.c.b16 %v1268, %v1265
        %v1329 = vpack.c.b16 %v1269, %v1266
        %v1330 = vpack.c.b16 %v1270, %v1267
        %v1331 = vpack.c.b16 %v1274, %v1271
        %v1332 = vpack.c.b16 %v1275, %v1272
        %v1333 = vpack.c.b16 %v1276, %v1273
        %v1334 = vpack.c.b16 %v1280, %v1277
        %v1335 = vpack.c.b16 %v1281, %v1278
        %v1336 = vpack.c.b16 %v1282, %v1279
        %vm1391 = vcmask 261120
        %v1393 = vsel %vm1391, %v1095, 0
        %v1396 = vsel %vm1391, %v1098, 0
        %1398 = vmatprep.subr.bf16.mxu0 %v1305
        %1399 = vmatpush1.bf16.msra.mxu0 %v1304
        %1400 = vmatprep.subr.bf16.mxu0 %v1302
        %1401 = vmatpush1.bf16.msra.mxu0 %v1301
        %1402 = vmatprep.subr.bf16.mxu0 %v1299
        %1403 = vmatpush1.bf16.msra.mxu0 %v1298
        %1404 = vmatprep.subr.bf16.mxu0 %v1296
        %1405 = vmatpush1.bf16.msra.mxu0 %v1295
        %1406 = vmatprep.subr.bf16.mxu0 %v1293
        %1407 = vmatpush1.bf16.msra.mxu0 %v1292
        %1408 = vmatprep.subr.bf16.mxu0 %v1290
        %1409 = vmatpush1.bf16.msra.mxu0 %v1289
        %1410 = vmatprep.subr.bf16.mxu0 %v1287
        %1411 = vmatpush1.bf16.msra.mxu0 %v1286
        %1412 = vmatprep.subr.bf16.mxu0 %v1284
        %1413 = vmatpush1.bf16.msra.mxu0 %v1283
        %1414 = vmatprep.subr.bf16.mxu0 %v1329
        %1415 = vmatpush2.bf16.msra.mxu0 %v1328
        %1416 = vmatprep.subr.bf16.mxu0 %v1326
        %1417 = vmatpush2.bf16.msra.mxu0 %v1325
        %1418 = vmatprep.subr.bf16.mxu0 %v1323
        %1419 = vmatpush2.bf16.msra.mxu0 %v1322
        %1420 = vmatprep.subr.bf16.mxu0 %v1320
        %1421 = vmatpush2.bf16.msra.mxu0 %v1319
        %1422 = vmatprep.subr.bf16.mxu0 %v1317
        %1423 = vmatpush2.bf16.msra.mxu0 %v1316
        %1424 = vmatprep.subr.bf16.mxu0 %v1314
        %1425 = vmatpush2.bf16.msra.mxu0 %v1313
        %1426 = vmatprep.subr.bf16.mxu0 %v1311
        %1427 = vmatpush2.bf16.msra.mxu0 %v1310
        %1428 = vmatprep.subr.bf16.mxu0 %v1308
        %1429 = vmatpush2.bf16.msra.mxu0 %v1307
        %1430 = vmatprep.mubr.bf16.mxu0 %v1094
        %1431 = vmatmul.mubr.bf16.gmra.mxu0 %v1093
        %v1432 = vpop.f32.mrf.mxu0
        %v1433 = vadd.f32 %v1056, %v1432
        %v1434 = vpop.f32.mrf.mxu0
        %v1435 = vadd.f32 %v1056, %v1434
        %v1436 = vpop.f32.mrf.mxu0
        %v1437 = vadd.f32 %v1061, %v1436
        %v1438 = vpop.f32.mrf.mxu0
        %v1439 = vadd.f32 %v1061, %v1438
        %1440 = vmatprep.mubr.bf16.mxu0 %v1097
        %1441 = vmatmul.mubr.bf16.gmra.mxu0 %v1096
        %v1442 = vpop.f32.mrf.mxu0
        %v1443 = vadd.f32 %v1066, %v1442
        %v1444 = vpop.f32.mrf.mxu0
        %v1445 = vadd.f32 %v1066, %v1444
        %v1446 = vpop.f32.mrf.mxu0
        %v1447 = vadd.f32 %v1071, %v1446
        %v1448 = vpop.f32.mrf.mxu0
        %v1449 = vadd.f32 %v1071, %v1448
        %1450 = vdwg.mxu0
        %1451 = vmatprep.subr.bf16.mxu0 0
        %1452 = vmatpush1.bf16.msra.mxu0 0
        %1453 = vmatprep.subr.bf16.mxu0 0
        %1454 = vmatpush1.bf16.msra.mxu0 0
        %1455 = vmatprep.subr.bf16.mxu0 0
        %1456 = vmatpush1.bf16.msra.mxu0 0
        %1457 = vmatprep.subr.bf16.mxu0 0
        %1458 = vmatpush1.bf16.msra.mxu0 0
        %1459 = vmatprep.subr.bf16.mxu0 0
        %1460 = vmatpush1.bf16.msra.mxu0 0
        %1461 = vmatprep.subr.bf16.mxu0 0
        %1462 = vmatpush1.bf16.msra.mxu0 0
        %1463 = vmatprep.subr.bf16.mxu0 %v1335
        %1464 = vmatpush1.bf16.msra.mxu0 %v1334
        %1465 = vmatprep.subr.bf16.mxu0 %v1332
        %1466 = vmatpush1.bf16.msra.mxu0 %v1331
        %1467 = vmatprep.subr.bf16.mxu0 0
        %1468 = vmatpush2.bf16.msra.mxu0 0
        %1469 = vmatprep.subr.bf16.mxu0 0
        %1470 = vmatpush2.bf16.msra.mxu0 0
        %1471 = vmatprep.subr.bf16.mxu0 0
        %1472 = vmatpush2.bf16.msra.mxu0 0
        %1473 = vmatprep.subr.bf16.mxu0 0
        %1474 = vmatpush2.bf16.msra.mxu0 0
        %1475 = vmatprep.subr.bf16.mxu0 0
        %1476 = vmatpush2.bf16.msra.mxu0 0
        %1477 = vmatprep.subr.bf16.mxu0 0
        %1478 = vmatpush2.bf16.msra.mxu0 0
        %1479 = vmatprep.subr.bf16.mxu0 0
        %1480 = vmatpush2.bf16.msra.mxu0 0
        %1481 = vmatprep.subr.bf16.mxu0 0
        %1482 = vmatpush2.bf16.msra.mxu0 0
        %1483 = vmatprep.mubr.bf16.mxu0 0
        %1484 = vmatmul.mubr.bf16.gmra.mxu0 %v1393
        %v1485 = vpop.f32.mrf.mxu0
        %v1486 = vadd.f32 %v1433, %v1485
        %v1487 = vpop.f32.mrf.mxu0
        %v1488 = vadd.f32 %v1435, %v1487
        %v1489 = vpop.f32.mrf.mxu0
        %v1490 = vadd.f32 %v1437, %v1489
        %v1491 = vpop.f32.mrf.mxu0
        %v1492 = vadd.f32 %v1439, %v1491
        %1493 = vmatprep.mubr.bf16.mxu0 0
        %1494 = vmatmul.mubr.bf16.gmra.mxu0 %v1396
        %v1495 = vpop.f32.mrf.mxu0
        %v1496 = vadd.f32 %v1443, %v1495
        %v1497 = vpop.f32.mrf.mxu0
        %v1498 = vadd.f32 %v1445, %v1497
        %v1499 = vpop.f32.mrf.mxu0
        %v1500 = vadd.f32 %v1447, %v1499
        %v1501 = vpop.f32.mrf.mxu0
        %v1502 = vadd.f32 %v1449, %v1501
        %1503 = vdwg.mxu0
        %1504 = vmatprep.subr.bf16.mxu0 0
        %1505 = vmatpush1.bf16.msra.mxu0 %v1306
        %1506 = vmatprep.subr.bf16.mxu0 0
        %1507 = vmatpush1.bf16.msra.mxu0 %v1303
        %1508 = vmatprep.subr.bf16.mxu0 0
        %1509 = vmatpush1.bf16.msra.mxu0 %v1300
        %1510 = vmatprep.subr.bf16.mxu0 0
        %1511 = vmatpush1.bf16.msra.mxu0 %v1297
        %1512 = vmatprep.subr.bf16.mxu0 0
        %1513 = vmatpush1.bf16.msra.mxu0 %v1294
        %1514 = vmatprep.subr.bf16.mxu0 0
        %1515 = vmatpush1.bf16.msra.mxu0 %v1291
        %1516 = vmatprep.subr.bf16.mxu0 0
        %1517 = vmatpush1.bf16.msra.mxu0 %v1288
        %1518 = vmatprep.subr.bf16.mxu0 0
        %1519 = vmatpush1.bf16.msra.mxu0 %v1285
        %1520 = vmatprep.subr.bf16.mxu0 0
        %1521 = vmatpush2.bf16.msra.mxu0 %v1330
        %1522 = vmatprep.subr.bf16.mxu0 0
        %1523 = vmatpush2.bf16.msra.mxu0 %v1327
        %1524 = vmatprep.subr.bf16.mxu0 0
        %1525 = vmatpush2.bf16.msra.mxu0 %v1324
        %1526 = vmatprep.subr.bf16.mxu0 0
        %1527 = vmatpush2.bf16.msra.mxu0 %v1321
        %1528 = vmatprep.subr.bf16.mxu0 0
        %1529 = vmatpush2.bf16.msra.mxu0 %v1318
        %1530 = vmatprep.subr.bf16.mxu0 0
        %1531 = vmatpush2.bf16.msra.mxu0 %v1315
        %1532 = vmatprep.subr.bf16.mxu0 0
        %1533 = vmatpush2.bf16.msra.mxu0 %v1312
        %1534 = vmatprep.subr.bf16.mxu0 0
        %1535 = vmatpush2.bf16.msra.mxu0 %v1309
        %1536 = vmatprep.mubr.bf16.mxu0 %v1094
        %1537 = vmatmul.mubr.bf16.gmra.mxu0 %v1093
        %v1538 = vpop.f32.mrf.mxu0
        %v1539 = vadd.f32 %v1056, %v1538
        %v1540 = vpop.f32.mrf.mxu0
        %v1541 = vpop.f32.mrf.mxu0
        %v1542 = vadd.f32 %v1061, %v1541
        %v1543 = vpop.f32.mrf.mxu0
        %1544 = vmatprep.mubr.bf16.mxu0 %v1097
        %1545 = vmatmul.mubr.bf16.gmra.mxu0 %v1096
        %v1546 = vpop.f32.mrf.mxu0
        %v1547 = vadd.f32 %v1066, %v1546
        %v1548 = vpop.f32.mrf.mxu0
        %v1549 = vpop.f32.mrf.mxu0
        %v1550 = vadd.f32 %v1071, %v1549
        %v1551 = vpop.f32.mrf.mxu0
        %1552 = vdwg.mxu0
        %1553 = vmatprep.subr.bf16.mxu0 0
        %1554 = vmatpush1.bf16.msra.mxu0 0
        %1555 = vmatprep.subr.bf16.mxu0 0
        %1556 = vmatpush1.bf16.msra.mxu0 0
        %1557 = vmatprep.subr.bf16.mxu0 0
        %1558 = vmatpush1.bf16.msra.mxu0 0
        %1559 = vmatprep.subr.bf16.mxu0 0
        %1560 = vmatpush1.bf16.msra.mxu0 0
        %1561 = vmatprep.subr.bf16.mxu0 0
        %1562 = vmatpush1.bf16.msra.mxu0 0
        %1563 = vmatprep.subr.bf16.mxu0 0
        %1564 = vmatpush1.bf16.msra.mxu0 0
        %1565 = vmatprep.subr.bf16.mxu0 0
        %1566 = vmatpush1.bf16.msra.mxu0 %v1336
        %1567 = vmatprep.subr.bf16.mxu0 0
        %1568 = vmatpush1.bf16.msra.mxu0 %v1333
        %1569 = vmatprep.subr.bf16.mxu0 0
        %1570 = vmatpush2.bf16.msra.mxu0 0
        %1571 = vmatprep.subr.bf16.mxu0 0
        %1572 = vmatpush2.bf16.msra.mxu0 0
        %1573 = vmatprep.subr.bf16.mxu0 0
        %1574 = vmatpush2.bf16.msra.mxu0 0
        %1575 = vmatprep.subr.bf16.mxu0 0
        %1576 = vmatpush2.bf16.msra.mxu0 0
        %1577 = vmatprep.subr.bf16.mxu0 0
        %1578 = vmatpush2.bf16.msra.mxu0 0
        %1579 = vmatprep.subr.bf16.mxu0 0
        %1580 = vmatpush2.bf16.msra.mxu0 0
        %1581 = vmatprep.subr.bf16.mxu0 0
        %1582 = vmatpush2.bf16.msra.mxu0 0
        %1583 = vmatprep.subr.bf16.mxu0 0
        %1584 = vmatpush2.bf16.msra.mxu0 0
        %1585 = vmatprep.mubr.bf16.mxu0 0
        %1586 = vmatmul.mubr.bf16.gmra.mxu0 %v1393
        %v1587 = vpop.f32.mrf.mxu0
        %v1588 = vadd.f32 %v1539, %v1587
        %v1589 = vpop.f32.mrf.mxu0
        %v1590 = vpop.f32.mrf.mxu0
        %v1591 = vadd.f32 %v1542, %v1590
        %v1592 = vpop.f32.mrf.mxu0
        %1593 = vmatprep.mubr.bf16.mxu0 0
        %1594 = vmatmul.mubr.bf16.gmra.mxu0 %v1396
        %v1595 = vpop.f32.mrf.mxu0
        %v1596 = vadd.f32 %v1547, %v1595
        %v1597 = vpop.f32.mrf.mxu0
        %v1598 = vpop.f32.mrf.mxu0
        %v1599 = vadd.f32 %v1550, %v1598
        %v1600 = vpop.f32.mrf.mxu0
        %1601 = vdwg.mxu0
        %v1602 = vld [vmem:[%s2] sm:$0xff]
        %v1603 = vld [vmem:[%s2 + $0x8] sm:$0xff]
        %v1604 = vld [vmem:[%s2 + $0x10] sm:$0xff]
        %v1605 = vld [vmem:[%s2 + $0x18] sm:$0xff]
        %v1606 = vmul.f32 %v1486, %v313
        %v1607 = vmul.f32 %v1488, %v314
        %v1608 = vmul.f32 %v1588, %v315
        %v1609 = vmul.f32 %v1490, %v313
        %v1610 = vmul.f32 %v1492, %v314
        %v1611 = vmul.f32 %v1591, %v315
        %v1612 = vmul.f32 %v1496, %v313
        %v1613 = vmul.f32 %v1498, %v314
        %v1614 = vmul.f32 %v1596, %v315
        %v1615 = vmul.f32 %v1500, %v313
        %v1616 = vmul.f32 %v1502, %v314
        %v1617 = vmul.f32 %v1599, %v315
        %v1618 = vadd.f32 %v1606, %v1607
        %v1619 = vadd.f32 %v1618, %v1608
        %1620 = vadd.xlane.f32.xlu0 %v1619
        %v1621 = vpop.xlane.xlu0 %1620
        %v1622 = vadd.f32 %v1609, %v1610
        %v1623 = vadd.f32 %v1622, %v1611
        %1624 = vadd.xlane.f32.xlu0 %v1623
        %v1625 = vpop.xlane.xlu0 %1624
        %v1626 = vadd.f32 %v1612, %v1613
        %v1627 = vadd.f32 %v1626, %v1614
        %1628 = vadd.xlane.f32.xlu0 %v1627
        %v1629 = vpop.xlane.xlu0 %1628
        %v1630 = vadd.f32 %v1615, %v1616
        %v1631 = vadd.f32 %v1630, %v1617
        %1632 = vadd.xlane.f32.xlu0 %v1631
        %v1633 = vpop.xlane.xlu0 %1632
        %v1634 = vmul.f32 %v1606, %v1486
        %v1635 = vmul.f32 %v1607, %v1488
        %v1636 = vmul.f32 %v1608, %v1588
        %v1637 = vmul.f32 %v1609, %v1490
        %v1638 = vmul.f32 %v1610, %v1492
        %v1639 = vmul.f32 %v1611, %v1591
        %v1640 = vmul.f32 %v1612, %v1496
        %v1641 = vmul.f32 %v1613, %v1498
        %v1642 = vmul.f32 %v1614, %v1596
        %v1643 = vmul.f32 %v1615, %v1500
        %v1644 = vmul.f32 %v1616, %v1502
        %v1645 = vmul.f32 %v1617, %v1599
        %v1646 = vadd.f32 %v1634, %v1635
        %v1647 = vadd.f32 %v1646, %v1636
        %1648 = vadd.xlane.f32.xlu0 %v1647
        %v1649 = vpop.xlane.xlu0 %1648
        %v1650 = vadd.f32 %v1637, %v1638
        %v1651 = vadd.f32 %v1650, %v1639
        %1652 = vadd.xlane.f32.xlu0 %v1651
        %v1653 = vpop.xlane.xlu0 %1652
        %v1654 = vadd.f32 %v1640, %v1641
        %v1655 = vadd.f32 %v1654, %v1642
        %1656 = vadd.xlane.f32.xlu0 %v1655
        %v1657 = vpop.xlane.xlu0 %1656
        %v1658 = vadd.f32 %v1643, %v1644
        %v1659 = vadd.f32 %v1658, %v1645
        %1660 = vadd.xlane.f32.xlu0 %v1659
        %v1661 = vpop.xlane.xlu0 %1660
        %v1662 = vmul.f32 %v1621, 0.00390625
        %v1663 = vmul.f32 %v1625, 0.00390625
        %v1664 = vmul.f32 %v1629, 0.00390625
        %v1665 = vmul.f32 %v1633, 0.00390625
        %v1666 = vmul.f32 %v1649, 0.00390625
        %v1667 = vmul.f32 %v1653, 0.00390625
        %v1668 = vmul.f32 %v1657, 0.00390625
        %v1669 = vmul.f32 %v1661, 0.00390625
        %v1670 = vmul.f32 %v1662, %v1662
        %v1671 = vmul.f32 %v1663, %v1663
        %v1672 = vmul.f32 %v1664, %v1664
        %v1673 = vmul.f32 %v1665, %v1665
        %v1674 = vsub.f32 %v1666, %v1670
        %v1675 = vsub.f32 %v1667, %v1671
        %v1676 = vsub.f32 %v1668, %v1672
        %v1677 = vsub.f32 %v1669, %v1673
        %v1678 = vmax.f32 %v1674, 0.0
        %v1679 = vmax.f32 %v1675, 0.0
        %v1680 = vmax.f32 %v1676, 0.0
        %v1681 = vmax.f32 %v1677, 0.0
        %v1682 = vsub.f32 %v1486, %v1662
        %v1683 = vsub.f32 %v1488, %v1662
        %v1684 = vsub.f32 %v1588, %v1662
        %v1685 = vsub.f32 %v1490, %v1663
        %v1686 = vsub.f32 %v1492, %v1663
        %v1687 = vsub.f32 %v1591, %v1663
        %v1688 = vsub.f32 %v1496, %v1664
        %v1689 = vsub.f32 %v1498, %v1664
        %v1690 = vsub.f32 %v1596, %v1664
        %v1691 = vsub.f32 %v1500, %v1665
        %v1692 = vsub.f32 %v1502, %v1665
        %v1693 = vsub.f32 %v1599, %v1665
        %v1694 = vadd.f32 %v1678, 1e-05
        %v1695 = vadd.f32 %v1679, 1e-05
        %v1696 = vadd.f32 %v1680, 1e-05
        %v1697 = vadd.f32 %v1681, 1e-05
        %v1698 = vrsqrt.pop %v1694
        %v1699 = vrsqrt.pop %v1695
        %v1700 = vrsqrt.pop %v1696
        %v1701 = vrsqrt.pop %v1697
        %v1702 = vmul.f32 %v1682, %v1698
        %v1703 = vmul.f32 %v1683, %v1698
        %v1704 = vmul.f32 %v1684, %v1698
        %v1705 = vmul.f32 %v1685, %v1699
        %v1706 = vmul.f32 %v1686, %v1699
        %v1707 = vmul.f32 %v1687, %v1699
        %v1708 = vmul.f32 %v1688, %v1700
        %v1709 = vmul.f32 %v1689, %v1700
        %v1710 = vmul.f32 %v1690, %v1700
        %v1711 = vmul.f32 %v1691, %v1701
        %v1712 = vmul.f32 %v1692, %v1701
        %v1713 = vmul.f32 %v1693, %v1701
        %1715 = vset.pattern.permute.xlu0 1
        %1716 = vperm.xlu0 %1715, %v1602
        %v1717 = vpop.permute.xlu0 %1716
        %1720 = vset.pattern.permute.xlu0 1
        %1721 = vperm.xlu0 %1720, %v1603
        %v1722 = vpop.permute.xlu0 %1721
        %1725 = vset.pattern.permute.xlu0 1
        %1726 = vperm.xlu0 %1725, %v1604
        %v1727 = vpop.permute.xlu0 %1726
        %1730 = vset.pattern.permute.xlu0 1
        %1731 = vperm.xlu0 %1730, %v1605
        %v1732 = vpop.permute.xlu0 %1731
        %v1734 = vmul.f32 %v1702, %v1717
        %v1735 = vmul.f32 %v1703, %v1717
        %v1736 = vmul.f32 %v1704, %v1717
        %v1737 = vmul.f32 %v1705, %v1722
        %v1738 = vmul.f32 %v1706, %v1722
        %v1739 = vmul.f32 %v1707, %v1722
        %v1740 = vmul.f32 %v1708, %v1727
        %v1741 = vmul.f32 %v1709, %v1727
        %v1742 = vmul.f32 %v1710, %v1727
        %v1743 = vmul.f32 %v1711, %v1732
        %v1744 = vmul.f32 %v1712, %v1732
        %v1745 = vmul.f32 %v1713, %v1732
        %1746 = vset.pattern.permute.xlu0 2
        %1747 = vperm.xlu0 %1746, %v1602
        %v1748 = vpop.permute.xlu0 %1747
        %1750 = vset.pattern.permute.xlu0 2
        %1751 = vperm.xlu0 %1750, %v1603
        %v1752 = vpop.permute.xlu0 %1751
        %1754 = vset.pattern.permute.xlu0 2
        %1755 = vperm.xlu0 %1754, %v1604
        %v1756 = vpop.permute.xlu0 %1755
        %1758 = vset.pattern.permute.xlu0 2
        %1759 = vperm.xlu0 %1758, %v1605
        %v1760 = vpop.permute.xlu0 %1759
        %v1762 = vadd.f32 %v1734, %v1748
        %v1763 = vadd.f32 %v1735, %v1748
        %v1764 = vadd.f32 %v1736, %v1748
        %v1765 = vadd.f32 %v1737, %v1752
        %v1766 = vadd.f32 %v1738, %v1752
        %v1767 = vadd.f32 %v1739, %v1752
        %v1768 = vadd.f32 %v1740, %v1756
        %v1769 = vadd.f32 %v1741, %v1756
        %v1770 = vadd.f32 %v1742, %v1756
        %v1771 = vadd.f32 %v1743, %v1760
        %v1772 = vadd.f32 %v1744, %v1760
        %v1773 = vadd.f32 %v1745, %v1760
        %v1774 = vmax.f32 %v1762, 0.0
        %v1775 = vmax.f32 %v1763, 0.0
        %v1776 = vmax.f32 %v1764, 0.0
        %v1777 = vmax.f32 %v1765, 0.0
        %v1778 = vmax.f32 %v1766, 0.0
        %v1779 = vmax.f32 %v1767, 0.0
        %v1780 = vmax.f32 %v1768, 0.0
        %v1781 = vmax.f32 %v1769, 0.0
        %v1782 = vmax.f32 %v1770, 0.0
        %v1783 = vmax.f32 %v1771, 0.0
        %v1784 = vmax.f32 %v1772, 0.0
        %v1785 = vmax.f32 %v1773, 0.0
        %v1786 = vmul.f32 %v1774, %v313
        %v1787 = vmul.f32 %v1775, %v314
        %v1788 = vmul.f32 %v1776, %v315
        %v1789 = vmul.f32 %v1777, %v313
        %v1790 = vmul.f32 %v1778, %v314
        %v1791 = vmul.f32 %v1779, %v315
        %v1792 = vmul.f32 %v1780, %v313
        %v1793 = vmul.f32 %v1781, %v314
        %v1794 = vmul.f32 %v1782, %v315
        %v1795 = vmul.f32 %v1783, %v313
        %v1796 = vmul.f32 %v1784, %v314
        %v1797 = vmul.f32 %v1785, %v315
        %v1798 = vpack.c.bf16 %v1789, %v1786
        %v1799 = vpack.c.bf16 %v1790, %v1787
        %v1800 = vpack.c.bf16 %v1791, %v1788
        %v1801 = vpack.c.bf16 %v1795, %v1792
        %v1802 = vpack.c.bf16 %v1796, %v1793
        %v1803 = vpack.c.bf16 %v1797, %v1794
        %v1810 = vunpack.c.l.b16 %v1798
        %v1811 = vunpack.c.l.b16 %v1799
        %v1812 = vunpack.c.l.b16 %v1800
        %v1813 = vunpack.c.h.b16 %v1798
        %v1814 = vunpack.c.h.b16 %v1799
        %v1815 = vunpack.c.h.b16 %v1800
        %v1816 = vunpack.c.l.b16 %v1801
        %v1817 = vunpack.c.l.b16 %v1802
        %v1818 = vunpack.c.l.b16 %v1803
        %v1819 = vunpack.c.h.b16 %v1801
        %v1820 = vunpack.c.h.b16 %v1802
        %v1821 = vunpack.c.h.b16 %v1803
        %v1822 = vpack.c.b16 %v1811, %v1810
        %v1823 = vpack.c.b16 %v1812, %v1812
        %v1824 = vpack.c.b16 %v1814, %v1813
        %v1825 = vpack.c.b16 %v1815, %v1815
        %v1826 = vpack.c.b16 %v1817, %v1816
        %v1827 = vpack.c.b16 %v1818, %v1818
        %v1828 = vpack.c.b16 %v1820, %v1819
        %v1829 = vpack.c.b16 %v1821, %v1821
        %1838 = vst [vmem:[#allocation2 + $0x4] sm:$0xff] %v1822
        %1839 = vst [vmem:[#allocation2 + $0xc] sm:$0xf] %v1823
        %1840 = vst [vmem:[#allocation2 + $0x18] sm:$0xff] %v1824
        %1841 = vst [vmem:[#allocation2 + $0x20] sm:$0xf] %v1825
        %1842 = vst [vmem:[#allocation2 + $0x2c] sm:$0xff] %v1826
        %1843 = vst [vmem:[#allocation2 + $0x34] sm:$0xf] %v1827
        %1844 = vst [vmem:[#allocation2 + $0x40] sm:$0xff] %v1828
        %1845 = vst [vmem:[#allocation2 + $0x48] sm:$0xf] %v1829
        %v1846 = vld [vmem:[#allocation2] sm:$0xff]
        %v1847 = vld [vmem:[#allocation2 + $0x8] sm:$0xff]
        %v1848 = vld [vmem:[#allocation2 + $0x14] sm:$0xff]
        %v1849 = vld [vmem:[#allocation2 + $0x1c] sm:$0xff]
        %v1850 = vld [vmem:[#allocation2 + $0x28] sm:$0xff]
        %v1851 = vld [vmem:[#allocation2 + $0x30] sm:$0xff]
        %v1852 = vld [vmem:[#allocation2 + $0x3c] sm:$0xff]
        %v1853 = vld [vmem:[#allocation2 + $0x44] sm:$0xff]
        %1862 = vrot.lane.b32.xlu0 %v1846, 19
        %v1863 = vpop.permute.xlu0 %1862
        %1864 = vrot.lane.b32.xlu0 %v1847, 19
        %v1865 = vpop.permute.xlu0 %1864
        %1866 = vrot.lane.b32.xlu0 %v1848, 19
        %v1867 = vpop.permute.xlu0 %1866
        %1868 = vrot.lane.b32.xlu0 %v1849, 19
        %v1869 = vpop.permute.xlu0 %1868
        %1870 = vrot.lane.b32.xlu0 %v1850, 19
        %v1871 = vpop.permute.xlu0 %1870
        %1872 = vrot.lane.b32.xlu0 %v1851, 19
        %v1873 = vpop.permute.xlu0 %1872
        %1874 = vrot.lane.b32.xlu0 %v1852, 19
        %v1875 = vpop.permute.xlu0 %1874
        %1876 = vrot.lane.b32.xlu0 %v1853, 19
        %v1877 = vpop.permute.xlu0 %1876
        %v1878 = vrot.slane %v1863, 4
        %v1879 = vrot.slane %v1865, 4
        %v1880 = vrot.slane %v1867, 4
        %v1881 = vrot.slane %v1869, 4
        %v1882 = vrot.slane %v1871, 4
        %v1883 = vrot.slane %v1873, 4
        %v1884 = vrot.slane %v1875, 4
        %v1885 = vrot.slane %v1877, 4
        %v1886 = vsel %vm444, %v1878, %v1879
        %v1887 = vsel %vm446, %v1863, %v1886
        %v1888 = vsel %vm446, %v1865, %v1879
        %v1889 = vsel %vm444, %v1880, %v1881
        %v1890 = vsel %vm446, %v1867, %v1889
        %v1891 = vsel %vm446, %v1869, %v1881
        %v1892 = vsel %vm444, %v1882, %v1883
        %v1893 = vsel %vm446, %v1871, %v1892
        %v1894 = vsel %vm446, %v1873, %v1883
        %v1895 = vsel %vm444, %v1884, %v1885
        %v1896 = vsel %vm446, %v1875, %v1895
        %v1897 = vsel %vm446, %v1877, %v1885
        %1906 = vst [vmem:[#allocation3] sm:$0xff] %v1887
        %1907 = vst [vmem:[#allocation3 + $0x8] sm:$0xf] %v1888
        %1908 = vst [vmem:[#allocation3 + $0xc] sm:$0xff] %v1890
        %1909 = vst [vmem:[#allocation3 + $0x14] sm:$0xf] %v1891
        %1910 = vst [vmem:[#allocation3 + $0x18] sm:$0xff] %v1893
        %1911 = vst [vmem:[#allocation3 + $0x20] sm:$0xf] %v1894
        %1912 = vst [vmem:[#allocation3 + $0x24] sm:$0xff] %v1896
        %1913 = vst [vmem:[#allocation3 + $0x2c] sm:$0xf] %v1897
        %v1914 = vld [vmem:[#allocation2] sm:$0xff]
        %v1915 = vld [vmem:[#allocation2 + $0x8] sm:$0xff]
        %v1916 = vld [vmem:[#allocation2 + $0x14] sm:$0xff]
        %v1917 = vld [vmem:[#allocation2 + $0x1c] sm:$0xff]
        %v1918 = vld [vmem:[#allocation2 + $0x28] sm:$0xff]
        %v1919 = vld [vmem:[#allocation2 + $0x30] sm:$0xff]
        %v1920 = vld [vmem:[#allocation2 + $0x3c] sm:$0xff]
        %v1921 = vld [vmem:[#allocation2 + $0x44] sm:$0xff]
        %1930 = vrot.lane.b32.xlu0 %v1914, 18
        %v1931 = vpop.permute.xlu0 %1930
        %1932 = vrot.lane.b32.xlu0 %v1915, 18
        %v1933 = vpop.permute.xlu0 %1932
        %1934 = vrot.lane.b32.xlu0 %v1916, 18
        %v1935 = vpop.permute.xlu0 %1934
        %1936 = vrot.lane.b32.xlu0 %v1917, 18
        %v1937 = vpop.permute.xlu0 %1936
        %1938 = vrot.lane.b32.xlu0 %v1918, 18
        %v1939 = vpop.permute.xlu0 %1938
        %1940 = vrot.lane.b32.xlu0 %v1919, 18
        %v1941 = vpop.permute.xlu0 %1940
        %1942 = vrot.lane.b32.xlu0 %v1920, 18
        %v1943 = vpop.permute.xlu0 %1942
        %1944 = vrot.lane.b32.xlu0 %v1921, 18
        %v1945 = vpop.permute.xlu0 %1944
        %v1946 = vrot.slane %v1931, 4
        %v1947 = vrot.slane %v1933, 4
        %v1948 = vrot.slane %v1935, 4
        %v1949 = vrot.slane %v1937, 4
        %v1950 = vrot.slane %v1939, 4
        %v1951 = vrot.slane %v1941, 4
        %v1952 = vrot.slane %v1943, 4
        %v1953 = vrot.slane %v1945, 4
        %v1954 = vsel %vm444, %v1946, %v1947
        %v1955 = vsel %vm515, %v1931, %v1954
        %v1956 = vsel %vm515, %v1933, %v1947
        %v1957 = vsel %vm444, %v1948, %v1949
        %v1958 = vsel %vm515, %v1935, %v1957
        %v1959 = vsel %vm515, %v1937, %v1949
        %v1960 = vsel %vm444, %v1950, %v1951
        %v1961 = vsel %vm515, %v1939, %v1960
        %v1962 = vsel %vm515, %v1941, %v1951
        %v1963 = vsel %vm444, %v1952, %v1953
        %v1964 = vsel %vm515, %v1943, %v1963
        %v1965 = vsel %vm515, %v1945, %v1953
        %1974 = vst [vmem:[#allocation3 + $0x30] sm:$0xff] %v1955
        %1975 = vst [vmem:[#allocation3 + $0x38] sm:$0xf] %v1956
        %1976 = vst [vmem:[#allocation3 + $0x3c] sm:$0xff] %v1958
        %1977 = vst [vmem:[#allocation3 + $0x44] sm:$0xf] %v1959
        %1978 = vst [vmem:[#allocation3 + $0x48] sm:$0xff] %v1961
        %1979 = vst [vmem:[#allocation3 + $0x50] sm:$0xf] %v1962
        %1980 = vst [vmem:[#allocation3 + $0x54] sm:$0xff] %v1964
        %1981 = vst [vmem:[#allocation3 + $0x5c] sm:$0xf] %v1965
        %v1982 = vld [vmem:[#allocation2] sm:$0xff]
        %v1983 = vld [vmem:[#allocation2 + $0x8] sm:$0xff]
        %v1984 = vld [vmem:[#allocation2 + $0x14] sm:$0xff]
        %v1985 = vld [vmem:[#allocation2 + $0x1c] sm:$0xff]
        %v1986 = vld [vmem:[#allocation2 + $0x28] sm:$0xff]
        %v1987 = vld [vmem:[#allocation2 + $0x30] sm:$0xff]
        %v1988 = vld [vmem:[#allocation2 + $0x3c] sm:$0xff]
        %v1989 = vld [vmem:[#allocation2 + $0x44] sm:$0xff]
        %1998 = vrot.lane.b32.xlu0 %v1982, 17
        %v1999 = vpop.permute.xlu0 %1998
        %2000 = vrot.lane.b32.xlu0 %v1983, 17
        %v2001 = vpop.permute.xlu0 %2000
        %2002 = vrot.lane.b32.xlu0 %v1984, 17
        %v2003 = vpop.permute.xlu0 %2002
        %2004 = vrot.lane.b32.xlu0 %v1985, 17
        %v2005 = vpop.permute.xlu0 %2004
        %2006 = vrot.lane.b32.xlu0 %v1986, 17
        %v2007 = vpop.permute.xlu0 %2006
        %2008 = vrot.lane.b32.xlu0 %v1987, 17
        %v2009 = vpop.permute.xlu0 %2008
        %2010 = vrot.lane.b32.xlu0 %v1988, 17
        %v2011 = vpop.permute.xlu0 %2010
        %2012 = vrot.lane.b32.xlu0 %v1989, 17
        %v2013 = vpop.permute.xlu0 %2012
        %v2014 = vrot.slane %v1999, 4
        %v2015 = vrot.slane %v2001, 4
        %v2016 = vrot.slane %v2003, 4
        %v2017 = vrot.slane %v2005, 4
        %v2018 = vrot.slane %v2007, 4
        %v2019 = vrot.slane %v2009, 4
        %v2020 = vrot.slane %v2011, 4
        %v2021 = vrot.slane %v2013, 4
        %v2022 = vsel %vm444, %v2014, %v2015
        %v2023 = vsel %vm584, %v1999, %v2022
        %v2024 = vsel %vm584, %v2001, %v2015
        %v2025 = vsel %vm444, %v2016, %v2017
        %v2026 = vsel %vm584, %v2003, %v2025
        %v2027 = vsel %vm584, %v2005, %v2017
        %v2028 = vsel %vm444, %v2018, %v2019
        %v2029 = vsel %vm584, %v2007, %v2028
        %v2030 = vsel %vm584, %v2009, %v2019
        %v2031 = vsel %vm444, %v2020, %v2021
        %v2032 = vsel %vm584, %v2011, %v2031
        %v2033 = vsel %vm584, %v2013, %v2021
        %2042 = vst [vmem:[#allocation3 + $0x60] sm:$0xff] %v2023
        %2043 = vst [vmem:[#allocation3 + $0x68] sm:$0xf] %v2024
        %2044 = vst [vmem:[#allocation3 + $0x6c] sm:$0xff] %v2026
        %2045 = vst [vmem:[#allocation3 + $0x74] sm:$0xf] %v2027
        %2046 = vst [vmem:[#allocation3 + $0x78] sm:$0xff] %v2029
        %2047 = vst [vmem:[#allocation3 + $0x80] sm:$0xf] %v2030
        %2048 = vst [vmem:[#allocation3 + $0x84] sm:$0xff] %v2032
        %2049 = vst [vmem:[#allocation3 + $0x8c] sm:$0xf] %v2033
        %v2050 = vld [vmem:[#allocation2] sm:$0xff]
        %v2051 = vld [vmem:[#allocation2 + $0x8] sm:$0xff]
        %v2052 = vld [vmem:[#allocation2 + $0x14] sm:$0xff]
        %v2053 = vld [vmem:[#allocation2 + $0x1c] sm:$0xff]
        %v2054 = vld [vmem:[#allocation2 + $0x28] sm:$0xff]
        %v2055 = vld [vmem:[#allocation2 + $0x30] sm:$0xff]
        %v2056 = vld [vmem:[#allocation2 + $0x3c] sm:$0xff]
        %v2057 = vld [vmem:[#allocation2 + $0x44] sm:$0xff]
        %2066 = vrot.lane.b32.xlu0 %v2050, 1
        %v2067 = vpop.permute.xlu0 %2066
        %2068 = vrot.lane.b32.xlu0 %v2051, 1
        %v2069 = vpop.permute.xlu0 %2068
        %2070 = vrot.lane.b32.xlu0 %v2052, 1
        %v2071 = vpop.permute.xlu0 %2070
        %2072 = vrot.lane.b32.xlu0 %v2053, 1
        %v2073 = vpop.permute.xlu0 %2072
        %2074 = vrot.lane.b32.xlu0 %v2054, 1
        %v2075 = vpop.permute.xlu0 %2074
        %2076 = vrot.lane.b32.xlu0 %v2055, 1
        %v2077 = vpop.permute.xlu0 %2076
        %2078 = vrot.lane.b32.xlu0 %v2056, 1
        %v2079 = vpop.permute.xlu0 %2078
        %2080 = vrot.lane.b32.xlu0 %v2057, 1
        %v2081 = vpop.permute.xlu0 %2080
        %v2082 = vrot.slane %v2067, 4
        %v2083 = vrot.slane %v2069, 4
        %v2084 = vrot.slane %v2071, 4
        %v2085 = vrot.slane %v2073, 4
        %v2086 = vrot.slane %v2075, 4
        %v2087 = vrot.slane %v2077, 4
        %v2088 = vrot.slane %v2079, 4
        %v2089 = vrot.slane %v2081, 4
        %v2090 = vsel %vm444, %v2082, %v2083
        %v2091 = vsel %vm653, %v2067, %v2090
        %v2092 = vsel %vm653, %v2069, %v2083
        %v2093 = vsel %vm444, %v2084, %v2085
        %v2094 = vsel %vm653, %v2071, %v2093
        %v2095 = vsel %vm653, %v2073, %v2085
        %v2096 = vsel %vm444, %v2086, %v2087
        %v2097 = vsel %vm653, %v2075, %v2096
        %v2098 = vsel %vm653, %v2077, %v2087
        %v2099 = vsel %vm444, %v2088, %v2089
        %v2100 = vsel %vm653, %v2079, %v2099
        %v2101 = vsel %vm653, %v2081, %v2089
        %2110 = vst [vmem:[#allocation3 + $0x90] sm:$0xff] %v2091
        %2111 = vst [vmem:[#allocation3 + $0x98] sm:$0xf] %v2092
        %2112 = vst [vmem:[#allocation3 + $0x9c] sm:$0xff] %v2094
        %2113 = vst [vmem:[#allocation3 + $0xa4] sm:$0xf] %v2095
        %2114 = vst [vmem:[#allocation3 + $0xa8] sm:$0xff] %v2097
        %2115 = vst [vmem:[#allocation3 + $0xb0] sm:$0xf] %v2098
        %2116 = vst [vmem:[#allocation3 + $0xb4] sm:$0xff] %v2100
        %2117 = vst [vmem:[#allocation3 + $0xbc] sm:$0xf] %v2101
        %v2118 = vld [vmem:[#allocation2 + $0x4] sm:$0xff]
        %v2119 = vld [vmem:[#allocation2 + $0xc] sm:$0xf]
        %v2120 = vld [vmem:[#allocation2 + $0x18] sm:$0xff]
        %v2121 = vld [vmem:[#allocation2 + $0x20] sm:$0xf]
        %v2122 = vld [vmem:[#allocation2 + $0x2c] sm:$0xff]
        %v2123 = vld [vmem:[#allocation2 + $0x34] sm:$0xf]
        %v2124 = vld [vmem:[#allocation2 + $0x40] sm:$0xff]
        %v2125 = vld [vmem:[#allocation2 + $0x48] sm:$0xf]
        %2126 = vst [vmem:[#allocation3 + $0xc0] sm:$0xff] %v2118
        %2127 = vst [vmem:[#allocation3 + $0xc8] sm:$0xf] %v2119
        %2128 = vst [vmem:[#allocation3 + $0xcc] sm:$0xff] %v2120
        %2129 = vst [vmem:[#allocation3 + $0xd4] sm:$0xf] %v2121
        %2130 = vst [vmem:[#allocation3 + $0xd8] sm:$0xff] %v2122
        %2131 = vst [vmem:[#allocation3 + $0xe0] sm:$0xf] %v2123
        %2132 = vst [vmem:[#allocation3 + $0xe4] sm:$0xff] %v2124
        %2133 = vst [vmem:[#allocation3 + $0xec] sm:$0xf] %v2125
        %v2134 = vld [vmem:[#allocation2 + $0x4] sm:$0xff]
        %v2135 = vld [vmem:[#allocation2 + $0xc] sm:$0xff]
        %v2136 = vld [vmem:[#allocation2 + $0x18] sm:$0xff]
        %v2137 = vld [vmem:[#allocation2 + $0x20] sm:$0xff]
        %v2138 = vld [vmem:[#allocation2 + $0x2c] sm:$0xff]
        %v2139 = vld [vmem:[#allocation2 + $0x34] sm:$0xff]
        %v2140 = vld [vmem:[#allocation2 + $0x40] sm:$0xff]
        %v2141 = vld [vmem:[#allocation2 + $0x48] sm:$0xff]
        %2150 = vrot.lane.b32.xlu0 %v2134, 127
        %v2151 = vpop.permute.xlu0 %2150
        %2152 = vrot.lane.b32.xlu0 %v2135, 127
        %v2153 = vpop.permute.xlu0 %2152
        %2154 = vrot.lane.b32.xlu0 %v2136, 127
        %v2155 = vpop.permute.xlu0 %2154
        %2156 = vrot.lane.b32.xlu0 %v2137, 127
        %v2157 = vpop.permute.xlu0 %2156
        %2158 = vrot.lane.b32.xlu0 %v2138, 127
        %v2159 = vpop.permute.xlu0 %2158
        %2160 = vrot.lane.b32.xlu0 %v2139, 127
        %v2161 = vpop.permute.xlu0 %2160
        %2162 = vrot.lane.b32.xlu0 %v2140, 127
        %v2163 = vpop.permute.xlu0 %2162
        %2164 = vrot.lane.b32.xlu0 %v2141, 127
        %v2165 = vpop.permute.xlu0 %2164
        %v2166 = vrot.slane %v2151, 4
        %v2167 = vrot.slane %v2153, 4
        %v2168 = vrot.slane %v2155, 4
        %v2169 = vrot.slane %v2157, 4
        %v2170 = vrot.slane %v2159, 4
        %v2171 = vrot.slane %v2161, 4
        %v2172 = vrot.slane %v2163, 4
        %v2173 = vrot.slane %v2165, 4
        %v2174 = vsel %vm444, %v2166, %v2167
        %v2175 = vsel %vm738, %v2151, %v2174
        %v2176 = vsel %vm738, %v2153, %v2167
        %v2177 = vsel %vm444, %v2168, %v2169
        %v2178 = vsel %vm738, %v2155, %v2177
        %v2179 = vsel %vm738, %v2157, %v2169
        %v2180 = vsel %vm444, %v2170, %v2171
        %v2181 = vsel %vm738, %v2159, %v2180
        %v2182 = vsel %vm738, %v2161, %v2171
        %v2183 = vsel %vm444, %v2172, %v2173
        %v2184 = vsel %vm738, %v2163, %v2183
        %v2185 = vsel %vm738, %v2165, %v2173
        %2194 = vst [vmem:[#allocation3 + $0xf0] sm:$0xff] %v2175
        %2195 = vst [vmem:[#allocation3 + $0xf8] sm:$0xf] %v2176
        %2196 = vst [vmem:[#allocation3 + $0xfc] sm:$0xff] %v2178
        %2197 = vst [vmem:[#allocation3 + $0x104] sm:$0xf] %v2179
        %2198 = vst [vmem:[#allocation3 + $0x108] sm:$0xff] %v2181
        %2199 = vst [vmem:[#allocation3 + $0x110] sm:$0xf] %v2182
        %2200 = vst [vmem:[#allocation3 + $0x114] sm:$0xff] %v2184
        %2201 = vst [vmem:[#allocation3 + $0x11c] sm:$0xf] %v2185
        %v2202 = vld [vmem:[#allocation2 + $0x4] sm:$0xff]
        %v2203 = vld [vmem:[#allocation2 + $0xc] sm:$0xff]
        %v2204 = vld [vmem:[#allocation2 + $0x18] sm:$0xff]
        %v2205 = vld [vmem:[#allocation2 + $0x20] sm:$0xff]
        %v2206 = vld [vmem:[#allocation2 + $0x2c] sm:$0xff]
        %v2207 = vld [vmem:[#allocation2 + $0x34] sm:$0xff]
        %v2208 = vld [vmem:[#allocation2 + $0x40] sm:$0xff]
        %v2209 = vld [vmem:[#allocation2 + $0x48] sm:$0xff]
        %2218 = vrot.lane.b32.xlu0 %v2202, 111
        %v2219 = vpop.permute.xlu0 %2218
        %2220 = vrot.lane.b32.xlu0 %v2203, 111
        %v2221 = vpop.permute.xlu0 %2220
        %2222 = vrot.lane.b32.xlu0 %v2204, 111
        %v2223 = vpop.permute.xlu0 %2222
        %2224 = vrot.lane.b32.xlu0 %v2205, 111
        %v2225 = vpop.permute.xlu0 %2224
        %2226 = vrot.lane.b32.xlu0 %v2206, 111
        %v2227 = vpop.permute.xlu0 %2226
        %2228 = vrot.lane.b32.xlu0 %v2207, 111
        %v2229 = vpop.permute.xlu0 %2228
        %2230 = vrot.lane.b32.xlu0 %v2208, 111
        %v2231 = vpop.permute.xlu0 %2230
        %2232 = vrot.lane.b32.xlu0 %v2209, 111
        %v2233 = vpop.permute.xlu0 %2232
        %v2234 = vrot.slane %v2219, 4
        %v2235 = vrot.slane %v2221, 4
        %v2236 = vrot.slane %v2223, 4
        %v2237 = vrot.slane %v2225, 4
        %v2238 = vrot.slane %v2227, 4
        %v2239 = vrot.slane %v2229, 4
        %v2240 = vrot.slane %v2231, 4
        %v2241 = vrot.slane %v2233, 4
        %v2242 = vsel %vm444, %v2234, %v2235
        %v2243 = vsel %vm807, %v2219, %v2242
        %v2244 = vsel %vm807, %v2221, %v2235
        %v2245 = vsel %vm444, %v2236, %v2237
        %v2246 = vsel %vm807, %v2223, %v2245
        %v2247 = vsel %vm807, %v2225, %v2237
        %v2248 = vsel %vm444, %v2238, %v2239
        %v2249 = vsel %vm807, %v2227, %v2248
        %v2250 = vsel %vm807, %v2229, %v2239
        %v2251 = vsel %vm444, %v2240, %v2241
        %v2252 = vsel %vm807, %v2231, %v2251
        %v2253 = vsel %vm807, %v2233, %v2241
        %2262 = vst [vmem:[#allocation3 + $0x120] sm:$0xff] %v2243
        %2263 = vst [vmem:[#allocation3 + $0x128] sm:$0xf] %v2244
        %2264 = vst [vmem:[#allocation3 + $0x12c] sm:$0xff] %v2246
        %2265 = vst [vmem:[#allocation3 + $0x134] sm:$0xf] %v2247
        %2266 = vst [vmem:[#allocation3 + $0x138] sm:$0xff] %v2249
        %2267 = vst [vmem:[#allocation3 + $0x140] sm:$0xf] %v2250
        %2268 = vst [vmem:[#allocation3 + $0x144] sm:$0xff] %v2252
        %2269 = vst [vmem:[#allocation3 + $0x14c] sm:$0xf] %v2253
        %v2270 = vld [vmem:[#allocation2 + $0x4] sm:$0xff]
        %v2271 = vld [vmem:[#allocation2 + $0xc] sm:$0xff]
        %v2272 = vld [vmem:[#allocation2 + $0x18] sm:$0xff]
        %v2273 = vld [vmem:[#allocation2 + $0x20] sm:$0xff]
        %v2274 = vld [vmem:[#allocation2 + $0x2c] sm:$0xff]
        %v2275 = vld [vmem:[#allocation2 + $0x34] sm:$0xff]
        %v2276 = vld [vmem:[#allocation2 + $0x40] sm:$0xff]
        %v2277 = vld [vmem:[#allocation2 + $0x48] sm:$0xff]
        %2286 = vrot.lane.b32.xlu0 %v2270, 110
        %v2287 = vpop.permute.xlu0 %2286
        %2288 = vrot.lane.b32.xlu0 %v2271, 110
        %v2289 = vpop.permute.xlu0 %2288
        %2290 = vrot.lane.b32.xlu0 %v2272, 110
        %v2291 = vpop.permute.xlu0 %2290
        %2292 = vrot.lane.b32.xlu0 %v2273, 110
        %v2293 = vpop.permute.xlu0 %2292
        %2294 = vrot.lane.b32.xlu0 %v2274, 110
        %v2295 = vpop.permute.xlu0 %2294
        %2296 = vrot.lane.b32.xlu0 %v2275, 110
        %v2297 = vpop.permute.xlu0 %2296
        %2298 = vrot.lane.b32.xlu0 %v2276, 110
        %v2299 = vpop.permute.xlu0 %2298
        %2300 = vrot.lane.b32.xlu0 %v2277, 110
        %v2301 = vpop.permute.xlu0 %2300
        %v2302 = vrot.slane %v2287, 4
        %v2303 = vrot.slane %v2289, 4
        %v2304 = vrot.slane %v2291, 4
        %v2305 = vrot.slane %v2293, 4
        %v2306 = vrot.slane %v2295, 4
        %v2307 = vrot.slane %v2297, 4
        %v2308 = vrot.slane %v2299, 4
        %v2309 = vrot.slane %v2301, 4
        %v2310 = vsel %vm444, %v2302, %v2303
        %v2311 = vsel %vm876, %v2287, %v2310
        %v2312 = vsel %vm876, %v2289, %v2303
        %v2313 = vsel %vm444, %v2304, %v2305
        %v2314 = vsel %vm876, %v2291, %v2313
        %v2315 = vsel %vm876, %v2293, %v2305
        %v2316 = vsel %vm444, %v2306, %v2307
        %v2317 = vsel %vm876, %v2295, %v2316
        %v2318 = vsel %vm876, %v2297, %v2307
        %v2319 = vsel %vm444, %v2308, %v2309
        %v2320 = vsel %vm876, %v2299, %v2319
        %v2321 = vsel %vm876, %v2301, %v2309
        %2330 = vst [vmem:[#allocation3 + $0x150] sm:$0xff] %v2311
        %2331 = vst [vmem:[#allocation3 + $0x158] sm:$0xf] %v2312
        %2332 = vst [vmem:[#allocation3 + $0x15c] sm:$0xff] %v2314
        %2333 = vst [vmem:[#allocation3 + $0x164] sm:$0xf] %v2315
        %2334 = vst [vmem:[#allocation3 + $0x168] sm:$0xff] %v2317
        %2335 = vst [vmem:[#allocation3 + $0x170] sm:$0xf] %v2318
        %2336 = vst [vmem:[#allocation3 + $0x174] sm:$0xff] %v2320
        %2337 = vst [vmem:[#allocation3 + $0x17c] sm:$0xf] %v2321
        %v2338 = vld [vmem:[#allocation2 + $0x4] sm:$0xff]
        %v2339 = vld [vmem:[#allocation2 + $0xc] sm:$0xff]
        %v2340 = vld [vmem:[#allocation2 + $0x18] sm:$0xff]
        %v2341 = vld [vmem:[#allocation2 + $0x20] sm:$0xff]
        %v2342 = vld [vmem:[#allocation2 + $0x2c] sm:$0xff]
        %v2343 = vld [vmem:[#allocation2 + $0x34] sm:$0xff]
        %v2344 = vld [vmem:[#allocation2 + $0x40] sm:$0xff]
        %v2345 = vld [vmem:[#allocation2 + $0x48] sm:$0xff]
        %2354 = vrot.lane.b32.xlu0 %v2338, 109
        %v2355 = vpop.permute.xlu0 %2354
        %2356 = vrot.lane.b32.xlu0 %v2339, 109
        %v2357 = vpop.permute.xlu0 %2356
        %2358 = vrot.lane.b32.xlu0 %v2340, 109
        %v2359 = vpop.permute.xlu0 %2358
        %2360 = vrot.lane.b32.xlu0 %v2341, 109
        %v2361 = vpop.permute.xlu0 %2360
        %2362 = vrot.lane.b32.xlu0 %v2342, 109
        %v2363 = vpop.permute.xlu0 %2362
        %2364 = vrot.lane.b32.xlu0 %v2343, 109
        %v2365 = vpop.permute.xlu0 %2364
        %2366 = vrot.lane.b32.xlu0 %v2344, 109
        %v2367 = vpop.permute.xlu0 %2366
        %2368 = vrot.lane.b32.xlu0 %v2345, 109
        %v2369 = vpop.permute.xlu0 %2368
        %v2370 = vrot.slane %v2355, 4
        %v2371 = vrot.slane %v2357, 4
        %v2372 = vrot.slane %v2359, 4
        %v2373 = vrot.slane %v2361, 4
        %v2374 = vrot.slane %v2363, 4
        %v2375 = vrot.slane %v2365, 4
        %v2376 = vrot.slane %v2367, 4
        %v2377 = vrot.slane %v2369, 4
        %v2378 = vsel %vm444, %v2370, %v2371
        %v2379 = vsel %vm945, %v2355, %v2378
        %v2380 = vsel %vm945, %v2357, %v2371
        %v2381 = vsel %vm444, %v2372, %v2373
        %v2382 = vsel %vm945, %v2359, %v2381
        %v2383 = vsel %vm945, %v2361, %v2373
        %v2384 = vsel %vm444, %v2374, %v2375
        %v2385 = vsel %vm945, %v2363, %v2384
        %v2386 = vsel %vm945, %v2365, %v2375
        %v2387 = vsel %vm444, %v2376, %v2377
        %v2388 = vsel %vm945, %v2367, %v2387
        %v2389 = vsel %vm945, %v2369, %v2377
        %2398 = vst [vmem:[#allocation3 + $0x180] sm:$0xff] %v2379
        %2399 = vst [vmem:[#allocation3 + $0x188] sm:$0xf] %v2380
        %2400 = vst [vmem:[#allocation3 + $0x18c] sm:$0xff] %v2382
        %2401 = vst [vmem:[#allocation3 + $0x194] sm:$0xf] %v2383
        %2402 = vst [vmem:[#allocation3 + $0x198] sm:$0xff] %v2385
        %2403 = vst [vmem:[#allocation3 + $0x1a0] sm:$0xf] %v2386
        %2404 = vst [vmem:[#allocation3 + $0x1a4] sm:$0xff] %v2388
        %2405 = vst [vmem:[#allocation3 + $0x1ac] sm:$0xf] %v2389
        %s2406 = scalar_lea.vmem [#allocation7], 48
        %v2407 = vld [vmem:[%s2406] sm:$0xff]
        %v2408 = vld [vmem:[%s2406 + $0x8] sm:$0xf]
        %v2409 = vld [vmem:[%s2406 + $0xc] sm:$0xff]
        %v2410 = vld [vmem:[%s2406 + $0x14] sm:$0xf]
        %v2411 = vld [vmem:[%s2406 + $0x18] sm:$0xff]
        %v2412 = vld [vmem:[%s2406 + $0x20] sm:$0xf]
        %v2413 = vld [vmem:[%s2406 + $0x24] sm:$0xff]
        %v2414 = vld [vmem:[%s2406 + $0x2c] sm:$0xf]
        %v2415 = vld [vmem:[#allocation3] sm:$0xff]
        %v2416 = vld [vmem:[#allocation3 + $0x8] sm:$0xf]
        %v2417 = vld [vmem:[#allocation3 + $0xc] sm:$0xff]
        %v2418 = vld [vmem:[#allocation3 + $0x14] sm:$0xf]
        %v2419 = vld [vmem:[#allocation3 + $0x18] sm:$0xff]
        %v2420 = vld [vmem:[#allocation3 + $0x20] sm:$0xf]
        %v2421 = vld [vmem:[#allocation3 + $0x24] sm:$0xff]
        %v2422 = vld [vmem:[#allocation3 + $0x2c] sm:$0xf]
        %v2423 = vld [vmem:[#allocation3 + $0x30] sm:$0xff]
        %v2424 = vld [vmem:[#allocation3 + $0x38] sm:$0xf]
        %v2425 = vld [vmem:[#allocation3 + $0x3c] sm:$0xff]
        %v2426 = vld [vmem:[#allocation3 + $0x44] sm:$0xf]
        %v2427 = vld [vmem:[#allocation3 + $0x48] sm:$0xff]
        %v2428 = vld [vmem:[#allocation3 + $0x50] sm:$0xf]
        %v2429 = vld [vmem:[#allocation3 + $0x54] sm:$0xff]
        %v2430 = vld [vmem:[#allocation3 + $0x5c] sm:$0xf]
        %v2431 = vld [vmem:[#allocation3 + $0x60] sm:$0xff]
        %v2432 = vld [vmem:[#allocation3 + $0x68] sm:$0xf]
        %v2433 = vld [vmem:[#allocation3 + $0x6c] sm:$0xff]
        %v2434 = vld [vmem:[#allocation3 + $0x74] sm:$0xf]
        %v2435 = vld [vmem:[#allocation3 + $0x78] sm:$0xff]
        %v2436 = vld [vmem:[#allocation3 + $0x80] sm:$0xf]
        %v2437 = vld [vmem:[#allocation3 + $0x84] sm:$0xff]
        %v2438 = vld [vmem:[#allocation3 + $0x8c] sm:$0xf]
        %v2439 = vld [vmem:[#allocation3 + $0x90] sm:$0xff]
        %v2440 = vld [vmem:[#allocation3 + $0x98] sm:$0xf]
        %v2441 = vld [vmem:[#allocation3 + $0x9c] sm:$0xff]
        %v2442 = vld [vmem:[#allocation3 + $0xa4] sm:$0xf]
        %v2443 = vld [vmem:[#allocation3 + $0xa8] sm:$0xff]
        %v2444 = vld [vmem:[#allocation3 + $0xb0] sm:$0xf]
        %v2445 = vld [vmem:[#allocation3 + $0xb4] sm:$0xff]
        %v2446 = vld [vmem:[#allocation3 + $0xbc] sm:$0xf]
        %v2447 = vld [vmem:[#allocation3 + $0xc0] sm:$0xff]
        %v2448 = vld [vmem:[#allocation3 + $0xc8] sm:$0xf]
        %v2449 = vld [vmem:[#allocation3 + $0xcc] sm:$0xff]
        %v2450 = vld [vmem:[#allocation3 + $0xd4] sm:$0xf]
        %v2451 = vld [vmem:[#allocation3 + $0xd8] sm:$0xff]
        %v2452 = vld [vmem:[#allocation3 + $0xe0] sm:$0xf]
        %v2453 = vld [vmem:[#allocation3 + $0xe4] sm:$0xff]
        %v2454 = vld [vmem:[#allocation3 + $0xec] sm:$0xf]
        %v2455 = vld [vmem:[#allocation3 + $0xf0] sm:$0xff]
        %v2456 = vld [vmem:[#allocation3 + $0xf8] sm:$0xf]
        %v2457 = vld [vmem:[#allocation3 + $0xfc] sm:$0xff]
        %v2458 = vld [vmem:[#allocation3 + $0x104] sm:$0xf]
        %v2459 = vld [vmem:[#allocation3 + $0x108] sm:$0xff]
        %v2460 = vld [vmem:[#allocation3 + $0x110] sm:$0xf]
        %v2461 = vld [vmem:[#allocation3 + $0x114] sm:$0xff]
        %v2462 = vld [vmem:[#allocation3 + $0x11c] sm:$0xf]
        %v2463 = vld [vmem:[#allocation3 + $0x120] sm:$0xff]
        %v2464 = vld [vmem:[#allocation3 + $0x128] sm:$0xf]
        %v2465 = vld [vmem:[#allocation3 + $0x12c] sm:$0xff]
        %v2466 = vld [vmem:[#allocation3 + $0x134] sm:$0xf]
        %v2467 = vld [vmem:[#allocation3 + $0x138] sm:$0xff]
        %v2468 = vld [vmem:[#allocation3 + $0x140] sm:$0xf]
        %v2469 = vld [vmem:[#allocation3 + $0x144] sm:$0xff]
        %v2470 = vld [vmem:[#allocation3 + $0x14c] sm:$0xf]
        %v2471 = vld [vmem:[#allocation3 + $0x150] sm:$0xff]
        %v2472 = vld [vmem:[#allocation3 + $0x158] sm:$0xf]
        %v2473 = vld [vmem:[#allocation3 + $0x15c] sm:$0xff]
        %v2474 = vld [vmem:[#allocation3 + $0x164] sm:$0xf]
        %v2475 = vld [vmem:[#allocation3 + $0x168] sm:$0xff]
        %v2476 = vld [vmem:[#allocation3 + $0x170] sm:$0xf]
        %v2477 = vld [vmem:[#allocation3 + $0x174] sm:$0xff]
        %v2478 = vld [vmem:[#allocation3 + $0x17c] sm:$0xf]
        %v2479 = vld [vmem:[#allocation3 + $0x180] sm:$0xff]
        %v2480 = vld [vmem:[#allocation3 + $0x188] sm:$0xf]
        %v2481 = vld [vmem:[#allocation3 + $0x18c] sm:$0xff]
        %v2482 = vld [vmem:[#allocation3 + $0x194] sm:$0xf]
        %v2483 = vld [vmem:[#allocation3 + $0x198] sm:$0xff]
        %v2484 = vld [vmem:[#allocation3 + $0x1a0] sm:$0xf]
        %v2485 = vld [vmem:[#allocation3 + $0x1a4] sm:$0xff]
        %v2486 = vld [vmem:[#allocation3 + $0x1ac] sm:$0xf]
        %2487 = vset.pattern.permute.xlu0 3
        %2488 = vperm.xlu0 %2487, %v1602
        %v2489 = vpop.permute.xlu0 %2488
        %2491 = vset.pattern.permute.xlu0 3
        %2492 = vperm.xlu0 %2491, %v1603
        %v2493 = vpop.permute.xlu0 %2492
        %2495 = vset.pattern.permute.xlu0 3
        %2496 = vperm.xlu0 %2495, %v1604
        %v2497 = vpop.permute.xlu0 %2496
        %2499 = vset.pattern.permute.xlu0 3
        %2500 = vperm.xlu0 %2499, %v1605
        %v2501 = vpop.permute.xlu0 %2500
        %v2511 = vunpack.c.l.b16 %v2407
        %v2512 = vunpack.c.h.b16 %v2407
        %v2513 = vunpack.c.l.b16 %v2408
        %v2514 = vunpack.c.l.b16 %v2409
        %v2515 = vunpack.c.h.b16 %v2409
        %v2516 = vunpack.c.l.b16 %v2410
        %v2517 = vunpack.c.l.b16 %v2411
        %v2518 = vunpack.c.h.b16 %v2411
        %v2519 = vunpack.c.l.b16 %v2412
        %v2520 = vunpack.c.l.b16 %v2413
        %v2521 = vunpack.c.h.b16 %v2413
        %v2522 = vunpack.c.l.b16 %v2414
        %v2523 = vpack.c.b16 %v2514, %v2511
        %v2524 = vpack.c.b16 %v2515, %v2512
        %v2525 = vpack.c.b16 %v2516, %v2513
        %v2526 = vpack.c.b16 %v2520, %v2517
        %v2527 = vpack.c.b16 %v2521, %v2518
        %v2528 = vpack.c.b16 %v2522, %v2519
        %v2605 = vunpack.c.l.b16 %v2415
        %v2606 = vunpack.c.h.b16 %v2415
        %v2607 = vunpack.c.l.b16 %v2416
        %v2608 = vunpack.c.l.b16 %v2417
        %v2609 = vunpack.c.h.b16 %v2417
        %v2610 = vunpack.c.l.b16 %v2418
        %v2611 = vunpack.c.l.b16 %v2419
        %v2612 = vunpack.c.h.b16 %v2419
        %v2613 = vunpack.c.l.b16 %v2420
        %v2614 = vunpack.c.l.b16 %v2421
        %v2615 = vunpack.c.h.b16 %v2421
        %v2616 = vunpack.c.l.b16 %v2422
        %v2617 = vunpack.c.l.b16 %v2423
        %v2618 = vunpack.c.h.b16 %v2423
        %v2619 = vunpack.c.l.b16 %v2424
        %v2620 = vunpack.c.l.b16 %v2425
        %v2621 = vunpack.c.h.b16 %v2425
        %v2622 = vunpack.c.l.b16 %v2426
        %v2623 = vunpack.c.l.b16 %v2427
        %v2624 = vunpack.c.h.b16 %v2427
        %v2625 = vunpack.c.l.b16 %v2428
        %v2626 = vunpack.c.l.b16 %v2429
        %v2627 = vunpack.c.h.b16 %v2429
        %v2628 = vunpack.c.l.b16 %v2430
        %v2629 = vunpack.c.l.b16 %v2431
        %v2630 = vunpack.c.h.b16 %v2431
        %v2631 = vunpack.c.l.b16 %v2432
        %v2632 = vunpack.c.l.b16 %v2433
        %v2633 = vunpack.c.h.b16 %v2433
        %v2634 = vunpack.c.l.b16 %v2434
        %v2635 = vunpack.c.l.b16 %v2435
        %v2636 = vunpack.c.h.b16 %v2435
        %v2637 = vunpack.c.l.b16 %v2436
        %v2638 = vunpack.c.l.b16 %v2437
        %v2639 = vunpack.c.h.b16 %v2437
        %v2640 = vunpack.c.l.b16 %v2438
        %v2641 = vunpack.c.l.b16 %v2439
        %v2642 = vunpack.c.h.b16 %v2439
        %v2643 = vunpack.c.l.b16 %v2440
        %v2644 = vunpack.c.l.b16 %v2441
        %v2645 = vunpack.c.h.b16 %v2441
        %v2646 = vunpack.c.l.b16 %v2442
        %v2647 = vunpack.c.l.b16 %v2443
        %v2648 = vunpack.c.h.b16 %v2443
        %v2649 = vunpack.c.l.b16 %v2444
        %v2650 = vunpack.c.l.b16 %v2445
        %v2651 = vunpack.c.h.b16 %v2445
        %v2652 = vunpack.c.l.b16 %v2446
        %v2653 = vunpack.c.l.b16 %v2447
        %v2654 = vunpack.c.h.b16 %v2447
        %v2655 = vunpack.c.l.b16 %v2448
        %v2656 = vunpack.c.l.b16 %v2449
        %v2657 = vunpack.c.h.b16 %v2449
        %v2658 = vunpack.c.l.b16 %v2450
        %v2659 = vunpack.c.l.b16 %v2451
        %v2660 = vunpack.c.h.b16 %v2451
        %v2661 = vunpack.c.l.b16 %v2452
        %v2662 = vunpack.c.l.b16 %v2453
        %v2663 = vunpack.c.h.b16 %v2453
        %v2664 = vunpack.c.l.b16 %v2454
        %v2665 = vunpack.c.l.b16 %v2455
        %v2666 = vunpack.c.h.b16 %v2455
        %v2667 = vunpack.c.l.b16 %v2456
        %v2668 = vunpack.c.l.b16 %v2457
        %v2669 = vunpack.c.h.b16 %v2457
        %v2670 = vunpack.c.l.b16 %v2458
        %v2671 = vunpack.c.l.b16 %v2459
        %v2672 = vunpack.c.h.b16 %v2459
        %v2673 = vunpack.c.l.b16 %v2460
        %v2674 = vunpack.c.l.b16 %v2461
        %v2675 = vunpack.c.h.b16 %v2461
        %v2676 = vunpack.c.l.b16 %v2462
        %v2677 = vunpack.c.l.b16 %v2463
        %v2678 = vunpack.c.h.b16 %v2463
        %v2679 = vunpack.c.l.b16 %v2464
        %v2680 = vunpack.c.l.b16 %v2465
        %v2681 = vunpack.c.h.b16 %v2465
        %v2682 = vunpack.c.l.b16 %v2466
        %v2683 = vunpack.c.l.b16 %v2467
        %v2684 = vunpack.c.h.b16 %v2467
        %v2685 = vunpack.c.l.b16 %v2468
        %v2686 = vunpack.c.l.b16 %v2469
        %v2687 = vunpack.c.h.b16 %v2469
        %v2688 = vunpack.c.l.b16 %v2470
        %v2689 = vunpack.c.l.b16 %v2471
        %v2690 = vunpack.c.h.b16 %v2471
        %v2691 = vunpack.c.l.b16 %v2472
        %v2692 = vunpack.c.l.b16 %v2473
        %v2693 = vunpack.c.h.b16 %v2473
        %v2694 = vunpack.c.l.b16 %v2474
        %v2695 = vunpack.c.l.b16 %v2475
        %v2696 = vunpack.c.h.b16 %v2475
        %v2697 = vunpack.c.l.b16 %v2476
        %v2698 = vunpack.c.l.b16 %v2477
        %v2699 = vunpack.c.h.b16 %v2477
        %v2700 = vunpack.c.l.b16 %v2478
        %v2701 = vunpack.c.l.b16 %v2479
        %v2702 = vunpack.c.h.b16 %v2479
        %v2703 = vunpack.c.l.b16 %v2480
        %v2704 = vunpack.c.l.b16 %v2481
        %v2705 = vunpack.c.h.b16 %v2481
        %v2706 = vunpack.c.l.b16 %v2482
        %v2707 = vunpack.c.l.b16 %v2483
        %v2708 = vunpack.c.h.b16 %v2483
        %v2709 = vunpack.c.l.b16 %v2484
        %v2710 = vunpack.c.l.b16 %v2485
        %v2711 = vunpack.c.h.b16 %v2485
        %v2712 = vunpack.c.l.b16 %v2486
        %v2713 = vpack.c.b16 %v2608, %v2605
        %v2714 = vpack.c.b16 %v2609, %v2606
        %v2715 = vpack.c.b16 %v2610, %v2607
        %v2716 = vpack.c.b16 %v2614, %v2611
        %v2717 = vpack.c.b16 %v2615, %v2612
        %v2718 = vpack.c.b16 %v2616, %v2613
        %v2719 = vpack.c.b16 %v2620, %v2617
        %v2720 = vpack.c.b16 %v2621, %v2618
        %v2721 = vpack.c.b16 %v2622, %v2619
        %v2722 = vpack.c.b16 %v2626, %v2623
        %v2723 = vpack.c.b16 %v2627, %v2624
        %v2724 = vpack.c.b16 %v2628, %v2625
        %v2725 = vpack.c.b16 %v2632, %v2629
        %v2726 = vpack.c.b16 %v2633, %v2630
        %v2727 = vpack.c.b16 %v2634, %v2631
        %v2728 = vpack.c.b16 %v2638, %v2635
        %v2729 = vpack.c.b16 %v2639, %v2636
        %v2730 = vpack.c.b16 %v2640, %v2637
        %v2731 = vpack.c.b16 %v2644, %v2641
        %v2732 = vpack.c.b16 %v2645, %v2642
        %v2733 = vpack.c.b16 %v2646, %v2643
        %v2734 = vpack.c.b16 %v2650, %v2647
        %v2735 = vpack.c.b16 %v2651, %v2648
        %v2736 = vpack.c.b16 %v2652, %v2649
        %v2737 = vpack.c.b16 %v2656, %v2653
        %v2738 = vpack.c.b16 %v2657, %v2654
        %v2739 = vpack.c.b16 %v2658, %v2655
        %v2740 = vpack.c.b16 %v2662, %v2659
        %v2741 = vpack.c.b16 %v2663, %v2660
        %v2742 = vpack.c.b16 %v2664, %v2661
        %v2743 = vpack.c.b16 %v2668, %v2665
        %v2744 = vpack.c.b16 %v2669, %v2666
        %v2745 = vpack.c.b16 %v2670, %v2667
        %v2746 = vpack.c.b16 %v2674, %v2671
        %v2747 = vpack.c.b16 %v2675, %v2672
        %v2748 = vpack.c.b16 %v2676, %v2673
        %v2749 = vpack.c.b16 %v2680, %v2677
        %v2750 = vpack.c.b16 %v2681, %v2678
        %v2751 = vpack.c.b16 %v2682, %v2679
        %v2752 = vpack.c.b16 %v2686, %v2683
        %v2753 = vpack.c.b16 %v2687, %v2684
        %v2754 = vpack.c.b16 %v2688, %v2685
        %v2755 = vpack.c.b16 %v2692, %v2689
        %v2756 = vpack.c.b16 %v2693, %v2690
        %v2757 = vpack.c.b16 %v2694, %v2691
        %v2758 = vpack.c.b16 %v2698, %v2695
        %v2759 = vpack.c.b16 %v2699, %v2696
        %v2760 = vpack.c.b16 %v2700, %v2697
        %v2761 = vpack.c.b16 %v2704, %v2701
        %v2762 = vpack.c.b16 %v2705, %v2702
        %v2763 = vpack.c.b16 %v2706, %v2703
        %v2764 = vpack.c.b16 %v2710, %v2707
        %v2765 = vpack.c.b16 %v2711, %v2708
        %v2766 = vpack.c.b16 %v2712, %v2709
        %v2822 = vsel %vm1391, %v2525, 0
        %v2825 = vsel %vm1391, %v2528, 0
        %2827 = vmatprep.subr.bf16.mxu0 %v2735
        %2828 = vmatpush1.bf16.msra.mxu0 %v2734
        %2829 = vmatprep.subr.bf16.mxu0 %v2732
        %2830 = vmatpush1.bf16.msra.mxu0 %v2731
        %2831 = vmatprep.subr.bf16.mxu0 %v2729
        %2832 = vmatpush1.bf16.msra.mxu0 %v2728
        %2833 = vmatprep.subr.bf16.mxu0 %v2726
        %2834 = vmatpush1.bf16.msra.mxu0 %v2725
        %2835 = vmatprep.subr.bf16.mxu0 %v2723
        %2836 = vmatpush1.bf16.msra.mxu0 %v2722
        %2837 = vmatprep.subr.bf16.mxu0 %v2720
        %2838 = vmatpush1.bf16.msra.mxu0 %v2719
        %2839 = vmatprep.subr.bf16.mxu0 %v2717
        %2840 = vmatpush1.bf16.msra.mxu0 %v2716
        %2841 = vmatprep.subr.bf16.mxu0 %v2714
        %2842 = vmatpush1.bf16.msra.mxu0 %v2713
        %2843 = vmatprep.subr.bf16.mxu0 %v2759
        %2844 = vmatpush2.bf16.msra.mxu0 %v2758
        %2845 = vmatprep.subr.bf16.mxu0 %v2756
        %2846 = vmatpush2.bf16.msra.mxu0 %v2755
        %2847 = vmatprep.subr.bf16.mxu0 %v2753
        %2848 = vmatpush2.bf16.msra.mxu0 %v2752
        %2849 = vmatprep.subr.bf16.mxu0 %v2750
        %2850 = vmatpush2.bf16.msra.mxu0 %v2749
        %2851 = vmatprep.subr.bf16.mxu0 %v2747
        %2852 = vmatpush2.bf16.msra.mxu0 %v2746
        %2853 = vmatprep.subr.bf16.mxu0 %v2744
        %2854 = vmatpush2.bf16.msra.mxu0 %v2743
        %2855 = vmatprep.subr.bf16.mxu0 %v2741
        %2856 = vmatpush2.bf16.msra.mxu0 %v2740
        %2857 = vmatprep.subr.bf16.mxu0 %v2738
        %2858 = vmatpush2.bf16.msra.mxu0 %v2737
        %2859 = vmatprep.mubr.bf16.mxu0 %v2524
        %2860 = vmatmul.mubr.bf16.gmra.mxu0 %v2523
        %v2861 = vpop.f32.mrf.mxu0
        %v2862 = vadd.f32 %v2489, %v2861
        %v2863 = vpop.f32.mrf.mxu0
        %v2864 = vadd.f32 %v2489, %v2863
        %v2865 = vpop.f32.mrf.mxu0
        %v2866 = vadd.f32 %v2493, %v2865
        %v2867 = vpop.f32.mrf.mxu0
        %v2868 = vadd.f32 %v2493, %v2867
        %2869 = vmatprep.mubr.bf16.mxu0 %v2527
        %2870 = vmatmul.mubr.bf16.gmra.mxu0 %v2526
        %v2871 = vpop.f32.mrf.mxu0
        %v2872 = vadd.f32 %v2497, %v2871
        %v2873 = vpop.f32.mrf.mxu0
        %v2874 = vadd.f32 %v2497, %v2873
        %v2875 = vpop.f32.mrf.mxu0
        %v2876 = vadd.f32 %v2501, %v2875
        %v2877 = vpop.f32.mrf.mxu0
        %v2878 = vadd.f32 %v2501, %v2877
        %2879 = vdwg.mxu0
        %2880 = vmatprep.subr.bf16.mxu0 0
        %2881 = vmatpush1.bf16.msra.mxu0 0
        %2882 = vmatprep.subr.bf16.mxu0 0
        %2883 = vmatpush1.bf16.msra.mxu0 0
        %2884 = vmatprep.subr.bf16.mxu0 0
        %2885 = vmatpush1.bf16.msra.mxu0 0
        %2886 = vmatprep.subr.bf16.mxu0 0
        %2887 = vmatpush1.bf16.msra.mxu0 0
        %2888 = vmatprep.subr.bf16.mxu0 0
        %2889 = vmatpush1.bf16.msra.mxu0 0
        %2890 = vmatprep.subr.bf16.mxu0 0
        %2891 = vmatpush1.bf16.msra.mxu0 0
        %2892 = vmatprep.subr.bf16.mxu0 %v2765
        %2893 = vmatpush1.bf16.msra.mxu0 %v2764
        %2894 = vmatprep.subr.bf16.mxu0 %v2762
        %2895 = vmatpush1.bf16.msra.mxu0 %v2761
        %2896 = vmatprep.subr.bf16.mxu0 0
        %2897 = vmatpush2.bf16.msra.mxu0 0
        %2898 = vmatprep.subr.bf16.mxu0 0
        %2899 = vmatpush2.bf16.msra.mxu0 0
        %2900 = vmatprep.subr.bf16.mxu0 0
        %2901 = vmatpush2.bf16.msra.mxu0 0
        %2902 = vmatprep.subr.bf16.mxu0 0
        %2903 = vmatpush2.bf16.msra.mxu0 0
        %2904 = vmatprep.subr.bf16.mxu0 0
        %2905 = vmatpush2.bf16.msra.mxu0 0
        %2906 = vmatprep.subr.bf16.mxu0 0
        %2907 = vmatpush2.bf16.msra.mxu0 0
        %2908 = vmatprep.subr.bf16.mxu0 0
        %2909 = vmatpush2.bf16.msra.mxu0 0
        %2910 = vmatprep.subr.bf16.mxu0 0
        %2911 = vmatpush2.bf16.msra.mxu0 0
        %2912 = vmatprep.mubr.bf16.mxu0 0
        %2913 = vmatmul.mubr.bf16.gmra.mxu0 %v2822
        %v2914 = vpop.f32.mrf.mxu0
        %v2915 = vadd.f32 %v2862, %v2914
        %v2916 = vpop.f32.mrf.mxu0
        %v2917 = vadd.f32 %v2864, %v2916
        %v2918 = vpop.f32.mrf.mxu0
        %v2919 = vadd.f32 %v2866, %v2918
        %v2920 = vpop.f32.mrf.mxu0
        %v2921 = vadd.f32 %v2868, %v2920
        %2922 = vmatprep.mubr.bf16.mxu0 0
        %2923 = vmatmul.mubr.bf16.gmra.mxu0 %v2825
        %v2924 = vpop.f32.mrf.mxu0
        %v2925 = vadd.f32 %v2872, %v2924
        %v2926 = vpop.f32.mrf.mxu0
        %v2927 = vadd.f32 %v2874, %v2926
        %v2928 = vpop.f32.mrf.mxu0
        %v2929 = vadd.f32 %v2876, %v2928
        %v2930 = vpop.f32.mrf.mxu0
        %v2931 = vadd.f32 %v2878, %v2930
        %2932 = vdwg.mxu0
        %2933 = vmatprep.subr.bf16.mxu0 0
        %2934 = vmatpush1.bf16.msra.mxu0 %v2736
        %2935 = vmatprep.subr.bf16.mxu0 0
        %2936 = vmatpush1.bf16.msra.mxu0 %v2733
        %2937 = vmatprep.subr.bf16.mxu0 0
        %2938 = vmatpush1.bf16.msra.mxu0 %v2730
        %2939 = vmatprep.subr.bf16.mxu0 0
        %2940 = vmatpush1.bf16.msra.mxu0 %v2727
        %2941 = vmatprep.subr.bf16.mxu0 0
        %2942 = vmatpush1.bf16.msra.mxu0 %v2724
        %2943 = vmatprep.subr.bf16.mxu0 0
        %2944 = vmatpush1.bf16.msra.mxu0 %v2721
        %2945 = vmatprep.subr.bf16.mxu0 0
        %2946 = vmatpush1.bf16.msra.mxu0 %v2718
        %2947 = vmatprep.subr.bf16.mxu0 0
        %2948 = vmatpush1.bf16.msra.mxu0 %v2715
        %2949 = vmatprep.subr.bf16.mxu0 0
        %2950 = vmatpush2.bf16.msra.mxu0 %v2760
        %2951 = vmatprep.subr.bf16.mxu0 0
        %2952 = vmatpush2.bf16.msra.mxu0 %v2757
        %2953 = vmatprep.subr.bf16.mxu0 0
        %2954 = vmatpush2.bf16.msra.mxu0 %v2754
        %2955 = vmatprep.subr.bf16.mxu0 0
        %2956 = vmatpush2.bf16.msra.mxu0 %v2751
        %2957 = vmatprep.subr.bf16.mxu0 0
        %2958 = vmatpush2.bf16.msra.mxu0 %v2748
        %2959 = vmatprep.subr.bf16.mxu0 0
        %2960 = vmatpush2.bf16.msra.mxu0 %v2745
        %2961 = vmatprep.subr.bf16.mxu0 0
        %2962 = vmatpush2.bf16.msra.mxu0 %v2742
        %2963 = vmatprep.subr.bf16.mxu0 0
        %2964 = vmatpush2.bf16.msra.mxu0 %v2739
        %2965 = vmatprep.mubr.bf16.mxu0 %v2524
        %2966 = vmatmul.mubr.bf16.gmra.mxu0 %v2523
        %v2967 = vpop.f32.mrf.mxu0
        %v2968 = vadd.f32 %v2489, %v2967
        %v2969 = vpop.f32.mrf.mxu0
        %v2970 = vpop.f32.mrf.mxu0
        %v2971 = vadd.f32 %v2493, %v2970
        %v2972 = vpop.f32.mrf.mxu0
        %2973 = vmatprep.mubr.bf16.mxu0 %v2527
        %2974 = vmatmul.mubr.bf16.gmra.mxu0 %v2526
        %v2975 = vpop.f32.mrf.mxu0
        %v2976 = vadd.f32 %v2497, %v2975
        %v2977 = vpop.f32.mrf.mxu0
        %v2978 = vpop.f32.mrf.mxu0
        %v2979 = vadd.f32 %v2501, %v2978
        %v2980 = vpop.f32.mrf.mxu0
        %2981 = vdwg.mxu0
        %2982 = vmatprep.subr.bf16.mxu0 0
        %2983 = vmatpush1.bf16.msra.mxu0 0
        %2984 = vmatprep.subr.bf16.mxu0 0
        %2985 = vmatpush1.bf16.msra.mxu0 0
        %2986 = vmatprep.subr.bf16.mxu0 0
        %2987 = vmatpush1.bf16.msra.mxu0 0
        %2988 = vmatprep.subr.bf16.mxu0 0
        %2989 = vmatpush1.bf16.msra.mxu0 0
        %2990 = vmatprep.subr.bf16.mxu0 0
        %2991 = vmatpush1.bf16.msra.mxu0 0
        %2992 = vmatprep.subr.bf16.mxu0 0
        %2993 = vmatpush1.bf16.msra.mxu0 0
        %2994 = vmatprep.subr.bf16.mxu0 0
        %2995 = vmatpush1.bf16.msra.mxu0 %v2766
        %2996 = vmatprep.subr.bf16.mxu0 0
        %2997 = vmatpush1.bf16.msra.mxu0 %v2763
        %2998 = vmatprep.subr.bf16.mxu0 0
        %2999 = vmatpush2.bf16.msra.mxu0 0
        %3000 = vmatprep.subr.bf16.mxu0 0
        %3001 = vmatpush2.bf16.msra.mxu0 0
        %3002 = vmatprep.subr.bf16.mxu0 0
        %3003 = vmatpush2.bf16.msra.mxu0 0
        %3004 = vmatprep.subr.bf16.mxu0 0
        %3005 = vmatpush2.bf16.msra.mxu0 0
        %3006 = vmatprep.subr.bf16.mxu0 0
        %3007 = vmatpush2.bf16.msra.mxu0 0
        %3008 = vmatprep.subr.bf16.mxu0 0
        %3009 = vmatpush2.bf16.msra.mxu0 0
        %3010 = vmatprep.subr.bf16.mxu0 0
        %3011 = vmatpush2.bf16.msra.mxu0 0
        %3012 = vmatprep.subr.bf16.mxu0 0
        %3013 = vmatpush2.bf16.msra.mxu0 0
        %3014 = vmatprep.mubr.bf16.mxu0 0
        %3015 = vmatmul.mubr.bf16.gmra.mxu0 %v2822
        %v3016 = vpop.f32.mrf.mxu0
        %v3017 = vadd.f32 %v2968, %v3016
        %v3018 = vpop.f32.mrf.mxu0
        %v3019 = vpop.f32.mrf.mxu0
        %v3020 = vadd.f32 %v2971, %v3019
        %v3021 = vpop.f32.mrf.mxu0
        %3022 = vmatprep.mubr.bf16.mxu0 0
        %3023 = vmatmul.mubr.bf16.gmra.mxu0 %v2825
        %v3024 = vpop.f32.mrf.mxu0
        %v3025 = vadd.f32 %v2976, %v3024
        %v3026 = vpop.f32.mrf.mxu0
        %v3027 = vpop.f32.mrf.mxu0
        %v3028 = vadd.f32 %v2979, %v3027
        %v3029 = vpop.f32.mrf.mxu0
        %3030 = vdwg.mxu0
        %v3031 = vld [vmem:[%s2] sm:$0xff]
        %v3032 = vld [vmem:[%s2 + $0x8] sm:$0xff]
        %v3033 = vld [vmem:[%s2 + $0x10] sm:$0xff]
        %v3034 = vld [vmem:[%s2 + $0x18] sm:$0xff]
        %v3035 = vmul.f32 %v2915, %v313
        %v3036 = vmul.f32 %v2917, %v314
        %v3037 = vmul.f32 %v3017, %v315
        %v3038 = vmul.f32 %v2919, %v313
        %v3039 = vmul.f32 %v2921, %v314
        %v3040 = vmul.f32 %v3020, %v315
        %v3041 = vmul.f32 %v2925, %v313
        %v3042 = vmul.f32 %v2927, %v314
        %v3043 = vmul.f32 %v3025, %v315
        %v3044 = vmul.f32 %v2929, %v313
        %v3045 = vmul.f32 %v2931, %v314
        %v3046 = vmul.f32 %v3028, %v315
        %v3047 = vadd.f32 %v3035, %v3036
        %v3048 = vadd.f32 %v3047, %v3037
        %3049 = vadd.xlane.f32.xlu0 %v3048
        %v3050 = vpop.xlane.xlu0 %3049
        %v3051 = vadd.f32 %v3038, %v3039
        %v3052 = vadd.f32 %v3051, %v3040
        %3053 = vadd.xlane.f32.xlu0 %v3052
        %v3054 = vpop.xlane.xlu0 %3053
        %v3055 = vadd.f32 %v3041, %v3042
        %v3056 = vadd.f32 %v3055, %v3043
        %3057 = vadd.xlane.f32.xlu0 %v3056
        %v3058 = vpop.xlane.xlu0 %3057
        %v3059 = vadd.f32 %v3044, %v3045
        %v3060 = vadd.f32 %v3059, %v3046
        %3061 = vadd.xlane.f32.xlu0 %v3060
        %v3062 = vpop.xlane.xlu0 %3061
        %v3063 = vmul.f32 %v3035, %v2915
        %v3064 = vmul.f32 %v3036, %v2917
        %v3065 = vmul.f32 %v3037, %v3017
        %v3066 = vmul.f32 %v3038, %v2919
        %v3067 = vmul.f32 %v3039, %v2921
        %v3068 = vmul.f32 %v3040, %v3020
        %v3069 = vmul.f32 %v3041, %v2925
        %v3070 = vmul.f32 %v3042, %v2927
        %v3071 = vmul.f32 %v3043, %v3025
        %v3072 = vmul.f32 %v3044, %v2929
        %v3073 = vmul.f32 %v3045, %v2931
        %v3074 = vmul.f32 %v3046, %v3028
        %v3075 = vadd.f32 %v3063, %v3064
        %v3076 = vadd.f32 %v3075, %v3065
        %3077 = vadd.xlane.f32.xlu0 %v3076
        %v3078 = vpop.xlane.xlu0 %3077
        %v3079 = vadd.f32 %v3066, %v3067
        %v3080 = vadd.f32 %v3079, %v3068
        %3081 = vadd.xlane.f32.xlu0 %v3080
        %v3082 = vpop.xlane.xlu0 %3081
        %v3083 = vadd.f32 %v3069, %v3070
        %v3084 = vadd.f32 %v3083, %v3071
        %3085 = vadd.xlane.f32.xlu0 %v3084
        %v3086 = vpop.xlane.xlu0 %3085
        %v3087 = vadd.f32 %v3072, %v3073
        %v3088 = vadd.f32 %v3087, %v3074
        %3089 = vadd.xlane.f32.xlu0 %v3088
        %v3090 = vpop.xlane.xlu0 %3089
        %v3091 = vmul.f32 %v3050, 0.00390625
        %v3092 = vmul.f32 %v3054, 0.00390625
        %v3093 = vmul.f32 %v3058, 0.00390625
        %v3094 = vmul.f32 %v3062, 0.00390625
        %v3095 = vmul.f32 %v3078, 0.00390625
        %v3096 = vmul.f32 %v3082, 0.00390625
        %v3097 = vmul.f32 %v3086, 0.00390625
        %v3098 = vmul.f32 %v3090, 0.00390625
        %v3099 = vmul.f32 %v3091, %v3091
        %v3100 = vmul.f32 %v3092, %v3092
        %v3101 = vmul.f32 %v3093, %v3093
        %v3102 = vmul.f32 %v3094, %v3094
        %v3103 = vsub.f32 %v3095, %v3099
        %v3104 = vsub.f32 %v3096, %v3100
        %v3105 = vsub.f32 %v3097, %v3101
        %v3106 = vsub.f32 %v3098, %v3102
        %v3107 = vmax.f32 %v3103, 0.0
        %v3108 = vmax.f32 %v3104, 0.0
        %v3109 = vmax.f32 %v3105, 0.0
        %v3110 = vmax.f32 %v3106, 0.0
        %v3111 = vsub.f32 %v2915, %v3091
        %v3112 = vsub.f32 %v2917, %v3091
        %v3113 = vsub.f32 %v3017, %v3091
        %v3114 = vsub.f32 %v2919, %v3092
        %v3115 = vsub.f32 %v2921, %v3092
        %v3116 = vsub.f32 %v3020, %v3092
        %v3117 = vsub.f32 %v2925, %v3093
        %v3118 = vsub.f32 %v2927, %v3093
        %v3119 = vsub.f32 %v3025, %v3093
        %v3120 = vsub.f32 %v2929, %v3094
        %v3121 = vsub.f32 %v2931, %v3094
        %v3122 = vsub.f32 %v3028, %v3094
        %v3123 = vadd.f32 %v3107, 1e-05
        %v3124 = vadd.f32 %v3108, 1e-05
        %v3125 = vadd.f32 %v3109, 1e-05
        %v3126 = vadd.f32 %v3110, 1e-05
        %v3127 = vrsqrt.pop %v3123
        %v3128 = vrsqrt.pop %v3124
        %v3129 = vrsqrt.pop %v3125
        %v3130 = vrsqrt.pop %v3126
        %v3131 = vmul.f32 %v3111, %v3127
        %v3132 = vmul.f32 %v3112, %v3127
        %v3133 = vmul.f32 %v3113, %v3127
        %v3134 = vmul.f32 %v3114, %v3128
        %v3135 = vmul.f32 %v3115, %v3128
        %v3136 = vmul.f32 %v3116, %v3128
        %v3137 = vmul.f32 %v3117, %v3129
        %v3138 = vmul.f32 %v3118, %v3129
        %v3139 = vmul.f32 %v3119, %v3129
        %v3140 = vmul.f32 %v3120, %v3130
        %v3141 = vmul.f32 %v3121, %v3130
        %v3142 = vmul.f32 %v3122, %v3130
        %3144 = vset.pattern.permute.xlu0 4
        %3145 = vperm.xlu0 %3144, %v3031
        %v3146 = vpop.permute.xlu0 %3145
        %3149 = vset.pattern.permute.xlu0 4
        %3150 = vperm.xlu0 %3149, %v3032
        %v3151 = vpop.permute.xlu0 %3150
        %3154 = vset.pattern.permute.xlu0 4
        %3155 = vperm.xlu0 %3154, %v3033
        %v3156 = vpop.permute.xlu0 %3155
        %3159 = vset.pattern.permute.xlu0 4
        %3160 = vperm.xlu0 %3159, %v3034
        %v3161 = vpop.permute.xlu0 %3160
        %v3163 = vmul.f32 %v3131, %v3146
        %v3164 = vmul.f32 %v3132, %v3146
        %v3165 = vmul.f32 %v3133, %v3146
        %v3166 = vmul.f32 %v3134, %v3151
        %v3167 = vmul.f32 %v3135, %v3151
        %v3168 = vmul.f32 %v3136, %v3151
        %v3169 = vmul.f32 %v3137, %v3156
        %v3170 = vmul.f32 %v3138, %v3156
        %v3171 = vmul.f32 %v3139, %v3156
        %v3172 = vmul.f32 %v3140, %v3161
        %v3173 = vmul.f32 %v3141, %v3161
        %v3174 = vmul.f32 %v3142, %v3161
        %3175 = vset.pattern.permute.xlu0 5
        %3176 = vperm.xlu0 %3175, %v3031
        %v3177 = vpop.permute.xlu0 %3176
        %3179 = vset.pattern.permute.xlu0 5
        %3180 = vperm.xlu0 %3179, %v3032
        %v3181 = vpop.permute.xlu0 %3180
        %3183 = vset.pattern.permute.xlu0 5
        %3184 = vperm.xlu0 %3183, %v3033
        %v3185 = vpop.permute.xlu0 %3184
        %3187 = vset.pattern.permute.xlu0 5
        %3188 = vperm.xlu0 %3187, %v3034
        %v3189 = vpop.permute.xlu0 %3188
        %v3191 = vadd.f32 %v3163, %v3177
        %v3192 = vadd.f32 %v3164, %v3177
        %v3193 = vadd.f32 %v3165, %v3177
        %v3194 = vadd.f32 %v3166, %v3181
        %v3195 = vadd.f32 %v3167, %v3181
        %v3196 = vadd.f32 %v3168, %v3181
        %v3197 = vadd.f32 %v3169, %v3185
        %v3198 = vadd.f32 %v3170, %v3185
        %v3199 = vadd.f32 %v3171, %v3185
        %v3200 = vadd.f32 %v3172, %v3189
        %v3201 = vadd.f32 %v3173, %v3189
        %v3202 = vadd.f32 %v3174, %v3189
        %v3203 = vmul.f32 %v3191, %v313
        %v3204 = vmul.f32 %v3192, %v314
        %v3205 = vmul.f32 %v3193, %v315
        %v3206 = vmul.f32 %v3194, %v313
        %v3207 = vmul.f32 %v3195, %v314
        %v3208 = vmul.f32 %v3196, %v315
        %v3209 = vmul.f32 %v3197, %v313
        %v3210 = vmul.f32 %v3198, %v314
        %v3211 = vmul.f32 %v3199, %v315
        %v3212 = vmul.f32 %v3200, %v313
        %v3213 = vmul.f32 %v3201, %v314
        %v3214 = vmul.f32 %v3202, %v315
        %v3215 = vadd.f32 %v3203, %v3204
        %v3216 = vadd.f32 %v3215, %v3205
        %3217 = vadd.xlane.f32.xlu0 %v3216
        %v3218 = vpop.xlane.xlu0 %3217
        %v3219 = vadd.f32 %v3206, %v3207
        %v3220 = vadd.f32 %v3219, %v3208
        %3221 = vadd.xlane.f32.xlu0 %v3220
        %v3222 = vpop.xlane.xlu0 %3221
        %v3223 = vadd.f32 %v3209, %v3210
        %v3224 = vadd.f32 %v3223, %v3211
        %3225 = vadd.xlane.f32.xlu0 %v3224
        %v3226 = vpop.xlane.xlu0 %3225
        %v3227 = vadd.f32 %v3212, %v3213
        %v3228 = vadd.f32 %v3227, %v3214
        %3229 = vadd.xlane.f32.xlu0 %v3228
        %v3230 = vpop.xlane.xlu0 %3229
        %v3231 = vmul.f32 %v3203, %v3191
        %v3232 = vmul.f32 %v3204, %v3192
        %v3233 = vmul.f32 %v3205, %v3193
        %v3234 = vmul.f32 %v3206, %v3194
        %v3235 = vmul.f32 %v3207, %v3195
        %v3236 = vmul.f32 %v3208, %v3196
        %v3237 = vmul.f32 %v3209, %v3197
        %v3238 = vmul.f32 %v3210, %v3198
        %v3239 = vmul.f32 %v3211, %v3199
        %v3240 = vmul.f32 %v3212, %v3200
        %v3241 = vmul.f32 %v3213, %v3201
        %v3242 = vmul.f32 %v3214, %v3202
        %v3243 = vadd.f32 %v3231, %v3232
        %v3244 = vadd.f32 %v3243, %v3233
        %3245 = vadd.xlane.f32.xlu0 %v3244
        %v3246 = vpop.xlane.xlu0 %3245
        %v3247 = vadd.f32 %v3234, %v3235
        %v3248 = vadd.f32 %v3247, %v3236
        %3249 = vadd.xlane.f32.xlu0 %v3248
        %v3250 = vpop.xlane.xlu0 %3249
        %v3251 = vadd.f32 %v3237, %v3238
        %v3252 = vadd.f32 %v3251, %v3239
        %3253 = vadd.xlane.f32.xlu0 %v3252
        %v3254 = vpop.xlane.xlu0 %3253
        %v3255 = vadd.f32 %v3240, %v3241
        %v3256 = vadd.f32 %v3255, %v3242
        %3257 = vadd.xlane.f32.xlu0 %v3256
        %v3258 = vpop.xlane.xlu0 %3257
        %v3259 = vmul.f32 %v3218, 0.00390625
        %v3260 = vmul.f32 %v3222, 0.00390625
        %v3261 = vmul.f32 %v3226, 0.00390625
        %v3262 = vmul.f32 %v3230, 0.00390625
        %v3263 = vmul.f32 %v3246, 0.00390625
        %v3264 = vmul.f32 %v3250, 0.00390625
        %v3265 = vmul.f32 %v3254, 0.00390625
        %v3266 = vmul.f32 %v3258, 0.00390625
        %v3267 = vmul.f32 %v3259, %v3259
        %v3268 = vmul.f32 %v3260, %v3260
        %v3269 = vmul.f32 %v3261, %v3261
        %v3270 = vmul.f32 %v3262, %v3262
        %v3271 = vsub.f32 %v3263, %v3267
        %v3272 = vsub.f32 %v3264, %v3268
        %v3273 = vsub.f32 %v3265, %v3269
        %v3274 = vsub.f32 %v3266, %v3270
        %v3275 = vmax.f32 %v3271, 0.0
        %v3276 = vmax.f32 %v3272, 0.0
        %v3277 = vmax.f32 %v3273, 0.0
        %v3278 = vmax.f32 %v3274, 0.0
        %v3279 = vsub.f32 %v3191, %v3259
        %v3280 = vsub.f32 %v3192, %v3259
        %v3281 = vsub.f32 %v3193, %v3259
        %v3282 = vsub.f32 %v3194, %v3260
        %v3283 = vsub.f32 %v3195, %v3260
        %v3284 = vsub.f32 %v3196, %v3260
        %v3285 = vsub.f32 %v3197, %v3261
        %v3286 = vsub.f32 %v3198, %v3261
        %v3287 = vsub.f32 %v3199, %v3261
        %v3288 = vsub.f32 %v3200, %v3262
        %v3289 = vsub.f32 %v3201, %v3262
        %v3290 = vsub.f32 %v3202, %v3262
        %v3291 = vadd.f32 %v3275, 1e-05
        %v3292 = vadd.f32 %v3276, 1e-05
        %v3293 = vadd.f32 %v3277, 1e-05
        %v3294 = vadd.f32 %v3278, 1e-05
        %v3295 = vrsqrt.pop %v3291
        %v3296 = vrsqrt.pop %v3292
        %v3297 = vrsqrt.pop %v3293
        %v3298 = vrsqrt.pop %v3294
        %v3299 = vmul.f32 %v3279, %v3295
        %v3300 = vmul.f32 %v3280, %v3295
        %v3301 = vmul.f32 %v3281, %v3295
        %v3302 = vmul.f32 %v3282, %v3296
        %v3303 = vmul.f32 %v3283, %v3296
        %v3304 = vmul.f32 %v3284, %v3296
        %v3305 = vmul.f32 %v3285, %v3297
        %v3306 = vmul.f32 %v3286, %v3297
        %v3307 = vmul.f32 %v3287, %v3297
        %v3308 = vmul.f32 %v3288, %v3298
        %v3309 = vmul.f32 %v3289, %v3298
        %v3310 = vmul.f32 %v3290, %v3298
        %3311 = vset.pattern.permute.xlu0 6
        %3312 = vperm.xlu0 %3311, %v3031
        %v3313 = vpop.permute.xlu0 %3312
        %3315 = vset.pattern.permute.xlu0 6
        %3316 = vperm.xlu0 %3315, %v3032
        %v3317 = vpop.permute.xlu0 %3316
        %3319 = vset.pattern.permute.xlu0 6
        %3320 = vperm.xlu0 %3319, %v3033
        %v3321 = vpop.permute.xlu0 %3320
        %3323 = vset.pattern.permute.xlu0 6
        %3324 = vperm.xlu0 %3323, %v3034
        %v3325 = vpop.permute.xlu0 %3324
        %v3327 = vmul.f32 %v3299, %v3313
        %v3328 = vmul.f32 %v3300, %v3313
        %v3329 = vmul.f32 %v3301, %v3313
        %v3330 = vmul.f32 %v3302, %v3317
        %v3331 = vmul.f32 %v3303, %v3317
        %v3332 = vmul.f32 %v3304, %v3317
        %v3333 = vmul.f32 %v3305, %v3321
        %v3334 = vmul.f32 %v3306, %v3321
        %v3335 = vmul.f32 %v3307, %v3321
        %v3336 = vmul.f32 %v3308, %v3325
        %v3337 = vmul.f32 %v3309, %v3325
        %v3338 = vmul.f32 %v3310, %v3325
        %3339 = vset.pattern.permute.xlu0 7
        %3340 = vperm.xlu0 %3339, %v3031
        %v3341 = vpop.permute.xlu0 %3340
        %3343 = vset.pattern.permute.xlu0 7
        %3344 = vperm.xlu0 %3343, %v3032
        %v3345 = vpop.permute.xlu0 %3344
        %3347 = vset.pattern.permute.xlu0 7
        %3348 = vperm.xlu0 %3347, %v3033
        %v3349 = vpop.permute.xlu0 %3348
        %3351 = vset.pattern.permute.xlu0 7
        %3352 = vperm.xlu0 %3351, %v3034
        %v3353 = vpop.permute.xlu0 %3352
        %v3355 = vadd.f32 %v3327, %v3341
        %v3356 = vadd.f32 %v3328, %v3341
        %v3357 = vadd.f32 %v3329, %v3341
        %v3358 = vadd.f32 %v3330, %v3345
        %v3359 = vadd.f32 %v3331, %v3345
        %v3360 = vadd.f32 %v3332, %v3345
        %v3361 = vadd.f32 %v3333, %v3349
        %v3362 = vadd.f32 %v3334, %v3349
        %v3363 = vadd.f32 %v3335, %v3349
        %v3364 = vadd.f32 %v3336, %v3353
        %v3365 = vadd.f32 %v3337, %v3353
        %v3366 = vadd.f32 %v3338, %v3353
        %v3367 = vxor.u32 %v3355, 2147483648
        %v3368 = vxor.u32 %v3356, 2147483648
        %v3369 = vxor.u32 %v3357, 2147483648
        %v3370 = vxor.u32 %v3358, 2147483648
        %v3371 = vxor.u32 %v3359, 2147483648
        %v3372 = vxor.u32 %v3360, 2147483648
        %v3373 = vxor.u32 %v3361, 2147483648
        %v3374 = vxor.u32 %v3362, 2147483648
        %v3375 = vxor.u32 %v3363, 2147483648
        %v3376 = vxor.u32 %v3364, 2147483648
        %v3377 = vxor.u32 %v3365, 2147483648
        %v3378 = vxor.u32 %v3366, 2147483648
        %v3379 = vmul.f32 %v3367, 1.442695
        %v3380 = vpow.pop %v3379
        %v3381 = vmul.f32 %v3368, 1.442695
        %v3382 = vpow.pop %v3381
        %v3383 = vmul.f32 %v3369, 1.442695
        %v3384 = vpow.pop %v3383
        %v3385 = vmul.f32 %v3370, 1.442695
        %v3386 = vpow.pop %v3385
        %v3387 = vmul.f32 %v3371, 1.442695
        %v3388 = vpow.pop %v3387
        %v3389 = vmul.f32 %v3372, 1.442695
        %v3390 = vpow.pop %v3389
        %v3391 = vmul.f32 %v3373, 1.442695
        %v3392 = vpow.pop %v3391
        %v3393 = vmul.f32 %v3374, 1.442695
        %v3394 = vpow.pop %v3393
        %v3395 = vmul.f32 %v3375, 1.442695
        %v3396 = vpow.pop %v3395
        %v3397 = vmul.f32 %v3376, 1.442695
        %v3398 = vpow.pop %v3397
        %v3399 = vmul.f32 %v3377, 1.442695
        %v3400 = vpow.pop %v3399
        %v3401 = vmul.f32 %v3378, 1.442695
        %v3402 = vpow.pop %v3401
        %v3403 = vadd.f32 %v3380, 1.0
        %v3404 = vadd.f32 %v3382, 1.0
        %v3405 = vadd.f32 %v3384, 1.0
        %v3406 = vadd.f32 %v3386, 1.0
        %v3407 = vadd.f32 %v3388, 1.0
        %v3408 = vadd.f32 %v3390, 1.0
        %v3409 = vadd.f32 %v3392, 1.0
        %v3410 = vadd.f32 %v3394, 1.0
        %v3411 = vadd.f32 %v3396, 1.0
        %v3412 = vadd.f32 %v3398, 1.0
        %v3413 = vadd.f32 %v3400, 1.0
        %v3414 = vadd.f32 %v3402, 1.0
        %v3415 = vrcp.pop %v3403
        %v3416 = vmul.f32 1.0, %v3415
        %v3417 = vrcp.pop %v3404
        %v3418 = vmul.f32 1.0, %v3417
        %v3419 = vrcp.pop %v3405
        %v3420 = vmul.f32 1.0, %v3419
        %v3421 = vrcp.pop %v3406
        %v3422 = vmul.f32 1.0, %v3421
        %v3423 = vrcp.pop %v3407
        %v3424 = vmul.f32 1.0, %v3423
        %v3425 = vrcp.pop %v3408
        %v3426 = vmul.f32 1.0, %v3425
        %v3427 = vrcp.pop %v3409
        %v3428 = vmul.f32 1.0, %v3427
        %v3429 = vrcp.pop %v3410
        %v3430 = vmul.f32 1.0, %v3429
        %v3431 = vrcp.pop %v3411
        %v3432 = vmul.f32 1.0, %v3431
        %v3433 = vrcp.pop %v3412
        %v3434 = vmul.f32 1.0, %v3433
        %v3435 = vrcp.pop %v3413
        %v3436 = vmul.f32 1.0, %v3435
        %v3437 = vrcp.pop %v3414
        %v3438 = vmul.f32 1.0, %v3437
        %v3439 = vmul.f32 %v3355, %v3416
        %v3440 = vmul.f32 %v3356, %v3418
        %v3441 = vmul.f32 %v3357, %v3420
        %v3442 = vmul.f32 %v3358, %v3422
        %v3443 = vmul.f32 %v3359, %v3424
        %v3444 = vmul.f32 %v3360, %v3426
        %v3445 = vmul.f32 %v3361, %v3428
        %v3446 = vmul.f32 %v3362, %v3430
        %v3447 = vmul.f32 %v3363, %v3432
        %v3448 = vmul.f32 %v3364, %v3434
        %v3449 = vmul.f32 %v3365, %v3436
        %v3450 = vmul.f32 %v3366, %v3438
        %v3451 = vmul.f32 %v3439, %v313
        %v3452 = vmul.f32 %v3440, %v314
        %v3453 = vmul.f32 %v3441, %v315
        %v3454 = vmul.f32 %v3442, %v313
        %v3455 = vmul.f32 %v3443, %v314
        %v3456 = vmul.f32 %v3444, %v315
        %v3457 = vmul.f32 %v3445, %v313
        %v3458 = vmul.f32 %v3446, %v314
        %v3459 = vmul.f32 %v3447, %v315
        %v3460 = vmul.f32 %v3448, %v313
        %v3461 = vmul.f32 %v3449, %v314
        %v3462 = vmul.f32 %v3450, %v315
        %v3463 = vpack.c.bf16 %v3454, %v3451
        %v3464 = vpack.c.bf16 %v3455, %v3452
        %v3465 = vpack.c.bf16 %v3456, %v3453
        %v3466 = vpack.c.bf16 %v3460, %v3457
        %v3467 = vpack.c.bf16 %v3461, %v3458
        %v3468 = vpack.c.bf16 %v3462, %v3459
        %v3475 = vunpack.c.l.b16 %v3463
        %v3476 = vunpack.c.l.b16 %v3464
        %v3477 = vunpack.c.l.b16 %v3465
        %v3478 = vunpack.c.h.b16 %v3463
        %v3479 = vunpack.c.h.b16 %v3464
        %v3480 = vunpack.c.h.b16 %v3465
        %v3481 = vunpack.c.l.b16 %v3466
        %v3482 = vunpack.c.l.b16 %v3467
        %v3483 = vunpack.c.l.b16 %v3468
        %v3484 = vunpack.c.h.b16 %v3466
        %v3485 = vunpack.c.h.b16 %v3467
        %v3486 = vunpack.c.h.b16 %v3468
        %v3487 = vpack.c.b16 %v3476, %v3475
        %v3488 = vpack.c.b16 %v3477, %v3477
        %v3489 = vpack.c.b16 %v3479, %v3478
        %v3490 = vpack.c.b16 %v3480, %v3480
        %v3491 = vpack.c.b16 %v3482, %v3481
        %v3492 = vpack.c.b16 %v3483, %v3483
        %v3493 = vpack.c.b16 %v3485, %v3484
        %v3494 = vpack.c.b16 %v3486, %v3486
        %3503 = vst [vmem:[#allocation2 + $0x4] sm:$0xff] %v3487
        %3504 = vst [vmem:[#allocation2 + $0xc] sm:$0xf] %v3488
        %3505 = vst [vmem:[#allocation2 + $0x18] sm:$0xff] %v3489
        %3506 = vst [vmem:[#allocation2 + $0x20] sm:$0xf] %v3490
        %3507 = vst [vmem:[#allocation2 + $0x2c] sm:$0xff] %v3491
        %3508 = vst [vmem:[#allocation2 + $0x34] sm:$0xf] %v3492
        %3509 = vst [vmem:[#allocation2 + $0x40] sm:$0xff] %v3493
        %3510 = vst [vmem:[#allocation2 + $0x48] sm:$0xf] %v3494
        %v3511 = vld [vmem:[#allocation2] sm:$0xff]
        %v3512 = vld [vmem:[#allocation2 + $0x8] sm:$0xff]
        %v3513 = vld [vmem:[#allocation2 + $0x14] sm:$0xff]
        %v3514 = vld [vmem:[#allocation2 + $0x1c] sm:$0xff]
        %v3515 = vld [vmem:[#allocation2 + $0x28] sm:$0xff]
        %v3516 = vld [vmem:[#allocation2 + $0x30] sm:$0xff]
        %v3517 = vld [vmem:[#allocation2 + $0x3c] sm:$0xff]
        %v3518 = vld [vmem:[#allocation2 + $0x44] sm:$0xff]
        %3527 = vrot.lane.b32.xlu0 %v3511, 19
        %v3528 = vpop.permute.xlu0 %3527
        %3529 = vrot.lane.b32.xlu0 %v3512, 19
        %v3530 = vpop.permute.xlu0 %3529
        %3531 = vrot.lane.b32.xlu0 %v3513, 19
        %v3532 = vpop.permute.xlu0 %3531
        %3533 = vrot.lane.b32.xlu0 %v3514, 19
        %v3534 = vpop.permute.xlu0 %3533
        %3535 = vrot.lane.b32.xlu0 %v3515, 19
        %v3536 = vpop.permute.xlu0 %3535
        %3537 = vrot.lane.b32.xlu0 %v3516, 19
        %v3538 = vpop.permute.xlu0 %3537
        %3539 = vrot.lane.b32.xlu0 %v3517, 19
        %v3540 = vpop.permute.xlu0 %3539
        %3541 = vrot.lane.b32.xlu0 %v3518, 19
        %v3542 = vpop.permute.xlu0 %3541
        %v3543 = vrot.slane %v3528, 4
        %v3544 = vrot.slane %v3530, 4
        %v3545 = vrot.slane %v3532, 4
        %v3546 = vrot.slane %v3534, 4
        %v3547 = vrot.slane %v3536, 4
        %v3548 = vrot.slane %v3538, 4
        %v3549 = vrot.slane %v3540, 4
        %v3550 = vrot.slane %v3542, 4
        %v3551 = vsel %vm444, %v3543, %v3544
        %v3552 = vsel %vm446, %v3528, %v3551
        %v3553 = vsel %vm446, %v3530, %v3544
        %v3554 = vsel %vm444, %v3545, %v3546
        %v3555 = vsel %vm446, %v3532, %v3554
        %v3556 = vsel %vm446, %v3534, %v3546
        %v3557 = vsel %vm444, %v3547, %v3548
        %v3558 = vsel %vm446, %v3536, %v3557
        %v3559 = vsel %vm446, %v3538, %v3548
        %v3560 = vsel %vm444, %v3549, %v3550
        %v3561 = vsel %vm446, %v3540, %v3560
        %v3562 = vsel %vm446, %v3542, %v3550
        %3571 = vst [vmem:[#allocation3] sm:$0xff] %v3552
        %3572 = vst [vmem:[#allocation3 + $0x8] sm:$0xf] %v3553
        %3573 = vst [vmem:[#allocation3 + $0xc] sm:$0xff] %v3555
        %3574 = vst [vmem:[#allocation3 + $0x14] sm:$0xf] %v3556
        %3575 = vst [vmem:[#allocation3 + $0x18] sm:$0xff] %v3558
        %3576 = vst [vmem:[#allocation3 + $0x20] sm:$0xf] %v3559
        %3577 = vst [vmem:[#allocation3 + $0x24] sm:$0xff] %v3561
        %3578 = vst [vmem:[#allocation3 + $0x2c] sm:$0xf] %v3562
        %v3579 = vld [vmem:[#allocation2] sm:$0xff]
        %v3580 = vld [vmem:[#allocation2 + $0x8] sm:$0xff]
        %v3581 = vld [vmem:[#allocation2 + $0x14] sm:$0xff]
        %v3582 = vld [vmem:[#allocation2 + $0x1c] sm:$0xff]
        %v3583 = vld [vmem:[#allocation2 + $0x28] sm:$0xff]
        %v3584 = vld [vmem:[#allocation2 + $0x30] sm:$0xff]
        %v3585 = vld [vmem:[#allocation2 + $0x3c] sm:$0xff]
        %v3586 = vld [vmem:[#allocation2 + $0x44] sm:$0xff]
        %3595 = vrot.lane.b32.xlu0 %v3579, 18
        %v3596 = vpop.permute.xlu0 %3595
        %3597 = vrot.lane.b32.xlu0 %v3580, 18
        %v3598 = vpop.permute.xlu0 %3597
        %3599 = vrot.lane.b32.xlu0 %v3581, 18
        %v3600 = vpop.permute.xlu0 %3599
        %3601 = vrot.lane.b32.xlu0 %v3582, 18
        %v3602 = vpop.permute.xlu0 %3601
        %3603 = vrot.lane.b32.xlu0 %v3583, 18
        %v3604 = vpop.permute.xlu0 %3603
        %3605 = vrot.lane.b32.xlu0 %v3584, 18
        %v3606 = vpop.permute.xlu0 %3605
        %3607 = vrot.lane.b32.xlu0 %v3585, 18
        %v3608 = vpop.permute.xlu0 %3607
        %3609 = vrot.lane.b32.xlu0 %v3586, 18
        %v3610 = vpop.permute.xlu0 %3609
        %v3611 = vrot.slane %v3596, 4
        %v3612 = vrot.slane %v3598, 4
        %v3613 = vrot.slane %v3600, 4
        %v3614 = vrot.slane %v3602, 4
        %v3615 = vrot.slane %v3604, 4
        %v3616 = vrot.slane %v3606, 4
        %v3617 = vrot.slane %v3608, 4
        %v3618 = vrot.slane %v3610, 4
        %v3619 = vsel %vm444, %v3611, %v3612
        %v3620 = vsel %vm515, %v3596, %v3619
        %v3621 = vsel %vm515, %v3598, %v3612
        %v3622 = vsel %vm444, %v3613, %v3614
        %v3623 = vsel %vm515, %v3600, %v3622
        %v3624 = vsel %vm515, %v3602, %v3614
        %v3625 = vsel %vm444, %v3615, %v3616
        %v3626 = vsel %vm515, %v3604, %v3625
        %v3627 = vsel %vm515, %v3606, %v3616
        %v3628 = vsel %vm444, %v3617, %v3618
        %v3629 = vsel %vm515, %v3608, %v3628
        %v3630 = vsel %vm515, %v3610, %v3618
        %3639 = vst [vmem:[#allocation3 + $0x30] sm:$0xff] %v3620
        %3640 = vst [vmem:[#allocation3 + $0x38] sm:$0xf] %v3621
        %3641 = vst [vmem:[#allocation3 + $0x3c] sm:$0xff] %v3623
        %3642 = vst [vmem:[#allocation3 + $0x44] sm:$0xf] %v3624
        %3643 = vst [vmem:[#allocation3 + $0x48] sm:$0xff] %v3626
        %3644 = vst [vmem:[#allocation3 + $0x50] sm:$0xf] %v3627
        %3645 = vst [vmem:[#allocation3 + $0x54] sm:$0xff] %v3629
        %3646 = vst [vmem:[#allocation3 + $0x5c] sm:$0xf] %v3630
        %v3647 = vld [vmem:[#allocation2] sm:$0xff]
        %v3648 = vld [vmem:[#allocation2 + $0x8] sm:$0xff]
        %v3649 = vld [vmem:[#allocation2 + $0x14] sm:$0xff]
        %v3650 = vld [vmem:[#allocation2 + $0x1c] sm:$0xff]
        %v3651 = vld [vmem:[#allocation2 + $0x28] sm:$0xff]
        %v3652 = vld [vmem:[#allocation2 + $0x30] sm:$0xff]
        %v3653 = vld [vmem:[#allocation2 + $0x3c] sm:$0xff]
        %v3654 = vld [vmem:[#allocation2 + $0x44] sm:$0xff]
        %3663 = vrot.lane.b32.xlu0 %v3647, 17
        %v3664 = vpop.permute.xlu0 %3663
        %3665 = vrot.lane.b32.xlu0 %v3648, 17
        %v3666 = vpop.permute.xlu0 %3665
        %3667 = vrot.lane.b32.xlu0 %v3649, 17
        %v3668 = vpop.permute.xlu0 %3667
        %3669 = vrot.lane.b32.xlu0 %v3650, 17
        %v3670 = vpop.permute.xlu0 %3669
        %3671 = vrot.lane.b32.xlu0 %v3651, 17
        %v3672 = vpop.permute.xlu0 %3671
        %3673 = vrot.lane.b32.xlu0 %v3652, 17
        %v3674 = vpop.permute.xlu0 %3673
        %3675 = vrot.lane.b32.xlu0 %v3653, 17
        %v3676 = vpop.permute.xlu0 %3675
        %3677 = vrot.lane.b32.xlu0 %v3654, 17
        %v3678 = vpop.permute.xlu0 %3677
        %v3679 = vrot.slane %v3664, 4
        %v3680 = vrot.slane %v3666, 4
        %v3681 = vrot.slane %v3668, 4
        %v3682 = vrot.slane %v3670, 4
        %v3683 = vrot.slane %v3672, 4
        %v3684 = vrot.slane %v3674, 4
        %v3685 = vrot.slane %v3676, 4
        %v3686 = vrot.slane %v3678, 4
        %v3687 = vsel %vm444, %v3679, %v3680
        %v3688 = vsel %vm584, %v3664, %v3687
        %v3689 = vsel %vm584, %v3666, %v3680
        %v3690 = vsel %vm444, %v3681, %v3682
        %v3691 = vsel %vm584, %v3668, %v3690
        %v3692 = vsel %vm584, %v3670, %v3682
        %v3693 = vsel %vm444, %v3683, %v3684
        %v3694 = vsel %vm584, %v3672, %v3693
        %v3695 = vsel %vm584, %v3674, %v3684
        %v3696 = vsel %vm444, %v3685, %v3686
        %v3697 = vsel %vm584, %v3676, %v3696
        %v3698 = vsel %vm584, %v3678, %v3686
        %3707 = vst [vmem:[#allocation3 + $0x60] sm:$0xff] %v3688
        %3708 = vst [vmem:[#allocation3 + $0x68] sm:$0xf] %v3689
        %3709 = vst [vmem:[#allocation3 + $0x6c] sm:$0xff] %v3691
        %3710 = vst [vmem:[#allocation3 + $0x74] sm:$0xf] %v3692
        %3711 = vst [vmem:[#allocation3 + $0x78] sm:$0xff] %v3694
        %3712 = vst [vmem:[#allocation3 + $0x80] sm:$0xf] %v3695
        %3713 = vst [vmem:[#allocation3 + $0x84] sm:$0xff] %v3697
        %3714 = vst [vmem:[#allocation3 + $0x8c] sm:$0xf] %v3698
        %v3715 = vld [vmem:[#allocation2] sm:$0xff]
        %v3716 = vld [vmem:[#allocation2 + $0x8] sm:$0xff]
        %v3717 = vld [vmem:[#allocation2 + $0x14] sm:$0xff]
        %v3718 = vld [vmem:[#allocation2 + $0x1c] sm:$0xff]
        %v3719 = vld [vmem:[#allocation2 + $0x28] sm:$0xff]
        %v3720 = vld [vmem:[#allocation2 + $0x30] sm:$0xff]
        %v3721 = vld [vmem:[#allocation2 + $0x3c] sm:$0xff]
        %v3722 = vld [vmem:[#allocation2 + $0x44] sm:$0xff]
        %3731 = vrot.lane.b32.xlu0 %v3715, 1
        %v3732 = vpop.permute.xlu0 %3731
        %3733 = vrot.lane.b32.xlu0 %v3716, 1
        %v3734 = vpop.permute.xlu0 %3733
        %3735 = vrot.lane.b32.xlu0 %v3717, 1
        %v3736 = vpop.permute.xlu0 %3735
        %3737 = vrot.lane.b32.xlu0 %v3718, 1
        %v3738 = vpop.permute.xlu0 %3737
        %3739 = vrot.lane.b32.xlu0 %v3719, 1
        %v3740 = vpop.permute.xlu0 %3739
        %3741 = vrot.lane.b32.xlu0 %v3720, 1
        %v3742 = vpop.permute.xlu0 %3741
        %3743 = vrot.lane.b32.xlu0 %v3721, 1
        %v3744 = vpop.permute.xlu0 %3743
        %3745 = vrot.lane.b32.xlu0 %v3722, 1
        %v3746 = vpop.permute.xlu0 %3745
        %v3747 = vrot.slane %v3732, 4
        %v3748 = vrot.slane %v3734, 4
        %v3749 = vrot.slane %v3736, 4
        %v3750 = vrot.slane %v3738, 4
        %v3751 = vrot.slane %v3740, 4
        %v3752 = vrot.slane %v3742, 4
        %v3753 = vrot.slane %v3744, 4
        %v3754 = vrot.slane %v3746, 4
        %v3755 = vsel %vm444, %v3747, %v3748
        %v3756 = vsel %vm653, %v3732, %v3755
        %v3757 = vsel %vm653, %v3734, %v3748
        %v3758 = vsel %vm444, %v3749, %v3750
        %v3759 = vsel %vm653, %v3736, %v3758
        %v3760 = vsel %vm653, %v3738, %v3750
        %v3761 = vsel %vm444, %v3751, %v3752
        %v3762 = vsel %vm653, %v3740, %v3761
        %v3763 = vsel %vm653, %v3742, %v3752
        %v3764 = vsel %vm444, %v3753, %v3754
        %v3765 = vsel %vm653, %v3744, %v3764
        %v3766 = vsel %vm653, %v3746, %v3754
        %3775 = vst [vmem:[#allocation3 + $0x90] sm:$0xff] %v3756
        %3776 = vst [vmem:[#allocation3 + $0x98] sm:$0xf] %v3757
        %3777 = vst [vmem:[#allocation3 + $0x9c] sm:$0xff] %v3759
        %3778 = vst [vmem:[#allocation3 + $0xa4] sm:$0xf] %v3760
        %3779 = vst [vmem:[#allocation3 + $0xa8] sm:$0xff] %v3762
        %3780 = vst [vmem:[#allocation3 + $0xb0] sm:$0xf] %v3763
        %3781 = vst [vmem:[#allocation3 + $0xb4] sm:$0xff] %v3765
        %3782 = vst [vmem:[#allocation3 + $0xbc] sm:$0xf] %v3766
        %v3783 = vld [vmem:[#allocation2 + $0x4] sm:$0xff]
        %v3784 = vld [vmem:[#allocation2 + $0xc] sm:$0xf]
        %v3785 = vld [vmem:[#allocation2 + $0x18] sm:$0xff]
        %v3786 = vld [vmem:[#allocation2 + $0x20] sm:$0xf]
        %v3787 = vld [vmem:[#allocation2 + $0x2c] sm:$0xff]
        %v3788 = vld [vmem:[#allocation2 + $0x34] sm:$0xf]
        %v3789 = vld [vmem:[#allocation2 + $0x40] sm:$0xff]
        %v3790 = vld [vmem:[#allocation2 + $0x48] sm:$0xf]
        %3791 = vst [vmem:[#allocation3 + $0xc0] sm:$0xff] %v3783
        %3792 = vst [vmem:[#allocation3 + $0xc8] sm:$0xf] %v3784
        %3793 = vst [vmem:[#allocation3 + $0xcc] sm:$0xff] %v3785
        %3794 = vst [vmem:[#allocation3 + $0xd4] sm:$0xf] %v3786
        %3795 = vst [vmem:[#allocation3 + $0xd8] sm:$0xff] %v3787
        %3796 = vst [vmem:[#allocation3 + $0xe0] sm:$0xf] %v3788
        %3797 = vst [vmem:[#allocation3 + $0xe4] sm:$0xff] %v3789
        %3798 = vst [vmem:[#allocation3 + $0xec] sm:$0xf] %v3790
        %v3799 = vld [vmem:[#allocation2 + $0x4] sm:$0xff]
        %v3800 = vld [vmem:[#allocation2 + $0xc] sm:$0xff]
        %v3801 = vld [vmem:[#allocation2 + $0x18] sm:$0xff]
        %v3802 = vld [vmem:[#allocation2 + $0x20] sm:$0xff]
        %v3803 = vld [vmem:[#allocation2 + $0x2c] sm:$0xff]
        %v3804 = vld [vmem:[#allocation2 + $0x34] sm:$0xff]
        %v3805 = vld [vmem:[#allocation2 + $0x40] sm:$0xff]
        %v3806 = vld [vmem:[#allocation2 + $0x48] sm:$0xff]
        %3815 = vrot.lane.b32.xlu0 %v3799, 127
        %v3816 = vpop.permute.xlu0 %3815
        %3817 = vrot.lane.b32.xlu0 %v3800, 127
        %v3818 = vpop.permute.xlu0 %3817
        %3819 = vrot.lane.b32.xlu0 %v3801, 127
        %v3820 = vpop.permute.xlu0 %3819
        %3821 = vrot.lane.b32.xlu0 %v3802, 127
        %v3822 = vpop.permute.xlu0 %3821
        %3823 = vrot.lane.b32.xlu0 %v3803, 127
        %v3824 = vpop.permute.xlu0 %3823
        %3825 = vrot.lane.b32.xlu0 %v3804, 127
        %v3826 = vpop.permute.xlu0 %3825
        %3827 = vrot.lane.b32.xlu0 %v3805, 127
        %v3828 = vpop.permute.xlu0 %3827
        %3829 = vrot.lane.b32.xlu0 %v3806, 127
        %v3830 = vpop.permute.xlu0 %3829
        %v3831 = vrot.slane %v3816, 4
        %v3832 = vrot.slane %v3818, 4
        %v3833 = vrot.slane %v3820, 4
        %v3834 = vrot.slane %v3822, 4
        %v3835 = vrot.slane %v3824, 4
        %v3836 = vrot.slane %v3826, 4
        %v3837 = vrot.slane %v3828, 4
        %v3838 = vrot.slane %v3830, 4
        %v3839 = vsel %vm444, %v3831, %v3832
        %v3840 = vsel %vm738, %v3816, %v3839
        %v3841 = vsel %vm738, %v3818, %v3832
        %v3842 = vsel %vm444, %v3833, %v3834
        %v3843 = vsel %vm738, %v3820, %v3842
        %v3844 = vsel %vm738, %v3822, %v3834
        %v3845 = vsel %vm444, %v3835, %v3836
        %v3846 = vsel %vm738, %v3824, %v3845
        %v3847 = vsel %vm738, %v3826, %v3836
        %v3848 = vsel %vm444, %v3837, %v3838
        %v3849 = vsel %vm738, %v3828, %v3848
        %v3850 = vsel %vm738, %v3830, %v3838
        %3859 = vst [vmem:[#allocation3 + $0xf0] sm:$0xff] %v3840
        %3860 = vst [vmem:[#allocation3 + $0xf8] sm:$0xf] %v3841
        %3861 = vst [vmem:[#allocation3 + $0xfc] sm:$0xff] %v3843
        %3862 = vst [vmem:[#allocation3 + $0x104] sm:$0xf] %v3844
        %3863 = vst [vmem:[#allocation3 + $0x108] sm:$0xff] %v3846
        %3864 = vst [vmem:[#allocation3 + $0x110] sm:$0xf] %v3847
        %3865 = vst [vmem:[#allocation3 + $0x114] sm:$0xff] %v3849
        %3866 = vst [vmem:[#allocation3 + $0x11c] sm:$0xf] %v3850
        %v3867 = vld [vmem:[#allocation2 + $0x4] sm:$0xff]
        %v3868 = vld [vmem:[#allocation2 + $0xc] sm:$0xff]
        %v3869 = vld [vmem:[#allocation2 + $0x18] sm:$0xff]
        %v3870 = vld [vmem:[#allocation2 + $0x20] sm:$0xff]
        %v3871 = vld [vmem:[#allocation2 + $0x2c] sm:$0xff]
        %v3872 = vld [vmem:[#allocation2 + $0x34] sm:$0xff]
        %v3873 = vld [vmem:[#allocation2 + $0x40] sm:$0xff]
        %v3874 = vld [vmem:[#allocation2 + $0x48] sm:$0xff]
        %3883 = vrot.lane.b32.xlu0 %v3867, 111
        %v3884 = vpop.permute.xlu0 %3883
        %3885 = vrot.lane.b32.xlu0 %v3868, 111
        %v3886 = vpop.permute.xlu0 %3885
        %3887 = vrot.lane.b32.xlu0 %v3869, 111
        %v3888 = vpop.permute.xlu0 %3887
        %3889 = vrot.lane.b32.xlu0 %v3870, 111
        %v3890 = vpop.permute.xlu0 %3889
        %3891 = vrot.lane.b32.xlu0 %v3871, 111
        %v3892 = vpop.permute.xlu0 %3891
        %3893 = vrot.lane.b32.xlu0 %v3872, 111
        %v3894 = vpop.permute.xlu0 %3893
        %3895 = vrot.lane.b32.xlu0 %v3873, 111
        %v3896 = vpop.permute.xlu0 %3895
        %3897 = vrot.lane.b32.xlu0 %v3874, 111
        %v3898 = vpop.permute.xlu0 %3897
        %v3899 = vrot.slane %v3884, 4
        %v3900 = vrot.slane %v3886, 4
        %v3901 = vrot.slane %v3888, 4
        %v3902 = vrot.slane %v3890, 4
        %v3903 = vrot.slane %v3892, 4
        %v3904 = vrot.slane %v3894, 4
        %v3905 = vrot.slane %v3896, 4
        %v3906 = vrot.slane %v3898, 4
        %v3907 = vsel %vm444, %v3899, %v3900
        %v3908 = vsel %vm807, %v3884, %v3907
        %v3909 = vsel %vm807, %v3886, %v3900
        %v3910 = vsel %vm444, %v3901, %v3902
        %v3911 = vsel %vm807, %v3888, %v3910
        %v3912 = vsel %vm807, %v3890, %v3902
        %v3913 = vsel %vm444, %v3903, %v3904
        %v3914 = vsel %vm807, %v3892, %v3913
        %v3915 = vsel %vm807, %v3894, %v3904
        %v3916 = vsel %vm444, %v3905, %v3906
        %v3917 = vsel %vm807, %v3896, %v3916
        %v3918 = vsel %vm807, %v3898, %v3906
        %3927 = vst [vmem:[#allocation3 + $0x120] sm:$0xff] %v3908
        %3928 = vst [vmem:[#allocation3 + $0x128] sm:$0xf] %v3909
        %3929 = vst [vmem:[#allocation3 + $0x12c] sm:$0xff] %v3911
        %3930 = vst [vmem:[#allocation3 + $0x134] sm:$0xf] %v3912
        %3931 = vst [vmem:[#allocation3 + $0x138] sm:$0xff] %v3914
        %3932 = vst [vmem:[#allocation3 + $0x140] sm:$0xf] %v3915
        %3933 = vst [vmem:[#allocation3 + $0x144] sm:$0xff] %v3917
        %3934 = vst [vmem:[#allocation3 + $0x14c] sm:$0xf] %v3918
        %v3935 = vld [vmem:[#allocation2 + $0x4] sm:$0xff]
        %v3936 = vld [vmem:[#allocation2 + $0xc] sm:$0xff]
        %v3937 = vld [vmem:[#allocation2 + $0x18] sm:$0xff]
        %v3938 = vld [vmem:[#allocation2 + $0x20] sm:$0xff]
        %v3939 = vld [vmem:[#allocation2 + $0x2c] sm:$0xff]
        %v3940 = vld [vmem:[#allocation2 + $0x34] sm:$0xff]
        %v3941 = vld [vmem:[#allocation2 + $0x40] sm:$0xff]
        %v3942 = vld [vmem:[#allocation2 + $0x48] sm:$0xff]
        %3951 = vrot.lane.b32.xlu0 %v3935, 110
        %v3952 = vpop.permute.xlu0 %3951
        %3953 = vrot.lane.b32.xlu0 %v3936, 110
        %v3954 = vpop.permute.xlu0 %3953
        %3955 = vrot.lane.b32.xlu0 %v3937, 110
        %v3956 = vpop.permute.xlu0 %3955
        %3957 = vrot.lane.b32.xlu0 %v3938, 110
        %v3958 = vpop.permute.xlu0 %3957
        %3959 = vrot.lane.b32.xlu0 %v3939, 110
        %v3960 = vpop.permute.xlu0 %3959
        %3961 = vrot.lane.b32.xlu0 %v3940, 110
        %v3962 = vpop.permute.xlu0 %3961
        %3963 = vrot.lane.b32.xlu0 %v3941, 110
        %v3964 = vpop.permute.xlu0 %3963
        %3965 = vrot.lane.b32.xlu0 %v3942, 110
        %v3966 = vpop.permute.xlu0 %3965
        %v3967 = vrot.slane %v3952, 4
        %v3968 = vrot.slane %v3954, 4
        %v3969 = vrot.slane %v3956, 4
        %v3970 = vrot.slane %v3958, 4
        %v3971 = vrot.slane %v3960, 4
        %v3972 = vrot.slane %v3962, 4
        %v3973 = vrot.slane %v3964, 4
        %v3974 = vrot.slane %v3966, 4
        %v3975 = vsel %vm444, %v3967, %v3968
        %v3976 = vsel %vm876, %v3952, %v3975
        %v3977 = vsel %vm876, %v3954, %v3968
        %v3978 = vsel %vm444, %v3969, %v3970
        %v3979 = vsel %vm876, %v3956, %v3978
        %v3980 = vsel %vm876, %v3958, %v3970
        %v3981 = vsel %vm444, %v3971, %v3972
        %v3982 = vsel %vm876, %v3960, %v3981
        %v3983 = vsel %vm876, %v3962, %v3972
        %v3984 = vsel %vm444, %v3973, %v3974
        %v3985 = vsel %vm876, %v3964, %v3984
        %v3986 = vsel %vm876, %v3966, %v3974
        %3995 = vst [vmem:[#allocation3 + $0x150] sm:$0xff] %v3976
        %3996 = vst [vmem:[#allocation3 + $0x158] sm:$0xf] %v3977
        %3997 = vst [vmem:[#allocation3 + $0x15c] sm:$0xff] %v3979
        %3998 = vst [vmem:[#allocation3 + $0x164] sm:$0xf] %v3980
        %3999 = vst [vmem:[#allocation3 + $0x168] sm:$0xff] %v3982
        %4000 = vst [vmem:[#allocation3 + $0x170] sm:$0xf] %v3983
        %4001 = vst [vmem:[#allocation3 + $0x174] sm:$0xff] %v3985
        %4002 = vst [vmem:[#allocation3 + $0x17c] sm:$0xf] %v3986
        %v4003 = vld [vmem:[#allocation2 + $0x4] sm:$0xff]
        %v4004 = vld [vmem:[#allocation2 + $0xc] sm:$0xff]
        %v4005 = vld [vmem:[#allocation2 + $0x18] sm:$0xff]
        %v4006 = vld [vmem:[#allocation2 + $0x20] sm:$0xff]
        %v4007 = vld [vmem:[#allocation2 + $0x2c] sm:$0xff]
        %v4008 = vld [vmem:[#allocation2 + $0x34] sm:$0xff]
        %v4009 = vld [vmem:[#allocation2 + $0x40] sm:$0xff]
        %v4010 = vld [vmem:[#allocation2 + $0x48] sm:$0xff]
        %4019 = vrot.lane.b32.xlu0 %v4003, 109
        %v4020 = vpop.permute.xlu0 %4019
        %4021 = vrot.lane.b32.xlu0 %v4004, 109
        %v4022 = vpop.permute.xlu0 %4021
        %4023 = vrot.lane.b32.xlu0 %v4005, 109
        %v4024 = vpop.permute.xlu0 %4023
        %4025 = vrot.lane.b32.xlu0 %v4006, 109
        %v4026 = vpop.permute.xlu0 %4025
        %4027 = vrot.lane.b32.xlu0 %v4007, 109
        %v4028 = vpop.permute.xlu0 %4027
        %4029 = vrot.lane.b32.xlu0 %v4008, 109
        %v4030 = vpop.permute.xlu0 %4029
        %4031 = vrot.lane.b32.xlu0 %v4009, 109
        %v4032 = vpop.permute.xlu0 %4031
        %4033 = vrot.lane.b32.xlu0 %v4010, 109
        %v4034 = vpop.permute.xlu0 %4033
        %v4035 = vrot.slane %v4020, 4
        %v4036 = vrot.slane %v4022, 4
        %v4037 = vrot.slane %v4024, 4
        %v4038 = vrot.slane %v4026, 4
        %v4039 = vrot.slane %v4028, 4
        %v4040 = vrot.slane %v4030, 4
        %v4041 = vrot.slane %v4032, 4
        %v4042 = vrot.slane %v4034, 4
        %v4043 = vsel %vm444, %v4035, %v4036
        %v4044 = vsel %vm945, %v4020, %v4043
        %v4045 = vsel %vm945, %v4022, %v4036
        %v4046 = vsel %vm444, %v4037, %v4038
        %v4047 = vsel %vm945, %v4024, %v4046
        %v4048 = vsel %vm945, %v4026, %v4038
        %v4049 = vsel %vm444, %v4039, %v4040
        %v4050 = vsel %vm945, %v4028, %v4049
        %v4051 = vsel %vm945, %v4030, %v4040
        %v4052 = vsel %vm444, %v4041, %v4042
        %v4053 = vsel %vm945, %v4032, %v4052
        %v4054 = vsel %vm945, %v4034, %v4042
        %4063 = vst [vmem:[#allocation3 + $0x180] sm:$0xff] %v4044
        %4064 = vst [vmem:[#allocation3 + $0x188] sm:$0xf] %v4045
        %4065 = vst [vmem:[#allocation3 + $0x18c] sm:$0xff] %v4047
        %4066 = vst [vmem:[#allocation3 + $0x194] sm:$0xf] %v4048
        %4067 = vst [vmem:[#allocation3 + $0x198] sm:$0xff] %v4050
        %4068 = vst [vmem:[#allocation3 + $0x1a0] sm:$0xf] %v4051
        %4069 = vst [vmem:[#allocation3 + $0x1a4] sm:$0xff] %v4053
        %4070 = vst [vmem:[#allocation3 + $0x1ac] sm:$0xf] %v4054
        %s4071 = scalar_lea.vmem [#allocation7], 96
        %v4072 = vld [vmem:[%s4071] sm:$0xff]
        %v4073 = vld [vmem:[%s4071 + $0x8] sm:$0xf]
        %v4074 = vld [vmem:[%s4071 + $0xc] sm:$0xff]
        %v4075 = vld [vmem:[%s4071 + $0x14] sm:$0xf]
        %v4076 = vld [vmem:[%s4071 + $0x18] sm:$0xff]
        %v4077 = vld [vmem:[%s4071 + $0x20] sm:$0xf]
        %v4078 = vld [vmem:[%s4071 + $0x24] sm:$0xff]
        %v4079 = vld [vmem:[%s4071 + $0x2c] sm:$0xf]
        %v4080 = vld [vmem:[#allocation3] sm:$0xff]
        %v4081 = vld [vmem:[#allocation3 + $0x8] sm:$0xf]
        %v4082 = vld [vmem:[#allocation3 + $0xc] sm:$0xff]
        %v4083 = vld [vmem:[#allocation3 + $0x14] sm:$0xf]
        %v4084 = vld [vmem:[#allocation3 + $0x18] sm:$0xff]
        %v4085 = vld [vmem:[#allocation3 + $0x20] sm:$0xf]
        %v4086 = vld [vmem:[#allocation3 + $0x24] sm:$0xff]
        %v4087 = vld [vmem:[#allocation3 + $0x2c] sm:$0xf]
        %v4088 = vld [vmem:[#allocation3 + $0x30] sm:$0xff]
        %v4089 = vld [vmem:[#allocation3 + $0x38] sm:$0xf]
        %v4090 = vld [vmem:[#allocation3 + $0x3c] sm:$0xff]
        %v4091 = vld [vmem:[#allocation3 + $0x44] sm:$0xf]
        %v4092 = vld [vmem:[#allocation3 + $0x48] sm:$0xff]
        %v4093 = vld [vmem:[#allocation3 + $0x50] sm:$0xf]
        %v4094 = vld [vmem:[#allocation3 + $0x54] sm:$0xff]
        %v4095 = vld [vmem:[#allocation3 + $0x5c] sm:$0xf]
        %v4096 = vld [vmem:[#allocation3 + $0x60] sm:$0xff]
        %v4097 = vld [vmem:[#allocation3 + $0x68] sm:$0xf]
        %v4098 = vld [vmem:[#allocation3 + $0x6c] sm:$0xff]
        %v4099 = vld [vmem:[#allocation3 + $0x74] sm:$0xf]
        %v4100 = vld [vmem:[#allocation3 + $0x78] sm:$0xff]
        %v4101 = vld [vmem:[#allocation3 + $0x80] sm:$0xf]
        %v4102 = vld [vmem:[#allocation3 + $0x84] sm:$0xff]
        %v4103 = vld [vmem:[#allocation3 + $0x8c] sm:$0xf]
        %v4104 = vld [vmem:[#allocation3 + $0x90] sm:$0xff]
        %v4105 = vld [vmem:[#allocation3 + $0x98] sm:$0xf]
        %v4106 = vld [vmem:[#allocation3 + $0x9c] sm:$0xff]
        %v4107 = vld [vmem:[#allocation3 + $0xa4] sm:$0xf]
        %v4108 = vld [vmem:[#allocation3 + $0xa8] sm:$0xff]
        %v4109 = vld [vmem:[#allocation3 + $0xb0] sm:$0xf]
        %v4110 = vld [vmem:[#allocation3 + $0xb4] sm:$0xff]
        %v4111 = vld [vmem:[#allocation3 + $0xbc] sm:$0xf]
        %v4112 = vld [vmem:[#allocation3 + $0xc0] sm:$0xff]
        %v4113 = vld [vmem:[#allocation3 + $0xc8] sm:$0xf]
        %v4114 = vld [vmem:[#allocation3 + $0xcc] sm:$0xff]
        %v4115 = vld [vmem:[#allocation3 + $0xd4] sm:$0xf]
        %v4116 = vld [vmem:[#allocation3 + $0xd8] sm:$0xff]
        %v4117 = vld [vmem:[#allocation3 + $0xe0] sm:$0xf]
        %v4118 = vld [vmem:[#allocation3 + $0xe4] sm:$0xff]
        %v4119 = vld [vmem:[#allocation3 + $0xec] sm:$0xf]
        %v4120 = vld [vmem:[#allocation3 + $0xf0] sm:$0xff]
        %v4121 = vld [vmem:[#allocation3 + $0xf8] sm:$0xf]
        %v4122 = vld [vmem:[#allocation3 + $0xfc] sm:$0xff]
        %v4123 = vld [vmem:[#allocation3 + $0x104] sm:$0xf]
        %v4124 = vld [vmem:[#allocation3 + $0x108] sm:$0xff]
        %v4125 = vld [vmem:[#allocation3 + $0x110] sm:$0xf]
        %v4126 = vld [vmem:[#allocation3 + $0x114] sm:$0xff]
        %v4127 = vld [vmem:[#allocation3 + $0x11c] sm:$0xf]
        %v4128 = vld [vmem:[#allocation3 + $0x120] sm:$0xff]
        %v4129 = vld [vmem:[#allocation3 + $0x128] sm:$0xf]
        %v4130 = vld [vmem:[#allocation3 + $0x12c] sm:$0xff]
        %v4131 = vld [vmem:[#allocation3 + $0x134] sm:$0xf]
        %v4132 = vld [vmem:[#allocation3 + $0x138] sm:$0xff]
        %v4133 = vld [vmem:[#allocation3 + $0x140] sm:$0xf]
        %v4134 = vld [vmem:[#allocation3 + $0x144] sm:$0xff]
        %v4135 = vld [vmem:[#allocation3 + $0x14c] sm:$0xf]
        %v4136 = vld [vmem:[#allocation3 + $0x150] sm:$0xff]
        %v4137 = vld [vmem:[#allocation3 + $0x158] sm:$0xf]
        %v4138 = vld [vmem:[#allocation3 + $0x15c] sm:$0xff]
        %v4139 = vld [vmem:[#allocation3 + $0x164] sm:$0xf]
        %v4140 = vld [vmem:[#allocation3 + $0x168] sm:$0xff]
        %v4141 = vld [vmem:[#allocation3 + $0x170] sm:$0xf]
        %v4142 = vld [vmem:[#allocation3 + $0x174] sm:$0xff]
        %v4143 = vld [vmem:[#allocation3 + $0x17c] sm:$0xf]
        %v4144 = vld [vmem:[#allocation3 + $0x180] sm:$0xff]
        %v4145 = vld [vmem:[#allocation3 + $0x188] sm:$0xf]
        %v4146 = vld [vmem:[#allocation3 + $0x18c] sm:$0xff]
        %v4147 = vld [vmem:[#allocation3 + $0x194] sm:$0xf]
        %v4148 = vld [vmem:[#allocation3 + $0x198] sm:$0xff]
        %v4149 = vld [vmem:[#allocation3 + $0x1a0] sm:$0xf]
        %v4150 = vld [vmem:[#allocation3 + $0x1a4] sm:$0xff]
        %v4151 = vld [vmem:[#allocation3 + $0x1ac] sm:$0xf]
        %4152 = vset.pattern.permute.xlu0 8
        %4153 = vperm.xlu0 %4152, %v3031
        %v4154 = vpop.permute.xlu0 %4153
        %4156 = vset.pattern.permute.xlu0 8
        %4157 = vperm.xlu0 %4156, %v3032
        %v4158 = vpop.permute.xlu0 %4157
        %4160 = vset.pattern.permute.xlu0 8
        %4161 = vperm.xlu0 %4160, %v3033
        %v4162 = vpop.permute.xlu0 %4161
        %4164 = vset.pattern.permute.xlu0 8
        %4165 = vperm.xlu0 %4164, %v3034
        %v4166 = vpop.permute.xlu0 %4165
        %v4176 = vunpack.c.l.b16 %v4072
        %v4177 = vunpack.c.h.b16 %v4072
        %v4178 = vunpack.c.l.b16 %v4073
        %v4179 = vunpack.c.l.b16 %v4074
        %v4180 = vunpack.c.h.b16 %v4074
        %v4181 = vunpack.c.l.b16 %v4075
        %v4182 = vunpack.c.l.b16 %v4076
        %v4183 = vunpack.c.h.b16 %v4076
        %v4184 = vunpack.c.l.b16 %v4077
        %v4185 = vunpack.c.l.b16 %v4078
        %v4186 = vunpack.c.h.b16 %v4078
        %v4187 = vunpack.c.l.b16 %v4079
        %v4188 = vpack.c.b16 %v4179, %v4176
        %v4189 = vpack.c.b16 %v4180, %v4177
        %v4190 = vpack.c.b16 %v4181, %v4178
        %v4191 = vpack.c.b16 %v4185, %v4182
        %v4192 = vpack.c.b16 %v4186, %v4183
        %v4193 = vpack.c.b16 %v4187, %v4184
        %v4270 = vunpack.c.l.b16 %v4080
        %v4271 = vunpack.c.h.b16 %v4080
        %v4272 = vunpack.c.l.b16 %v4081
        %v4273 = vunpack.c.l.b16 %v4082
        %v4274 = vunpack.c.h.b16 %v4082
        %v4275 = vunpack.c.l.b16 %v4083
        %v4276 = vunpack.c.l.b16 %v4084
        %v4277 = vunpack.c.h.b16 %v4084
        %v4278 = vunpack.c.l.b16 %v4085
        %v4279 = vunpack.c.l.b16 %v4086
        %v4280 = vunpack.c.h.b16 %v4086
        %v4281 = vunpack.c.l.b16 %v4087
        %v4282 = vunpack.c.l.b16 %v4088
        %v4283 = vunpack.c.h.b16 %v4088
        %v4284 = vunpack.c.l.b16 %v4089
        %v4285 = vunpack.c.l.b16 %v4090
        %v4286 = vunpack.c.h.b16 %v4090
        %v4287 = vunpack.c.l.b16 %v4091
        %v4288 = vunpack.c.l.b16 %v4092
        %v4289 = vunpack.c.h.b16 %v4092
        %v4290 = vunpack.c.l.b16 %v4093
        %v4291 = vunpack.c.l.b16 %v4094
        %v4292 = vunpack.c.h.b16 %v4094
        %v4293 = vunpack.c.l.b16 %v4095
        %v4294 = vunpack.c.l.b16 %v4096
        %v4295 = vunpack.c.h.b16 %v4096
        %v4296 = vunpack.c.l.b16 %v4097
        %v4297 = vunpack.c.l.b16 %v4098
        %v4298 = vunpack.c.h.b16 %v4098
        %v4299 = vunpack.c.l.b16 %v4099
        %v4300 = vunpack.c.l.b16 %v4100
        %v4301 = vunpack.c.h.b16 %v4100
        %v4302 = vunpack.c.l.b16 %v4101
        %v4303 = vunpack.c.l.b16 %v4102
        %v4304 = vunpack.c.h.b16 %v4102
        %v4305 = vunpack.c.l.b16 %v4103
        %v4306 = vunpack.c.l.b16 %v4104
        %v4307 = vunpack.c.h.b16 %v4104
        %v4308 = vunpack.c.l.b16 %v4105
        %v4309 = vunpack.c.l.b16 %v4106
        %v4310 = vunpack.c.h.b16 %v4106
        %v4311 = vunpack.c.l.b16 %v4107
        %v4312 = vunpack.c.l.b16 %v4108
        %v4313 = vunpack.c.h.b16 %v4108
        %v4314 = vunpack.c.l.b16 %v4109
        %v4315 = vunpack.c.l.b16 %v4110
        %v4316 = vunpack.c.h.b16 %v4110
        %v4317 = vunpack.c.l.b16 %v4111
        %v4318 = vunpack.c.l.b16 %v4112
        %v4319 = vunpack.c.h.b16 %v4112
        %v4320 = vunpack.c.l.b16 %v4113
        %v4321 = vunpack.c.l.b16 %v4114
        %v4322 = vunpack.c.h.b16 %v4114
        %v4323 = vunpack.c.l.b16 %v4115
        %v4324 = vunpack.c.l.b16 %v4116
        %v4325 = vunpack.c.h.b16 %v4116
        %v4326 = vunpack.c.l.b16 %v4117
        %v4327 = vunpack.c.l.b16 %v4118
        %v4328 = vunpack.c.h.b16 %v4118
        %v4329 = vunpack.c.l.b16 %v4119
        %v4330 = vunpack.c.l.b16 %v4120
        %v4331 = vunpack.c.h.b16 %v4120
        %v4332 = vunpack.c.l.b16 %v4121
        %v4333 = vunpack.c.l.b16 %v4122
        %v4334 = vunpack.c.h.b16 %v4122
        %v4335 = vunpack.c.l.b16 %v4123
        %v4336 = vunpack.c.l.b16 %v4124
        %v4337 = vunpack.c.h.b16 %v4124
        %v4338 = vunpack.c.l.b16 %v4125
        %v4339 = vunpack.c.l.b16 %v4126
        %v4340 = vunpack.c.h.b16 %v4126
        %v4341 = vunpack.c.l.b16 %v4127
        %v4342 = vunpack.c.l.b16 %v4128
        %v4343 = vunpack.c.h.b16 %v4128
        %v4344 = vunpack.c.l.b16 %v4129
        %v4345 = vunpack.c.l.b16 %v4130
        %v4346 = vunpack.c.h.b16 %v4130
        %v4347 = vunpack.c.l.b16 %v4131
        %v4348 = vunpack.c.l.b16 %v4132
        %v4349 = vunpack.c.h.b16 %v4132
        %v4350 = vunpack.c.l.b16 %v4133
        %v4351 = vunpack.c.l.b16 %v4134
        %v4352 = vunpack.c.h.b16 %v4134
        %v4353 = vunpack.c.l.b16 %v4135
        %v4354 = vunpack.c.l.b16 %v4136
        %v4355 = vunpack.c.h.b16 %v4136
        %v4356 = vunpack.c.l.b16 %v4137
        %v4357 = vunpack.c.l.b16 %v4138
        %v4358 = vunpack.c.h.b16 %v4138
        %v4359 = vunpack.c.l.b16 %v4139
        %v4360 = vunpack.c.l.b16 %v4140
        %v4361 = vunpack.c.h.b16 %v4140
        %v4362 = vunpack.c.l.b16 %v4141
        %v4363 = vunpack.c.l.b16 %v4142
        %v4364 = vunpack.c.h.b16 %v4142
        %v4365 = vunpack.c.l.b16 %v4143
        %v4366 = vunpack.c.l.b16 %v4144
        %v4367 = vunpack.c.h.b16 %v4144
        %v4368 = vunpack.c.l.b16 %v4145
        %v4369 = vunpack.c.l.b16 %v4146
        %v4370 = vunpack.c.h.b16 %v4146
        %v4371 = vunpack.c.l.b16 %v4147
        %v4372 = vunpack.c.l.b16 %v4148
        %v4373 = vunpack.c.h.b16 %v4148
        %v4374 = vunpack.c.l.b16 %v4149
        %v4375 = vunpack.c.l.b16 %v4150
        %v4376 = vunpack.c.h.b16 %v4150
        %v4377 = vunpack.c.l.b16 %v4151
        %v4378 = vpack.c.b16 %v4273, %v4270
        %v4379 = vpack.c.b16 %v4274, %v4271
        %v4380 = vpack.c.b16 %v4275, %v4272
        %v4381 = vpack.c.b16 %v4279, %v4276
        %v4382 = vpack.c.b16 %v4280, %v4277
        %v4383 = vpack.c.b16 %v4281, %v4278
        %v4384 = vpack.c.b16 %v4285, %v4282
        %v4385 = vpack.c.b16 %v4286, %v4283
        %v4386 = vpack.c.b16 %v4287, %v4284
        %v4387 = vpack.c.b16 %v4291, %v4288
        %v4388 = vpack.c.b16 %v4292, %v4289
        %v4389 = vpack.c.b16 %v4293, %v4290
        %v4390 = vpack.c.b16 %v4297, %v4294
        %v4391 = vpack.c.b16 %v4298, %v4295
        %v4392 = vpack.c.b16 %v4299, %v4296
        %v4393 = vpack.c.b16 %v4303, %v4300
        %v4394 = vpack.c.b16 %v4304, %v4301
        %v4395 = vpack.c.b16 %v4305, %v4302
        %v4396 = vpack.c.b16 %v4309, %v4306
        %v4397 = vpack.c.b16 %v4310, %v4307
        %v4398 = vpack.c.b16 %v4311, %v4308
        %v4399 = vpack.c.b16 %v4315, %v4312
        %v4400 = vpack.c.b16 %v4316, %v4313
        %v4401 = vpack.c.b16 %v4317, %v4314
        %v4402 = vpack.c.b16 %v4321, %v4318
        %v4403 = vpack.c.b16 %v4322, %v4319
        %v4404 = vpack.c.b16 %v4323, %v4320
        %v4405 = vpack.c.b16 %v4327, %v4324
        %v4406 = vpack.c.b16 %v4328, %v4325
        %v4407 = vpack.c.b16 %v4329, %v4326
        %v4408 = vpack.c.b16 %v4333, %v4330
        %v4409 = vpack.c.b16 %v4334, %v4331
        %v4410 = vpack.c.b16 %v4335, %v4332
        %v4411 = vpack.c.b16 %v4339, %v4336
        %v4412 = vpack.c.b16 %v4340, %v4337
        %v4413 = vpack.c.b16 %v4341, %v4338
        %v4414 = vpack.c.b16 %v4345, %v4342
        %v4415 = vpack.c.b16 %v4346, %v4343
        %v4416 = vpack.c.b16 %v4347, %v4344
        %v4417 = vpack.c.b16 %v4351, %v4348
        %v4418 = vpack.c.b16 %v4352, %v4349
        %v4419 = vpack.c.b16 %v4353, %v4350
        %v4420 = vpack.c.b16 %v4357, %v4354
        %v4421 = vpack.c.b16 %v4358, %v4355
        %v4422 = vpack.c.b16 %v4359, %v4356
        %v4423 = vpack.c.b16 %v4363, %v4360
        %v4424 = vpack.c.b16 %v4364, %v4361
        %v4425 = vpack.c.b16 %v4365, %v4362
        %v4426 = vpack.c.b16 %v4369, %v4366
        %v4427 = vpack.c.b16 %v4370, %v4367
        %v4428 = vpack.c.b16 %v4371, %v4368
        %v4429 = vpack.c.b16 %v4375, %v4372
        %v4430 = vpack.c.b16 %v4376, %v4373
        %v4431 = vpack.c.b16 %v4377, %v4374
        %v4487 = vsel %vm1391, %v4190, 0
        %v4490 = vsel %vm1391, %v4193, 0
        %4492 = vmatprep.subr.bf16.mxu0 %v4400
        %4493 = vmatpush1.bf16.msra.mxu0 %v4399
        %4494 = vmatprep.subr.bf16.mxu0 %v4397
        %4495 = vmatpush1.bf16.msra.mxu0 %v4396
        %4496 = vmatprep.subr.bf16.mxu0 %v4394
        %4497 = vmatpush1.bf16.msra.mxu0 %v4393
        %4498 = vmatprep.subr.bf16.mxu0 %v4391
        %4499 = vmatpush1.bf16.msra.mxu0 %v4390
        %4500 = vmatprep.subr.bf16.mxu0 %v4388
        %4501 = vmatpush1.bf16.msra.mxu0 %v4387
        %4502 = vmatprep.subr.bf16.mxu0 %v4385
        %4503 = vmatpush1.bf16.msra.mxu0 %v4384
        %4504 = vmatprep.subr.bf16.mxu0 %v4382
        %4505 = vmatpush1.bf16.msra.mxu0 %v4381
        %4506 = vmatprep.subr.bf16.mxu0 %v4379
        %4507 = vmatpush1.bf16.msra.mxu0 %v4378
        %4508 = vmatprep.subr.bf16.mxu0 %v4424
        %4509 = vmatpush2.bf16.msra.mxu0 %v4423
        %4510 = vmatprep.subr.bf16.mxu0 %v4421
        %4511 = vmatpush2.bf16.msra.mxu0 %v4420
        %4512 = vmatprep.subr.bf16.mxu0 %v4418
        %4513 = vmatpush2.bf16.msra.mxu0 %v4417
        %4514 = vmatprep.subr.bf16.mxu0 %v4415
        %4515 = vmatpush2.bf16.msra.mxu0 %v4414
        %4516 = vmatprep.subr.bf16.mxu0 %v4412
        %4517 = vmatpush2.bf16.msra.mxu0 %v4411
        %4518 = vmatprep.subr.bf16.mxu0 %v4409
        %4519 = vmatpush2.bf16.msra.mxu0 %v4408
        %4520 = vmatprep.subr.bf16.mxu0 %v4406
        %4521 = vmatpush2.bf16.msra.mxu0 %v4405
        %4522 = vmatprep.subr.bf16.mxu0 %v4403
        %4523 = vmatpush2.bf16.msra.mxu0 %v4402
        %4524 = vmatprep.mubr.bf16.mxu0 %v4189
        %4525 = vmatmul.mubr.bf16.gmra.mxu0 %v4188
        %v4526 = vpop.f32.mrf.mxu0
        %v4527 = vadd.f32 %v4154, %v4526
        %v4528 = vpop.f32.mrf.mxu0
        %v4529 = vadd.f32 %v4154, %v4528
        %v4530 = vpop.f32.mrf.mxu0
        %v4531 = vadd.f32 %v4158, %v4530
        %v4532 = vpop.f32.mrf.mxu0
        %v4533 = vadd.f32 %v4158, %v4532
        %4534 = vmatprep.mubr.bf16.mxu0 %v4192
        %4535 = vmatmul.mubr.bf16.gmra.mxu0 %v4191
        %v4536 = vpop.f32.mrf.mxu0
        %v4537 = vadd.f32 %v4162, %v4536
        %v4538 = vpop.f32.mrf.mxu0
        %v4539 = vadd.f32 %v4162, %v4538
        %v4540 = vpop.f32.mrf.mxu0
        %v4541 = vadd.f32 %v4166, %v4540
        %v4542 = vpop.f32.mrf.mxu0
        %v4543 = vadd.f32 %v4166, %v4542
        %4544 = vdwg.mxu0
        %4545 = vmatprep.subr.bf16.mxu0 0
        %4546 = vmatpush1.bf16.msra.mxu0 0
        %4547 = vmatprep.subr.bf16.mxu0 0
        %4548 = vmatpush1.bf16.msra.mxu0 0
        %4549 = vmatprep.subr.bf16.mxu0 0
        %4550 = vmatpush1.bf16.msra.mxu0 0
        %4551 = vmatprep.subr.bf16.mxu0 0
        %4552 = vmatpush1.bf16.msra.mxu0 0
        %4553 = vmatprep.subr.bf16.mxu0 0
        %4554 = vmatpush1.bf16.msra.mxu0 0
        %4555 = vmatprep.subr.bf16.mxu0 0
        %4556 = vmatpush1.bf16.msra.mxu0 0
        %4557 = vmatprep.subr.bf16.mxu0 %v4430
        %4558 = vmatpush1.bf16.msra.mxu0 %v4429
        %4559 = vmatprep.subr.bf16.mxu0 %v4427
        %4560 = vmatpush1.bf16.msra.mxu0 %v4426
        %4561 = vmatprep.subr.bf16.mxu0 0
        %4562 = vmatpush2.bf16.msra.mxu0 0
        %4563 = vmatprep.subr.bf16.mxu0 0
        %4564 = vmatpush2.bf16.msra.mxu0 0
        %4565 = vmatprep.subr.bf16.mxu0 0
        %4566 = vmatpush2.bf16.msra.mxu0 0
        %4567 = vmatprep.subr.bf16.mxu0 0
        %4568 = vmatpush2.bf16.msra.mxu0 0
        %4569 = vmatprep.subr.bf16.mxu0 0
        %4570 = vmatpush2.bf16.msra.mxu0 0
        %4571 = vmatprep.subr.bf16.mxu0 0
        %4572 = vmatpush2.bf16.msra.mxu0 0
        %4573 = vmatprep.subr.bf16.mxu0 0
        %4574 = vmatpush2.bf16.msra.mxu0 0
        %4575 = vmatprep.subr.bf16.mxu0 0
        %4576 = vmatpush2.bf16.msra.mxu0 0
        %4577 = vmatprep.mubr.bf16.mxu0 0
        %4578 = vmatmul.mubr.bf16.gmra.mxu0 %v4487
        %v4579 = vpop.f32.mrf.mxu0
        %v4580 = vadd.f32 %v4527, %v4579
        %v4581 = vpop.f32.mrf.mxu0
        %v4582 = vadd.f32 %v4529, %v4581
        %v4583 = vpop.f32.mrf.mxu0
        %v4584 = vadd.f32 %v4531, %v4583
        %v4585 = vpop.f32.mrf.mxu0
        %v4586 = vadd.f32 %v4533, %v4585
        %4587 = vmatprep.mubr.bf16.mxu0 0
        %4588 = vmatmul.mubr.bf16.gmra.mxu0 %v4490
        %v4589 = vpop.f32.mrf.mxu0
        %v4590 = vadd.f32 %v4537, %v4589
        %v4591 = vpop.f32.mrf.mxu0
        %v4592 = vadd.f32 %v4539, %v4591
        %v4593 = vpop.f32.mrf.mxu0
        %v4594 = vadd.f32 %v4541, %v4593
        %v4595 = vpop.f32.mrf.mxu0
        %v4596 = vadd.f32 %v4543, %v4595
        %4597 = vdwg.mxu0
        %4598 = vmatprep.subr.bf16.mxu0 0
        %4599 = vmatpush1.bf16.msra.mxu0 %v4401
        %4600 = vmatprep.subr.bf16.mxu0 0
        %4601 = vmatpush1.bf16.msra.mxu0 %v4398
        %4602 = vmatprep.subr.bf16.mxu0 0
        %4603 = vmatpush1.bf16.msra.mxu0 %v4395
        %4604 = vmatprep.subr.bf16.mxu0 0
        %4605 = vmatpush1.bf16.msra.mxu0 %v4392
        %4606 = vmatprep.subr.bf16.mxu0 0
        %4607 = vmatpush1.bf16.msra.mxu0 %v4389
        %4608 = vmatprep.subr.bf16.mxu0 0
        %4609 = vmatpush1.bf16.msra.mxu0 %v4386
        %4610 = vmatprep.subr.bf16.mxu0 0
        %4611 = vmatpush1.bf16.msra.mxu0 %v4383
        %4612 = vmatprep.subr.bf16.mxu0 0
        %4613 = vmatpush1.bf16.msra.mxu0 %v4380
        %4614 = vmatprep.subr.bf16.mxu0 0
        %4615 = vmatpush2.bf16.msra.mxu0 %v4425
        %4616 = vmatprep.subr.bf16.mxu0 0
        %4617 = vmatpush2.bf16.msra.mxu0 %v4422
        %4618 = vmatprep.subr.bf16.mxu0 0
        %4619 = vmatpush2.bf16.msra.mxu0 %v4419
        %4620 = vmatprep.subr.bf16.mxu0 0
        %4621 = vmatpush2.bf16.msra.mxu0 %v4416
        %4622 = vmatprep.subr.bf16.mxu0 0
        %4623 = vmatpush2.bf16.msra.mxu0 %v4413
        %4624 = vmatprep.subr.bf16.mxu0 0
        %4625 = vmatpush2.bf16.msra.mxu0 %v4410
        %4626 = vmatprep.subr.bf16.mxu0 0
        %4627 = vmatpush2.bf16.msra.mxu0 %v4407
        %4628 = vmatprep.subr.bf16.mxu0 0
        %4629 = vmatpush2.bf16.msra.mxu0 %v4404
        %4630 = vmatprep.mubr.bf16.mxu0 %v4189
        %4631 = vmatmul.mubr.bf16.gmra.mxu0 %v4188
        %v4632 = vpop.f32.mrf.mxu0
        %v4633 = vadd.f32 %v4154, %v4632
        %v4634 = vpop.f32.mrf.mxu0
        %v4635 = vpop.f32.mrf.mxu0
        %v4636 = vadd.f32 %v4158, %v4635
        %v4637 = vpop.f32.mrf.mxu0
        %4638 = vmatprep.mubr.bf16.mxu0 %v4192
        %4639 = vmatmul.mubr.bf16.gmra.mxu0 %v4191
        %v4640 = vpop.f32.mrf.mxu0
        %v4641 = vadd.f32 %v4162, %v4640
        %v4642 = vpop.f32.mrf.mxu0
        %v4643 = vpop.f32.mrf.mxu0
        %v4644 = vadd.f32 %v4166, %v4643
        %v4645 = vpop.f32.mrf.mxu0
        %4646 = vdwg.mxu0
        %4647 = vmatprep.subr.bf16.mxu0 0
        %4648 = vmatpush1.bf16.msra.mxu0 0
        %4649 = vmatprep.subr.bf16.mxu0 0
        %4650 = vmatpush1.bf16.msra.mxu0 0
        %4651 = vmatprep.subr.bf16.mxu0 0
        %4652 = vmatpush1.bf16.msra.mxu0 0
        %4653 = vmatprep.subr.bf16.mxu0 0
        %4654 = vmatpush1.bf16.msra.mxu0 0
        %4655 = vmatprep.subr.bf16.mxu0 0
        %4656 = vmatpush1.bf16.msra.mxu0 0
        %4657 = vmatprep.subr.bf16.mxu0 0
        %4658 = vmatpush1.bf16.msra.mxu0 0
        %4659 = vmatprep.subr.bf16.mxu0 0
        %4660 = vmatpush1.bf16.msra.mxu0 %v4431
        %4661 = vmatprep.subr.bf16.mxu0 0
        %4662 = vmatpush1.bf16.msra.mxu0 %v4428
        %4663 = vmatprep.subr.bf16.mxu0 0
        %4664 = vmatpush2.bf16.msra.mxu0 0
        %4665 = vmatprep.subr.bf16.mxu0 0
        %4666 = vmatpush2.bf16.msra.mxu0 0
        %4667 = vmatprep.subr.bf16.mxu0 0
        %4668 = vmatpush2.bf16.msra.mxu0 0
        %4669 = vmatprep.subr.bf16.mxu0 0
        %4670 = vmatpush2.bf16.msra.mxu0 0
        %4671 = vmatprep.subr.bf16.mxu0 0
        %4672 = vmatpush2.bf16.msra.mxu0 0
        %4673 = vmatprep.subr.bf16.mxu0 0
        %4674 = vmatpush2.bf16.msra.mxu0 0
        %4675 = vmatprep.subr.bf16.mxu0 0
        %4676 = vmatpush2.bf16.msra.mxu0 0
        %4677 = vmatprep.subr.bf16.mxu0 0
        %4678 = vmatpush2.bf16.msra.mxu0 0
        %4679 = vmatprep.mubr.bf16.mxu0 0
        %4680 = vmatmul.mubr.bf16.gmra.mxu0 %v4487
        %v4681 = vpop.f32.mrf.mxu0
        %v4682 = vadd.f32 %v4633, %v4681
        %v4683 = vpop.f32.mrf.mxu0
        %v4684 = vpop.f32.mrf.mxu0
        %v4685 = vadd.f32 %v4636, %v4684
        %v4686 = vpop.f32.mrf.mxu0
        %4687 = vmatprep.mubr.bf16.mxu0 0
        %4688 = vmatmul.mubr.bf16.gmra.mxu0 %v4490
        %v4689 = vpop.f32.mrf.mxu0
        %v4690 = vadd.f32 %v4641, %v4689
        %v4691 = vpop.f32.mrf.mxu0
        %v4692 = vpop.f32.mrf.mxu0
        %v4693 = vadd.f32 %v4644, %v4692
        %v4694 = vpop.f32.mrf.mxu0
        %4695 = vdwg.mxu0
        %v4696 = vadd.f32 %v328, 1.0
        %v4697 = vadd.f32 %v329, 1.0
        %v4698 = vadd.f32 %v330, 1.0
        %v4699 = vadd.f32 %v331, 1.0
        %4701 = vset.pattern.permute.xlu0 0
        %4702 = vperm.xlu0 %4701, %v4696
        %v4703 = vpop.permute.xlu0 %4702
        %4706 = vset.pattern.permute.xlu0 0
        %4707 = vperm.xlu0 %4706, %v4697
        %v4708 = vpop.permute.xlu0 %4707
        %4711 = vset.pattern.permute.xlu0 0
        %4712 = vperm.xlu0 %4711, %v4698
        %v4713 = vpop.permute.xlu0 %4712
        %4716 = vset.pattern.permute.xlu0 0
        %4717 = vperm.xlu0 %4716, %v4699
        %v4718 = vpop.permute.xlu0 %4717
        %v4720 = vmul.f32 %v4580, %v4703
        %v4721 = vmul.f32 %v4582, %v4703
        %v4722 = vmul.f32 %v4682, %v4703
        %v4723 = vmul.f32 %v4584, %v4708
        %v4724 = vmul.f32 %v4586, %v4708
        %v4725 = vmul.f32 %v4685, %v4708
        %v4726 = vmul.f32 %v4590, %v4713
        %v4727 = vmul.f32 %v4592, %v4713
        %v4728 = vmul.f32 %v4690, %v4713
        %v4729 = vmul.f32 %v4594, %v4718
        %v4730 = vmul.f32 %v4596, %v4718
        %v4731 = vmul.f32 %v4693, %v4718
        %4733 = vset.pattern.permute.xlu0 1
        %4734 = vperm.xlu0 %4733, %v328
        %v4735 = vpop.permute.xlu0 %4734
        %4738 = vset.pattern.permute.xlu0 1
        %4739 = vperm.xlu0 %4738, %v329
        %v4740 = vpop.permute.xlu0 %4739
        %4743 = vset.pattern.permute.xlu0 1
        %4744 = vperm.xlu0 %4743, %v330
        %v4745 = vpop.permute.xlu0 %4744
        %4748 = vset.pattern.permute.xlu0 1
        %4749 = vperm.xlu0 %4748, %v331
        %v4750 = vpop.permute.xlu0 %4749
        %v4752 = vadd.f32 %v4720, %v4735
        %v4753 = vadd.f32 %v4721, %v4735
        %v4754 = vadd.f32 %v4722, %v4735
        %v4755 = vadd.f32 %v4723, %v4740
        %v4756 = vadd.f32 %v4724, %v4740
        %v4757 = vadd.f32 %v4725, %v4740
        %v4758 = vadd.f32 %v4726, %v4745
        %v4759 = vadd.f32 %v4727, %v4745
        %v4760 = vadd.f32 %v4728, %v4745
        %v4761 = vadd.f32 %v4729, %v4750
        %v4762 = vadd.f32 %v4730, %v4750
        %v4763 = vadd.f32 %v4731, %v4750
        %v4764 = vmul.f32 %v4752, %v313
        %v4765 = vmul.f32 %v4753, %v314
        %v4766 = vmul.f32 %v4754, %v315
        %v4767 = vmul.f32 %v4755, %v313
        %v4768 = vmul.f32 %v4756, %v314
        %v4769 = vmul.f32 %v4757, %v315
        %v4770 = vmul.f32 %v4758, %v313
        %v4771 = vmul.f32 %v4759, %v314
        %v4772 = vmul.f32 %v4760, %v315
        %v4773 = vmul.f32 %v4761, %v313
        %v4774 = vmul.f32 %v4762, %v314
        %v4775 = vmul.f32 %v4763, %v315
        %v4776 = vadd.f32 %v316, %v4764
        %v4777 = vadd.f32 %v317, %v4765
        %v4778 = vadd.f32 %v318, %v4766
        %v4779 = vadd.f32 %v319, %v4767
        %v4780 = vadd.f32 %v320, %v4768
        %v4781 = vadd.f32 %v321, %v4769
        %v4782 = vadd.f32 %v322, %v4770
        %v4783 = vadd.f32 %v323, %v4771
        %v4784 = vadd.f32 %v324, %v4772
        %v4785 = vadd.f32 %v325, %v4773
        %v4786 = vadd.f32 %v326, %v4774
        %v4787 = vadd.f32 %v327, %v4775
        %4788 = vst [vmem:[%s245] sm:$0xff] %v4776
        %4789 = vst [vmem:[%s245 + $0x8] sm:$0xff] %v4777
        %4790 = vst [vmem:[%s245 + $0x10] sm:$0xff] %v4778
        %4791 = vst [vmem:[%s245 + $0x18] sm:$0xff] %v4779
        %4792 = vst [vmem:[%s245 + $0x20] sm:$0xff] %v4780
        %4793 = vst [vmem:[%s245 + $0x28] sm:$0xff] %v4781
        %4794 = vst [vmem:[%s245 + $0x30] sm:$0xff] %v4782
        %4795 = vst [vmem:[%s245 + $0x38] sm:$0xff] %v4783
        %4796 = vst [vmem:[%s245 + $0x40] sm:$0xff] %v4784
        %4797 = vst [vmem:[%s245 + $0x48] sm:$0xff] %v4785
        %4798 = vst [vmem:[%s245 + $0x50] sm:$0xff] %v4786
        %4799 = vst [vmem:[%s245 + $0x58] sm:$0xff] %v4787
        %s4800 = sand.u32 %s124, 1
        %s4801 = scalar_lea.sflag [#allocation6], %s4800
        %s4802 = sand.u32 %s124, 1
        %s4803 = smul.addr %s4802, 96
        %s4804 = scalar_lea.vmem [#allocation9], %s4803
        // Predicated region
        $region45: #{tpu_custom_call.1} parent=35 // pred_check
          %p4805 = pneg %p134
        $region46: #{tpu_custom_call.1} parent=35 // pred_check_branch
          %4807 = sbr.rel (%p4805) target = $region48
        $region47: #{tpu_custom_call.1} parent=35 // pred_region
          %s4809 = ssub.s32 1536, 1536
          %4810 = vsyncadd %s4801, %s4809
          %s4811 = smul.addr %s22, 12
          %s4812 = smul.addr %s4811, 128
          %s4813 = scalar_lea.hbm %s4, %s4812
          %s4814 = sshll.u32 %s4804, 4
          %s4815 = int_to_ptr.vmem [resolvable:$true] %s4814
          %4820 = dma.vmem_to_hbm [thread:$0]  %s4815, 1536, %s4813, %s4801, 384, 384, 24
        $region48: #{tpu_custom_call.1} parent=35 // pred_fallthru
          _
      $region36: #{tpu_custom_call.1} parent=5 // pred_fallthru
        _
      %p4821 = scmp.le.s32.totalorder 2, %s17
      // Predicated region
      $region49: #{tpu_custom_call.1} parent=5 // pred_check
        %p4822 = pneg %p4821
      $region50: #{tpu_custom_call.1} parent=5 // pred_check_branch
        %4824 = sbr.rel (%p4822) target = $region52
      $region51: #{tpu_custom_call.1} parent=5 // pred_region
        %s4825 = ssub.s32 %s17, 2
        // Predicated region
        $region53: #{tpu_custom_call.1} parent=51 // pred_check
          %p4826 = pneg %p140
        $region54: #{tpu_custom_call.1} parent=51 // pred_check_branch
          %4828 = sbr.rel (%p4826) target = $region56
        $region55: #{tpu_custom_call.1} parent=51 // pred_region
          %s4829 = sand.u32 %s125, 1
          %s4830 = scalar_lea.sflag [#allocation6], %s4829
          %s4831 = sand.u32 %s125, 1
          %s4832 = smul.addr %s4831, 96
          %s4833 = scalar_lea.vmem [#allocation9], %s4832
          %4834 = dma.done %s4830, 1536
        $region56: #{tpu_custom_call.1} parent=51 // pred_fallthru
          _
      $region52: #{tpu_custom_call.1} parent=5 // pred_fallthru
        _
    $region6: #{tpu_custom_call.1} parent=1 // loop_footer
      %s21 = sadd.s32 1, %s17
    $region7: #{tpu_custom_call.1} parent=1 // loop_footer_branch
      %16 = sbr.rel target = $region3
    $region8: #{tpu_custom_call.1} parent=1 // loop_exit
      _
    %4835 = vsyncpa [#allocation5], 1
    %s4836 = scalar_lea.sflag [#allocation5], 1
    %4837 = vsyncpa %s4836, 1
    %4838 = vsyncpa [#allocation8], 1
    %4839 = vsyncpa [#allocation6], 1
    %s4840 = scalar_lea.sflag [#allocation6], 1
    %4841 = vsyncpa %s4840, 1

</llo_original>
